<compile_context>
chip_gen: v7x
topology: tpu7x:2x2x1
jax: 0.10.0
libtpu: 0.0.40
codegen_flags: <defaults>
</compile_context>

<pallas_src>
import jax
import jax.numpy as jnp
from jax.experimental import pallas as pl
from jax.experimental.pallas import tpu as pltpu


# ----------------------------- model hyper-params -----------------------------
VOCAB = 64       # vocab_size
T = 8            # input_size (sequence length)
E = 32           # embd_size
LAYERS = 2       # layer_count
HEADS = 4        # head_count
DH = E // HEADS  # head size


# ----------------------------- in-kernel helpers ------------------------------
def _layernorm(x, gamma, beta, eps=1e-5):
    mu = jnp.mean(x, axis=-1, keepdims=True)
    xc = x - mu
    var = jnp.mean(xc * xc, axis=-1, keepdims=True)
    inv = jax.lax.rsqrt(var + eps)
    return xc * inv * gamma + beta


# dot_general dimension numbers (heads on the leading batch axis)
_DN_STD = (((2,), (1,)), ((0,), (0,)))   # (H,a,c) @ (H,c,b) -> (H,a,b)
_DN_QKT = (((2,), (2,)), ((0,), (0,)))   # (H,T,D) @ (H,T,D) -> (H,T,T)


# ------------------------------ fused forward kernel ---------------------------
def nanoshakes_kernel(tok_ref, wte_ref, wpe_ref,
                      ln1g_ref, ln1b_ref, wq_ref, wk_ref, wv_ref,
                      wproj_ref, projb_ref, ln2g_ref, ln2b_ref,
                      f1w_ref, f1b_ref, f2w_ref, f2b_ref,
                      lng_ref, lnb_ref, headw_ref, headb_ref,
                      o_ref):
    # ---- embedding (one-hot matmul gather) + positional add ----
    tok = tok_ref[0]                                                    # (T, 1) int32
    vocab_iota = jax.lax.broadcasted_iota(jnp.int32, (T, VOCAB), 1)
    onehot = (vocab_iota == tok).astype(jnp.float32)                    # (T, VOCAB)
    x = jnp.dot(onehot, wte_ref[...],
                preferred_element_type=jnp.float32) + wpe_ref[...]      # (T, E)

    # ---- loop-invariant causal mask + scale (built once, hoisted) ----
    row = jax.lax.broadcasted_iota(jnp.int32, (HEADS, T, T), 1)
    col = jax.lax.broadcasted_iota(jnp.int32, (HEADS, T, T), 2)
    causal = row >= col                                                 # (H, T, T)
    # reference scales by scores.shape[-1] ** -0.5 == T ** -0.5 (== DH ** -0.5 here)
    scale = jnp.float32(T) ** -0.5

    for l in range(LAYERS):                          # static unroll over layers
        # --- pre-norm + head-batched causal self-attention ---
        h = _layernorm(x, ln1g_ref[l], ln1b_ref[l])                     # (T, E)
        hb = jnp.broadcast_to(h, (HEADS, T, E))                         # (H, T, E)
        q = jax.lax.dot_general(hb, wq_ref[l], _DN_STD,
                                preferred_element_type=jnp.float32)     # (H, T, DH)
        k = jax.lax.dot_general(hb, wk_ref[l], _DN_STD,
                                preferred_element_type=jnp.float32)
        v = jax.lax.dot_general(hb, wv_ref[l], _DN_STD,
                                preferred_element_type=jnp.float32)
        s = jax.lax.dot_general(q, k, _DN_QKT,
                                preferred_element_type=jnp.float32) * scale  # (H, T, T)
        s = jnp.where(causal, s, -jnp.inf)
        s = s - jnp.max(s, axis=-1, keepdims=True)
        p = jnp.exp(s)
        p = p * pl.reciprocal(jnp.sum(p, axis=-1, keepdims=True), approx=True)
        att = jax.lax.dot_general(p, v, _DN_STD,
                                  preferred_element_type=jnp.float32)   # (H, T, DH)
        # output projection folded per head: sum_h att_h @ Wp_h == concat(att) @ Wp
        proj = jax.lax.dot_general(att, wproj_ref[l], _DN_STD,
                                   preferred_element_type=jnp.float32)  # (H, T, E)
        x = x + jnp.sum(proj, axis=0) + projb_ref[l]

        # --- pre-norm + feed-forward + residual ---
        h2 = _layernorm(x, ln2g_ref[l], ln2b_ref[l])
        ff = jnp.dot(h2, f1w_ref[l], preferred_element_type=jnp.float32) + f1b_ref[l]
        ff = jnp.maximum(ff, 0.0)
        x = x + jnp.dot(ff, f2w_ref[l], preferred_element_type=jnp.float32) + f2b_ref[l]

    # --- final layernorm + LM head ---
    hf = _layernorm(x, lng_ref[...], lnb_ref[...])
    o_ref[0] = jnp.dot(hf, headw_ref[...],
                       preferred_element_type=jnp.float32) + headb_ref[...]


# --------------------------------- wrapper --------------------------------------
_WEIGHT_ORDER = ("wte", "wpe", "ln1g", "ln1b", "wq", "wk", "wv", "wproj",
                 "projb", "ln2g", "ln2b", "f1w", "f1b", "f2w", "f2b",
                 "lng", "lnb", "headw", "headb")


def _const_spec(arr):
    # whole-array block, constant index map (weights stay VMEM-resident across the grid)
    zeros = (0,) * arr.ndim
    return pl.BlockSpec(arr.shape, lambda b: zeros)


def nanoshakes_forward(tokens, kp):
    B = tokens.shape[0]
    tok3 = tokens.astype(jnp.int32)[:, :, None]                         # (B, T, 1)
    weights = [kp[name] for name in _WEIGHT_ORDER]
    in_specs = [pl.BlockSpec((1, T, 1), lambda b: (b, 0, 0))]
    in_specs += [_const_spec(w) for w in weights]
    # TODO(synk): cross-entropy loss branch (targets is not None) is omitted;
    # the reference forward with targets=None returns (logits, None).
    return pl.pallas_call(
        nanoshakes_kernel,
        out_shape=jax.ShapeDtypeStruct((B, T, VOCAB), jnp.float32),
        grid=(B,),
        in_specs=in_specs,
        out_specs=pl.BlockSpec((1, T, VOCAB), lambda b: (b, 0, 0)),
        compiler_params=pltpu.CompilerParams(dimension_semantics=("parallel",)),
    )(tok3, *weights)


# ------------------------------- param init / pack ------------------------------
def init_params(key):
    def nrm(key, shape, scale=0.02):
        return scale * jax.random.normal(key, shape, dtype=jnp.float32)

    keys = jax.random.split(key, 4 + LAYERS)
    params = {
        "wte": nrm(keys[0], (VOCAB, E)),
        "wpe": nrm(keys[1], (T, E)),
        "lng": jnp.ones((1, E), jnp.float32),
        "lnb": jnp.zeros((1, E), jnp.float32),
        "headw": nrm(keys[2], (E, VOCAB)),
        "headb": jnp.zeros((1, VOCAB), jnp.float32),
        "layers": [],
    }
    for l in range(LAYERS):
        lk = jax.random.split(keys[4 + l], 8)
        params["layers"].append({
            "ln1g": jnp.ones((1, E), jnp.float32),
            "ln1b": jnp.zeros((1, E), jnp.float32),
            "qkvw": nrm(lk[0], (E, 3 * E)),      # (in, out) so kernel does x @ W
            "projw": nrm(lk[1], (E, E)),
            "projb": jnp.zeros((1, E), jnp.float32),
            "ln2g": jnp.ones((1, E), jnp.float32),
            "ln2b": jnp.zeros((1, E), jnp.float32),
            "f1w": nrm(lk[2], (E, 4 * E)),
            "f1b": jnp.zeros((1, 4 * E), jnp.float32),
            "f2w": nrm(lk[3], (4 * E, E)),
            "f2b": jnp.zeros((1, E), jnp.float32),
        })
    return params


def pack_params(params):
    """Stack layer weights along a leading LAYERS axis and pre-split heads on the host."""
    stack = lambda name: jnp.stack([lp[name] for lp in params["layers"]])
    qkv = stack("qkvw")                                                  # (L, E, 3E)
    split_heads = lambda w: w.reshape(LAYERS, E, HEADS, DH).transpose(0, 2, 1, 3)
    return {
        "wte": params["wte"], "wpe": params["wpe"],
        "ln1g": stack("ln1g"), "ln1b": stack("ln1b"),
        "wq": split_heads(qkv[:, :, 0 * E:1 * E]),                       # (L, H, E, DH)
        "wk": split_heads(qkv[:, :, 1 * E:2 * E]),
        "wv": split_heads(qkv[:, :, 2 * E:3 * E]),
        "wproj": stack("projw").reshape(LAYERS, HEADS, DH, E),           # (L, H, DH, E)
        "projb": stack("projb"),
        "ln2g": stack("ln2g"), "ln2b": stack("ln2b"),
        "f1w": stack("f1w"), "f1b": stack("f1b"),
        "f2w": stack("f2w"), "f2b": stack("f2b"),
        "lng": params["lng"], "lnb": params["lnb"],
        "headw": params["headw"], "headb": params["headb"],
    }


# ----------------------------------- main ---------------------------------------
if __name__ == "__main__":
    key = jax.random.PRNGKey(0)
    pkey, tkey = jax.random.split(key)
    params = init_params(pkey)
    kp = pack_params(params)

    B = 2
    tokens = jax.random.randint(tkey, (B, T), 0, VOCAB, dtype=jnp.int32)

    forward = jax.jit(nanoshakes_forward)
    logits = forward(tokens, kp)
    jax.block_until_ready(logits)

    assert logits.shape == (B, T, VOCAB), logits.shape
    assert bool(jnp.all(jnp.isfinite(logits)))
    print("KERNEL_OK")
</pallas_src>

<mosaic_0001>
module attributes {stable_mosaic.version = 11 : i64} {
  func.func @nanoshakes_kernel(%arg0: i32, %arg1: memref<1x8x1xi32, #tpu.memory_space<vmem>>, %arg2: memref<64x32xf32, #tpu.memory_space<vmem>>, %arg3: memref<8x32xf32, #tpu.memory_space<vmem>>, %arg4: memref<2x1x32xf32, #tpu.memory_space<vmem>>, %arg5: memref<2x1x32xf32, #tpu.memory_space<vmem>>, %arg6: memref<2x4x32x8xf32, #tpu.memory_space<vmem>>, %arg7: memref<2x4x32x8xf32, #tpu.memory_space<vmem>>, %arg8: memref<2x4x32x8xf32, #tpu.memory_space<vmem>>, %arg9: memref<2x4x8x32xf32, #tpu.memory_space<vmem>>, %arg10: memref<2x1x32xf32, #tpu.memory_space<vmem>>, %arg11: memref<2x1x32xf32, #tpu.memory_space<vmem>>, %arg12: memref<2x1x32xf32, #tpu.memory_space<vmem>>, %arg13: memref<2x32x128xf32, #tpu.memory_space<vmem>>, %arg14: memref<2x1x128xf32, #tpu.memory_space<vmem>>, %arg15: memref<2x128x32xf32, #tpu.memory_space<vmem>>, %arg16: memref<2x1x32xf32, #tpu.memory_space<vmem>>, %arg17: memref<1x32xf32, #tpu.memory_space<vmem>>, %arg18: memref<1x32xf32, #tpu.memory_space<vmem>>, %arg19: memref<32x64xf32, #tpu.memory_space<vmem>>, %arg20: memref<1x64xf32, #tpu.memory_space<vmem>>, %arg21: memref<1x8x64xf32, #tpu.memory_space<vmem>>) attributes {dimension_semantics = [#tpu.dimension_semantics<parallel>], iteration_bounds = array<i64: 2>, scalar_prefetch = 0 : i64, scratch_operands = 0 : i64, tpu.core_type = #tpu.core_type<tc>, window_params = [{transform_indices = @transform_0, window_bounds = array<i64: 1, 8, 1>}, {pipeline_mode = #tpu.pipeline_mode<synchronous>, transform_indices = @transform_1, window_bounds = array<i64: 64, 32>}, {pipeline_mode = #tpu.pipeline_mode<synchronous>, transform_indices = @transform_2, window_bounds = array<i64: 8, 32>}, {pipeline_mode = #tpu.pipeline_mode<synchronous>, transform_indices = @transform_3, window_bounds = array<i64: 2, 1, 32>}, {pipeline_mode = #tpu.pipeline_mode<synchronous>, transform_indices = @transform_4, window_bounds = array<i64: 2, 1, 32>}, {pipeline_mode = #tpu.pipeline_mode<synchronous>, transform_indices = @transform_5, window_bounds = array<i64: 2, 4, 32, 8>}, {pipeline_mode = #tpu.pipeline_mode<synchronous>, transform_indices = @transform_6, window_bounds = array<i64: 2, 4, 32, 8>}, {pipeline_mode = #tpu.pipeline_mode<synchronous>, transform_indices = @transform_7, window_bounds = array<i64: 2, 4, 32, 8>}, {pipeline_mode = #tpu.pipeline_mode<synchronous>, transform_indices = @transform_8, window_bounds = array<i64: 2, 4, 8, 32>}, {pipeline_mode = #tpu.pipeline_mode<synchronous>, transform_indices = @transform_9, window_bounds = array<i64: 2, 1, 32>}, {pipeline_mode = #tpu.pipeline_mode<synchronous>, transform_indices = @transform_10, window_bounds = array<i64: 2, 1, 32>}, {pipeline_mode = #tpu.pipeline_mode<synchronous>, transform_indices = @transform_11, window_bounds = array<i64: 2, 1, 32>}, {pipeline_mode = #tpu.pipeline_mode<synchronous>, transform_indices = @transform_12, window_bounds = array<i64: 2, 32, 128>}, {pipeline_mode = #tpu.pipeline_mode<synchronous>, transform_indices = @transform_13, window_bounds = array<i64: 2, 1, 128>}, {pipeline_mode = #tpu.pipeline_mode<synchronous>, transform_indices = @transform_14, window_bounds = array<i64: 2, 128, 32>}, {pipeline_mode = #tpu.pipeline_mode<synchronous>, transform_indices = @transform_15, window_bounds = array<i64: 2, 1, 32>}, {pipeline_mode = #tpu.pipeline_mode<synchronous>, transform_indices = @transform_16, window_bounds = array<i64: 1, 32>}, {pipeline_mode = #tpu.pipeline_mode<synchronous>, transform_indices = @transform_17, window_bounds = array<i64: 1, 32>}, {pipeline_mode = #tpu.pipeline_mode<synchronous>, transform_indices = @transform_18, window_bounds = array<i64: 32, 64>}, {pipeline_mode = #tpu.pipeline_mode<synchronous>, transform_indices = @transform_19, window_bounds = array<i64: 1, 64>}, {transform_indices = @transform_20, window_bounds = array<i64: 1, 8, 64>}]} {
    %c0 = arith.constant 0 : index
    %c0_0 = arith.constant 0 : index
    %c0_1 = arith.constant 0 : index
    %0 = vector.load %arg1[%c0, %c0_0, %c0_1] : memref<1x8x1xi32, #tpu.memory_space<vmem>>, vector<1x8x1xi32>
    %1 = vector.shape_cast %0 : vector<1x8x1xi32> to vector<8x1xi32>
    %2 = tpu.iota {dimensions = array<i32: 1>} : vector<8x64xi32>
    %3 = vector.broadcast %1 : vector<8x1xi32> to vector<8x64xi32>
    %4 = arith.cmpi eq, %2, %3 : vector<8x64xi32>
    %5 = arith.extui %4 : vector<8x64xi1> to vector<8x64xi32>
    %6 = arith.sitofp %5 : vector<8x64xi32> to vector<8x64xf32>
    %c0_2 = arith.constant 0 : index
    %c0_3 = arith.constant 0 : index
    %7 = vector.load %arg2[%c0_2, %c0_3] : memref<64x32xf32, #tpu.memory_space<vmem>>, vector<64x32xf32>
    %cst = arith.constant dense<0.000000e+00> : vector<8x32xf32>
    %8 = tpu.matmul %6, %7, %cst {dimension_numbers = #tpu.dot_dimension_numbers<[1], [0], [0], [1], [0, 0, 1, 1], [], []>} : vector<8x64xf32>, vector<64x32xf32>, vector<8x32xf32> -> vector<8x32xf32>
    %c0_4 = arith.constant 0 : index
    %c0_5 = arith.constant 0 : index
    %9 = vector.load %arg3[%c0_4, %c0_5] : memref<8x32xf32, #tpu.memory_space<vmem>>, vector<8x32xf32>
    %10 = arith.addf %8, %9 : vector<8x32xf32>
    %11 = tpu.iota {dimensions = array<i32: 1>} : vector<4x8x8xi32>
    %12 = tpu.iota {dimensions = array<i32: 2>} : vector<4x8x8xi32>
    %13 = arith.cmpi sge, %11, %12 : vector<4x8x8xi32>
    %cst_6 = arith.constant 8.000000e+00 : f32
    %cst_7 = arith.constant -5.000000e-01 : f32
    %14 = math.powf %cst_6, %cst_7 : f32
    %c0_8 = arith.constant 0 : index
    %c0_9 = arith.constant 0 : index
    %c0_10 = arith.constant 0 : index
    %15 = vector.load %arg4[%c0_8, %c0_9, %c0_10] : memref<2x1x32xf32, #tpu.memory_space<vmem>>, vector<1x1x32xf32>
    %16 = vector.shape_cast %15 : vector<1x1x32xf32> to vector<1x32xf32>
    %c0_11 = arith.constant 0 : index
    %c0_12 = arith.constant 0 : index
    %c0_13 = arith.constant 0 : index
    %17 = vector.load %arg5[%c0_11, %c0_12, %c0_13] : memref<2x1x32xf32, #tpu.memory_space<vmem>>, vector<1x1x32xf32>
    %18 = vector.shape_cast %17 : vector<1x1x32xf32> to vector<1x32xf32>
    %cst_14 = arith.constant dense<0.000000e+00> : vector<8xf32>
    %19 = vector.multi_reduction <add>, %10, %cst_14 [1] : vector<8x32xf32> to vector<8xf32>
    %20 = vector.shape_cast %19 : vector<8xf32> to vector<8x1xf32>
    %cst_15 = arith.constant 3.200000e+01 : f32
    %21 = vector.broadcast %cst_15 : f32 to vector<8x1xf32>
    %22 = arith.divf %20, %21 : vector<8x1xf32>
    %23 = vector.broadcast %22 : vector<8x1xf32> to vector<8x32xf32>
    %24 = arith.subf %10, %23 : vector<8x32xf32>
    %25 = arith.mulf %24, %24 : vector<8x32xf32>
    %cst_16 = arith.constant dense<0.000000e+00> : vector<8xf32>
    %26 = vector.multi_reduction <add>, %25, %cst_16 [1] : vector<8x32xf32> to vector<8xf32>
    %27 = vector.shape_cast %26 : vector<8xf32> to vector<8x1xf32>
    %cst_17 = arith.constant 3.200000e+01 : f32
    %28 = vector.broadcast %cst_17 : f32 to vector<8x1xf32>
    %29 = arith.divf %27, %28 : vector<8x1xf32>
    %cst_18 = arith.constant 9.99999974E-6 : f32
    %30 = vector.broadcast %cst_18 : f32 to vector<8x1xf32>
    %31 = arith.addf %29, %30 : vector<8x1xf32>
    %32 = math.rsqrt %31 : vector<8x1xf32>
    %33 = vector.broadcast %32 : vector<8x1xf32> to vector<8x32xf32>
    %34 = arith.mulf %24, %33 : vector<8x32xf32>
    %35 = vector.broadcast %16 : vector<1x32xf32> to vector<8x32xf32>
    %36 = arith.mulf %34, %35 : vector<8x32xf32>
    %37 = vector.broadcast %18 : vector<1x32xf32> to vector<8x32xf32>
    %38 = arith.addf %36, %37 : vector<8x32xf32>
    %39 = vector.shape_cast %38 : vector<8x32xf32> to vector<1x8x32xf32>
    %40 = vector.broadcast %39 : vector<1x8x32xf32> to vector<4x8x32xf32>
    %c0_19 = arith.constant 0 : index
    %c0_20 = arith.constant 0 : index
    %c0_21 = arith.constant 0 : index
    %c0_22 = arith.constant 0 : index
    %41 = vector.load %arg6[%c0_19, %c0_20, %c0_21, %c0_22] : memref<2x4x32x8xf32, #tpu.memory_space<vmem>>, vector<1x4x32x8xf32>
    %42 = vector.shape_cast %41 : vector<1x4x32x8xf32> to vector<4x32x8xf32>
    %cst_23 = arith.constant dense<0.000000e+00> : vector<4x8x8xf32>
    %43 = tpu.matmul %40, %42, %cst_23 {dimension_numbers = #tpu.dot_dimension_numbers<[2], [1], [1], [2], [0, 0, 0, 1, 1, 2], [0], [0]>} : vector<4x8x32xf32>, vector<4x32x8xf32>, vector<4x8x8xf32> -> vector<4x8x8xf32>
    %c0_24 = arith.constant 0 : index
    %c0_25 = arith.constant 0 : index
    %c0_26 = arith.constant 0 : index
    %c0_27 = arith.constant 0 : index
    %44 = vector.load %arg7[%c0_24, %c0_25, %c0_26, %c0_27] : memref<2x4x32x8xf32, #tpu.memory_space<vmem>>, vector<1x4x32x8xf32>
    %45 = vector.shape_cast %44 : vector<1x4x32x8xf32> to vector<4x32x8xf32>
    %cst_28 = arith.constant dense<0.000000e+00> : vector<4x8x8xf32>
    %46 = tpu.matmul %40, %45, %cst_28 {dimension_numbers = #tpu.dot_dimension_numbers<[2], [1], [1], [2], [0, 0, 0, 1, 1, 2], [0], [0]>} : vector<4x8x32xf32>, vector<4x32x8xf32>, vector<4x8x8xf32> -> vector<4x8x8xf32>
    %c0_29 = arith.constant 0 : index
    %c0_30 = arith.constant 0 : index
    %c0_31 = arith.constant 0 : index
    %c0_32 = arith.constant 0 : index
    %47 = vector.load %arg8[%c0_29, %c0_30, %c0_31, %c0_32] : memref<2x4x32x8xf32, #tpu.memory_space<vmem>>, vector<1x4x32x8xf32>
    %48 = vector.shape_cast %47 : vector<1x4x32x8xf32> to vector<4x32x8xf32>
    %cst_33 = arith.constant dense<0.000000e+00> : vector<4x8x8xf32>
    %49 = tpu.matmul %40, %48, %cst_33 {dimension_numbers = #tpu.dot_dimension_numbers<[2], [1], [1], [2], [0, 0, 0, 1, 1, 2], [0], [0]>} : vector<4x8x32xf32>, vector<4x32x8xf32>, vector<4x8x8xf32> -> vector<4x8x8xf32>
    %cst_34 = arith.constant dense<0.000000e+00> : vector<4x8x8xf32>
    %50 = tpu.matmul %43, %46, %cst_34 {dimension_numbers = #tpu.dot_dimension_numbers<[2], [2], [1], [1], [0, 0, 0, 1, 1, 1], [0], [0]>} : vector<4x8x8xf32>, vector<4x8x8xf32>, vector<4x8x8xf32> -> vector<4x8x8xf32>
    %51 = vector.broadcast %14 : f32 to vector<4x8x8xf32>
    %52 = arith.mulf %50, %51 : vector<4x8x8xf32>
    %cst_35 = arith.constant 0xFF800000 : f32
    %53 = vector.broadcast %cst_35 : f32 to vector<4x8x8xf32>
    %54 = arith.select %13, %52, %53 : vector<4x8x8xi1>, vector<4x8x8xf32>
    %cst_36 = arith.constant dense<0xFF800000> : vector<4x8xf32>
    %55 = vector.multi_reduction <maximumf>, %54, %cst_36 [2] : vector<4x8x8xf32> to vector<4x8xf32>
    %56 = vector.shape_cast %55 : vector<4x8xf32> to vector<4x8x1xf32>
    %57 = vector.broadcast %56 : vector<4x8x1xf32> to vector<4x8x8xf32>
    %58 = arith.subf %54, %57 : vector<4x8x8xf32>
    %59 = math.exp %58 : vector<4x8x8xf32>
    %cst_37 = arith.constant dense<0.000000e+00> : vector<4x8xf32>
    %60 = vector.multi_reduction <add>, %59, %cst_37 [2] : vector<4x8x8xf32> to vector<4x8xf32>
    %61 = vector.shape_cast %60 : vector<4x8xf32> to vector<4x8x1xf32>
    %62 = tpu.reciprocal %61 {approx = true} : vector<4x8x1xf32> -> vector<4x8x1xf32>
    %63 = vector.broadcast %62 : vector<4x8x1xf32> to vector<4x8x8xf32>
    %64 = arith.mulf %59, %63 : vector<4x8x8xf32>
    %cst_38 = arith.constant dense<0.000000e+00> : vector<4x8x8xf32>
    %65 = tpu.matmul %64, %49, %cst_38 {dimension_numbers = #tpu.dot_dimension_numbers<[2], [1], [1], [2], [0, 0, 0, 1, 1, 2], [0], [0]>} : vector<4x8x8xf32>, vector<4x8x8xf32>, vector<4x8x8xf32> -> vector<4x8x8xf32>
    %c0_39 = arith.constant 0 : index
    %c0_40 = arith.constant 0 : index
    %c0_41 = arith.constant 0 : index
    %c0_42 = arith.constant 0 : index
    %66 = vector.load %arg9[%c0_39, %c0_40, %c0_41, %c0_42] : memref<2x4x8x32xf32, #tpu.memory_space<vmem>>, vector<1x4x8x32xf32>
    %67 = vector.shape_cast %66 : vector<1x4x8x32xf32> to vector<4x8x32xf32>
    %cst_43 = arith.constant dense<0.000000e+00> : vector<4x8x32xf32>
    %68 = tpu.matmul %65, %67, %cst_43 {dimension_numbers = #tpu.dot_dimension_numbers<[2], [1], [1], [2], [0, 0, 0, 1, 1, 2], [0], [0]>} : vector<4x8x8xf32>, vector<4x8x32xf32>, vector<4x8x32xf32> -> vector<4x8x32xf32>
    %cst_44 = arith.constant dense<0.000000e+00> : vector<8x32xf32>
    %69 = vector.multi_reduction <add>, %68, %cst_44 [0] : vector<4x8x32xf32> to vector<8x32xf32>
    %70 = arith.addf %10, %69 : vector<8x32xf32>
    %c0_45 = arith.constant 0 : index
    %c0_46 = arith.constant 0 : index
    %c0_47 = arith.constant 0 : index
    %71 = vector.load %arg10[%c0_45, %c0_46, %c0_47] : memref<2x1x32xf32, #tpu.memory_space<vmem>>, vector<1x1x32xf32>
    %72 = vector.shape_cast %71 : vector<1x1x32xf32> to vector<1x32xf32>
    %73 = vector.broadcast %72 : vector<1x32xf32> to vector<8x32xf32>
    %74 = arith.addf %70, %73 : vector<8x32xf32>
    %c0_48 = arith.constant 0 : index
    %c0_49 = arith.constant 0 : index
    %c0_50 = arith.constant 0 : index
    %75 = vector.load %arg11[%c0_48, %c0_49, %c0_50] : memref<2x1x32xf32, #tpu.memory_space<vmem>>, vector<1x1x32xf32>
    %76 = vector.shape_cast %75 : vector<1x1x32xf32> to vector<1x32xf32>
    %c0_51 = arith.constant 0 : index
    %c0_52 = arith.constant 0 : index
    %c0_53 = arith.constant 0 : index
    %77 = vector.load %arg12[%c0_51, %c0_52, %c0_53] : memref<2x1x32xf32, #tpu.memory_space<vmem>>, vector<1x1x32xf32>
    %78 = vector.shape_cast %77 : vector<1x1x32xf32> to vector<1x32xf32>
    %cst_54 = arith.constant dense<0.000000e+00> : vector<8xf32>
    %79 = vector.multi_reduction <add>, %74, %cst_54 [1] : vector<8x32xf32> to vector<8xf32>
    %80 = vector.shape_cast %79 : vector<8xf32> to vector<8x1xf32>
    %cst_55 = arith.constant 3.200000e+01 : f32
    %81 = vector.broadcast %cst_55 : f32 to vector<8x1xf32>
    %82 = arith.divf %80, %81 : vector<8x1xf32>
    %83 = vector.broadcast %82 : vector<8x1xf32> to vector<8x32xf32>
    %84 = arith.subf %74, %83 : vector<8x32xf32>
    %85 = arith.mulf %84, %84 : vector<8x32xf32>
    %cst_56 = arith.constant dense<0.000000e+00> : vector<8xf32>
    %86 = vector.multi_reduction <add>, %85, %cst_56 [1] : vector<8x32xf32> to vector<8xf32>
    %87 = vector.shape_cast %86 : vector<8xf32> to vector<8x1xf32>
    %cst_57 = arith.constant 3.200000e+01 : f32
    %88 = vector.broadcast %cst_57 : f32 to vector<8x1xf32>
    %89 = arith.divf %87, %88 : vector<8x1xf32>
    %cst_58 = arith.constant 9.99999974E-6 : f32
    %90 = vector.broadcast %cst_58 : f32 to vector<8x1xf32>
    %91 = arith.addf %89, %90 : vector<8x1xf32>
    %92 = math.rsqrt %91 : vector<8x1xf32>
    %93 = vector.broadcast %92 : vector<8x1xf32> to vector<8x32xf32>
    %94 = arith.mulf %84, %93 : vector<8x32xf32>
    %95 = vector.broadcast %76 : vector<1x32xf32> to vector<8x32xf32>
    %96 = arith.mulf %94, %95 : vector<8x32xf32>
    %97 = vector.broadcast %78 : vector<1x32xf32> to vector<8x32xf32>
    %98 = arith.addf %96, %97 : vector<8x32xf32>
    %c0_59 = arith.constant 0 : index
    %c0_60 = arith.constant 0 : index
    %c0_61 = arith.constant 0 : index
    %99 = vector.load %arg13[%c0_59, %c0_60, %c0_61] : memref<2x32x128xf32, #tpu.memory_space<vmem>>, vector<1x32x128xf32>
    %100 = vector.shape_cast %99 : vector<1x32x128xf32> to vector<32x128xf32>
    %cst_62 = arith.constant dense<0.000000e+00> : vector<8x128xf32>
    %101 = tpu.matmul %98, %100, %cst_62 {dimension_numbers = #tpu.dot_dimension_numbers<[1], [0], [0], [1], [0, 0, 1, 1], [], []>} : vector<8x32xf32>, vector<32x128xf32>, vector<8x128xf32> -> vector<8x128xf32>
    %c0_63 = arith.constant 0 : index
    %c0_64 = arith.constant 0 : index
    %c0_65 = arith.constant 0 : index
    %102 = vector.load %arg14[%c0_63, %c0_64, %c0_65] : memref<2x1x128xf32, #tpu.memory_space<vmem>>, vector<1x1x128xf32>
    %103 = vector.shape_cast %102 : vector<1x1x128xf32> to vector<1x128xf32>
    %104 = vector.broadcast %103 : vector<1x128xf32> to vector<8x128xf32>
    %105 = arith.addf %101, %104 : vector<8x128xf32>
    %cst_66 = arith.constant 0.000000e+00 : f32
    %106 = vector.broadcast %cst_66 : f32 to vector<8x128xf32>
    %107 = arith.maximumf %105, %106 : vector<8x128xf32>
    %c0_67 = arith.constant 0 : index
    %c0_68 = arith.constant 0 : index
    %c0_69 = arith.constant 0 : index
    %108 = vector.load %arg15[%c0_67, %c0_68, %c0_69] : memref<2x128x32xf32, #tpu.memory_space<vmem>>, vector<1x128x32xf32>
    %109 = vector.shape_cast %108 : vector<1x128x32xf32> to vector<128x32xf32>
    %cst_70 = arith.constant dense<0.000000e+00> : vector<8x32xf32>
    %110 = tpu.matmul %107, %109, %cst_70 {dimension_numbers = #tpu.dot_dimension_numbers<[1], [0], [0], [1], [0, 0, 1, 1], [], []>} : vector<8x128xf32>, vector<128x32xf32>, vector<8x32xf32> -> vector<8x32xf32>
    %111 = arith.addf %74, %110 : vector<8x32xf32>
    %c0_71 = arith.constant 0 : index
    %c0_72 = arith.constant 0 : index
    %c0_73 = arith.constant 0 : index
    %112 = vector.load %arg16[%c0_71, %c0_72, %c0_73] : memref<2x1x32xf32, #tpu.memory_space<vmem>>, vector<1x1x32xf32>
    %113 = vector.shape_cast %112 : vector<1x1x32xf32> to vector<1x32xf32>
    %114 = vector.broadcast %113 : vector<1x32xf32> to vector<8x32xf32>
    %115 = arith.addf %111, %114 : vector<8x32xf32>
    %c1 = arith.constant 1 : index
    %c0_74 = arith.constant 0 : index
    %c0_75 = arith.constant 0 : index
    %116 = vector.load %arg4[%c1, %c0_74, %c0_75] : memref<2x1x32xf32, #tpu.memory_space<vmem>>, vector<1x1x32xf32>
    %117 = vector.shape_cast %116 : vector<1x1x32xf32> to vector<1x32xf32>
    %c1_76 = arith.constant 1 : index
    %c0_77 = arith.constant 0 : index
    %c0_78 = arith.constant 0 : index
    %118 = vector.load %arg5[%c1_76, %c0_77, %c0_78] : memref<2x1x32xf32, #tpu.memory_space<vmem>>, vector<1x1x32xf32>
    %119 = vector.shape_cast %118 : vector<1x1x32xf32> to vector<1x32xf32>
    %cst_79 = arith.constant dense<0.000000e+00> : vector<8xf32>
    %120 = vector.multi_reduction <add>, %115, %cst_79 [1] : vector<8x32xf32> to vector<8xf32>
    %121 = vector.shape_cast %120 : vector<8xf32> to vector<8x1xf32>
    %cst_80 = arith.constant 3.200000e+01 : f32
    %122 = vector.broadcast %cst_80 : f32 to vector<8x1xf32>
    %123 = arith.divf %121, %122 : vector<8x1xf32>
    %124 = vector.broadcast %123 : vector<8x1xf32> to vector<8x32xf32>
    %125 = arith.subf %115, %124 : vector<8x32xf32>
    %126 = arith.mulf %125, %125 : vector<8x32xf32>
    %cst_81 = arith.constant dense<0.000000e+00> : vector<8xf32>
    %127 = vector.multi_reduction <add>, %126, %cst_81 [1] : vector<8x32xf32> to vector<8xf32>
    %128 = vector.shape_cast %127 : vector<8xf32> to vector<8x1xf32>
    %cst_82 = arith.constant 3.200000e+01 : f32
    %129 = vector.broadcast %cst_82 : f32 to vector<8x1xf32>
    %130 = arith.divf %128, %129 : vector<8x1xf32>
    %cst_83 = arith.constant 9.99999974E-6 : f32
    %131 = vector.broadcast %cst_83 : f32 to vector<8x1xf32>
    %132 = arith.addf %130, %131 : vector<8x1xf32>
    %133 = math.rsqrt %132 : vector<8x1xf32>
    %134 = vector.broadcast %133 : vector<8x1xf32> to vector<8x32xf32>
    %135 = arith.mulf %125, %134 : vector<8x32xf32>
    %136 = vector.broadcast %117 : vector<1x32xf32> to vector<8x32xf32>
    %137 = arith.mulf %135, %136 : vector<8x32xf32>
    %138 = vector.broadcast %119 : vector<1x32xf32> to vector<8x32xf32>
    %139 = arith.addf %137, %138 : vector<8x32xf32>
    %140 = vector.shape_cast %139 : vector<8x32xf32> to vector<1x8x32xf32>
    %141 = vector.broadcast %140 : vector<1x8x32xf32> to vector<4x8x32xf32>
    %c1_84 = arith.constant 1 : index
    %c0_85 = arith.constant 0 : index
    %c0_86 = arith.constant 0 : index
    %c0_87 = arith.constant 0 : index
    %142 = vector.load %arg6[%c1_84, %c0_85, %c0_86, %c0_87] : memref<2x4x32x8xf32, #tpu.memory_space<vmem>>, vector<1x4x32x8xf32>
    %143 = vector.shape_cast %142 : vector<1x4x32x8xf32> to vector<4x32x8xf32>
    %cst_88 = arith.constant dense<0.000000e+00> : vector<4x8x8xf32>
    %144 = tpu.matmul %141, %143, %cst_88 {dimension_numbers = #tpu.dot_dimension_numbers<[2], [1], [1], [2], [0, 0, 0, 1, 1, 2], [0], [0]>} : vector<4x8x32xf32>, vector<4x32x8xf32>, vector<4x8x8xf32> -> vector<4x8x8xf32>
    %c1_89 = arith.constant 1 : index
    %c0_90 = arith.constant 0 : index
    %c0_91 = arith.constant 0 : index
    %c0_92 = arith.constant 0 : index
    %145 = vector.load %arg7[%c1_89, %c0_90, %c0_91, %c0_92] : memref<2x4x32x8xf32, #tpu.memory_space<vmem>>, vector<1x4x32x8xf32>
    %146 = vector.shape_cast %145 : vector<1x4x32x8xf32> to vector<4x32x8xf32>
    %cst_93 = arith.constant dense<0.000000e+00> : vector<4x8x8xf32>
    %147 = tpu.matmul %141, %146, %cst_93 {dimension_numbers = #tpu.dot_dimension_numbers<[2], [1], [1], [2], [0, 0, 0, 1, 1, 2], [0], [0]>} : vector<4x8x32xf32>, vector<4x32x8xf32>, vector<4x8x8xf32> -> vector<4x8x8xf32>
    %c1_94 = arith.constant 1 : index
    %c0_95 = arith.constant 0 : index
    %c0_96 = arith.constant 0 : index
    %c0_97 = arith.constant 0 : index
    %148 = vector.load %arg8[%c1_94, %c0_95, %c0_96, %c0_97] : memref<2x4x32x8xf32, #tpu.memory_space<vmem>>, vector<1x4x32x8xf32>
    %149 = vector.shape_cast %148 : vector<1x4x32x8xf32> to vector<4x32x8xf32>
    %cst_98 = arith.constant dense<0.000000e+00> : vector<4x8x8xf32>
    %150 = tpu.matmul %141, %149, %cst_98 {dimension_numbers = #tpu.dot_dimension_numbers<[2], [1], [1], [2], [0, 0, 0, 1, 1, 2], [0], [0]>} : vector<4x8x32xf32>, vector<4x32x8xf32>, vector<4x8x8xf32> -> vector<4x8x8xf32>
    %cst_99 = arith.constant dense<0.000000e+00> : vector<4x8x8xf32>
    %151 = tpu.matmul %144, %147, %cst_99 {dimension_numbers = #tpu.dot_dimension_numbers<[2], [2], [1], [1], [0, 0, 0, 1, 1, 1], [0], [0]>} : vector<4x8x8xf32>, vector<4x8x8xf32>, vector<4x8x8xf32> -> vector<4x8x8xf32>
    %152 = vector.broadcast %14 : f32 to vector<4x8x8xf32>
    %153 = arith.mulf %151, %152 : vector<4x8x8xf32>
    %cst_100 = arith.constant 0xFF800000 : f32
    %154 = vector.broadcast %cst_100 : f32 to vector<4x8x8xf32>
    %155 = arith.select %13, %153, %154 : vector<4x8x8xi1>, vector<4x8x8xf32>
    %cst_101 = arith.constant dense<0xFF800000> : vector<4x8xf32>
    %156 = vector.multi_reduction <maximumf>, %155, %cst_101 [2] : vector<4x8x8xf32> to vector<4x8xf32>
    %157 = vector.shape_cast %156 : vector<4x8xf32> to vector<4x8x1xf32>
    %158 = vector.broadcast %157 : vector<4x8x1xf32> to vector<4x8x8xf32>
    %159 = arith.subf %155, %158 : vector<4x8x8xf32>
    %160 = math.exp %159 : vector<4x8x8xf32>
    %cst_102 = arith.constant dense<0.000000e+00> : vector<4x8xf32>
    %161 = vector.multi_reduction <add>, %160, %cst_102 [2] : vector<4x8x8xf32> to vector<4x8xf32>
    %162 = vector.shape_cast %161 : vector<4x8xf32> to vector<4x8x1xf32>
    %163 = tpu.reciprocal %162 {approx = true} : vector<4x8x1xf32> -> vector<4x8x1xf32>
    %164 = vector.broadcast %163 : vector<4x8x1xf32> to vector<4x8x8xf32>
    %165 = arith.mulf %160, %164 : vector<4x8x8xf32>
    %cst_103 = arith.constant dense<0.000000e+00> : vector<4x8x8xf32>
    %166 = tpu.matmul %165, %150, %cst_103 {dimension_numbers = #tpu.dot_dimension_numbers<[2], [1], [1], [2], [0, 0, 0, 1, 1, 2], [0], [0]>} : vector<4x8x8xf32>, vector<4x8x8xf32>, vector<4x8x8xf32> -> vector<4x8x8xf32>
    %c1_104 = arith.constant 1 : index
    %c0_105 = arith.constant 0 : index
    %c0_106 = arith.constant 0 : index
    %c0_107 = arith.constant 0 : index
    %167 = vector.load %arg9[%c1_104, %c0_105, %c0_106, %c0_107] : memref<2x4x8x32xf32, #tpu.memory_space<vmem>>, vector<1x4x8x32xf32>
    %168 = vector.shape_cast %167 : vector<1x4x8x32xf32> to vector<4x8x32xf32>
    %cst_108 = arith.constant dense<0.000000e+00> : vector<4x8x32xf32>
    %169 = tpu.matmul %166, %168, %cst_108 {dimension_numbers = #tpu.dot_dimension_numbers<[2], [1], [1], [2], [0, 0, 0, 1, 1, 2], [0], [0]>} : vector<4x8x8xf32>, vector<4x8x32xf32>, vector<4x8x32xf32> -> vector<4x8x32xf32>
    %cst_109 = arith.constant dense<0.000000e+00> : vector<8x32xf32>
    %170 = vector.multi_reduction <add>, %169, %cst_109 [0] : vector<4x8x32xf32> to vector<8x32xf32>
    %171 = arith.addf %115, %170 : vector<8x32xf32>
    %c1_110 = arith.constant 1 : index
    %c0_111 = arith.constant 0 : index
    %c0_112 = arith.constant 0 : index
    %172 = vector.load %arg10[%c1_110, %c0_111, %c0_112] : memref<2x1x32xf32, #tpu.memory_space<vmem>>, vector<1x1x32xf32>
    %173 = vector.shape_cast %172 : vector<1x1x32xf32> to vector<1x32xf32>
    %174 = vector.broadcast %173 : vector<1x32xf32> to vector<8x32xf32>
    %175 = arith.addf %171, %174 : vector<8x32xf32>
    %c1_113 = arith.constant 1 : index
    %c0_114 = arith.constant 0 : index
    %c0_115 = arith.constant 0 : index
    %176 = vector.load %arg11[%c1_113, %c0_114, %c0_115] : memref<2x1x32xf32, #tpu.memory_space<vmem>>, vector<1x1x32xf32>
    %177 = vector.shape_cast %176 : vector<1x1x32xf32> to vector<1x32xf32>
    %c1_116 = arith.constant 1 : index
    %c0_117 = arith.constant 0 : index
    %c0_118 = arith.constant 0 : index
    %178 = vector.load %arg12[%c1_116, %c0_117, %c0_118] : memref<2x1x32xf32, #tpu.memory_space<vmem>>, vector<1x1x32xf32>
    %179 = vector.shape_cast %178 : vector<1x1x32xf32> to vector<1x32xf32>
    %cst_119 = arith.constant dense<0.000000e+00> : vector<8xf32>
    %180 = vector.multi_reduction <add>, %175, %cst_119 [1] : vector<8x32xf32> to vector<8xf32>
    %181 = vector.shape_cast %180 : vector<8xf32> to vector<8x1xf32>
    %cst_120 = arith.constant 3.200000e+01 : f32
    %182 = vector.broadcast %cst_120 : f32 to vector<8x1xf32>
    %183 = arith.divf %181, %182 : vector<8x1xf32>
    %184 = vector.broadcast %183 : vector<8x1xf32> to vector<8x32xf32>
    %185 = arith.subf %175, %184 : vector<8x32xf32>
    %186 = arith.mulf %185, %185 : vector<8x32xf32>
    %cst_121 = arith.constant dense<0.000000e+00> : vector<8xf32>
    %187 = vector.multi_reduction <add>, %186, %cst_121 [1] : vector<8x32xf32> to vector<8xf32>
    %188 = vector.shape_cast %187 : vector<8xf32> to vector<8x1xf32>
    %cst_122 = arith.constant 3.200000e+01 : f32
    %189 = vector.broadcast %cst_122 : f32 to vector<8x1xf32>
    %190 = arith.divf %188, %189 : vector<8x1xf32>
    %cst_123 = arith.constant 9.99999974E-6 : f32
    %191 = vector.broadcast %cst_123 : f32 to vector<8x1xf32>
    %192 = arith.addf %190, %191 : vector<8x1xf32>
    %193 = math.rsqrt %192 : vector<8x1xf32>
    %194 = vector.broadcast %193 : vector<8x1xf32> to vector<8x32xf32>
    %195 = arith.mulf %185, %194 : vector<8x32xf32>
    %196 = vector.broadcast %177 : vector<1x32xf32> to vector<8x32xf32>
    %197 = arith.mulf %195, %196 : vector<8x32xf32>
    %198 = vector.broadcast %179 : vector<1x32xf32> to vector<8x32xf32>
    %199 = arith.addf %197, %198 : vector<8x32xf32>
    %c1_124 = arith.constant 1 : index
    %c0_125 = arith.constant 0 : index
    %c0_126 = arith.constant 0 : index
    %200 = vector.load %arg13[%c1_124, %c0_125, %c0_126] : memref<2x32x128xf32, #tpu.memory_space<vmem>>, vector<1x32x128xf32>
    %201 = vector.shape_cast %200 : vector<1x32x128xf32> to vector<32x128xf32>
    %cst_127 = arith.constant dense<0.000000e+00> : vector<8x128xf32>
    %202 = tpu.matmul %199, %201, %cst_127 {dimension_numbers = #tpu.dot_dimension_numbers<[1], [0], [0], [1], [0, 0, 1, 1], [], []>} : vector<8x32xf32>, vector<32x128xf32>, vector<8x128xf32> -> vector<8x128xf32>
    %c1_128 = arith.constant 1 : index
    %c0_129 = arith.constant 0 : index
    %c0_130 = arith.constant 0 : index
    %203 = vector.load %arg14[%c1_128, %c0_129, %c0_130] : memref<2x1x128xf32, #tpu.memory_space<vmem>>, vector<1x1x128xf32>
    %204 = vector.shape_cast %203 : vector<1x1x128xf32> to vector<1x128xf32>
    %205 = vector.broadcast %204 : vector<1x128xf32> to vector<8x128xf32>
    %206 = arith.addf %202, %205 : vector<8x128xf32>
    %cst_131 = arith.constant 0.000000e+00 : f32
    %207 = vector.broadcast %cst_131 : f32 to vector<8x128xf32>
    %208 = arith.maximumf %206, %207 : vector<8x128xf32>
    %c1_132 = arith.constant 1 : index
    %c0_133 = arith.constant 0 : index
    %c0_134 = arith.constant 0 : index
    %209 = vector.load %arg15[%c1_132, %c0_133, %c0_134] : memref<2x128x32xf32, #tpu.memory_space<vmem>>, vector<1x128x32xf32>
    %210 = vector.shape_cast %209 : vector<1x128x32xf32> to vector<128x32xf32>
    %cst_135 = arith.constant dense<0.000000e+00> : vector<8x32xf32>
    %211 = tpu.matmul %208, %210, %cst_135 {dimension_numbers = #tpu.dot_dimension_numbers<[1], [0], [0], [1], [0, 0, 1, 1], [], []>} : vector<8x128xf32>, vector<128x32xf32>, vector<8x32xf32> -> vector<8x32xf32>
    %212 = arith.addf %175, %211 : vector<8x32xf32>
    %c1_136 = arith.constant 1 : index
    %c0_137 = arith.constant 0 : index
    %c0_138 = arith.constant 0 : index
    %213 = vector.load %arg16[%c1_136, %c0_137, %c0_138] : memref<2x1x32xf32, #tpu.memory_space<vmem>>, vector<1x1x32xf32>
    %214 = vector.shape_cast %213 : vector<1x1x32xf32> to vector<1x32xf32>
    %215 = vector.broadcast %214 : vector<1x32xf32> to vector<8x32xf32>
    %216 = arith.addf %212, %215 : vector<8x32xf32>
    %c0_139 = arith.constant 0 : index
    %c0_140 = arith.constant 0 : index
    %217 = vector.load %arg17[%c0_139, %c0_140] : memref<1x32xf32, #tpu.memory_space<vmem>>, vector<1x32xf32>
    %c0_141 = arith.constant 0 : index
    %c0_142 = arith.constant 0 : index
    %218 = vector.load %arg18[%c0_141, %c0_142] : memref<1x32xf32, #tpu.memory_space<vmem>>, vector<1x32xf32>
    %cst_143 = arith.constant dense<0.000000e+00> : vector<8xf32>
    %219 = vector.multi_reduction <add>, %216, %cst_143 [1] : vector<8x32xf32> to vector<8xf32>
    %220 = vector.shape_cast %219 : vector<8xf32> to vector<8x1xf32>
    %cst_144 = arith.constant 3.200000e+01 : f32
    %221 = vector.broadcast %cst_144 : f32 to vector<8x1xf32>
    %222 = arith.divf %220, %221 : vector<8x1xf32>
    %223 = vector.broadcast %222 : vector<8x1xf32> to vector<8x32xf32>
    %224 = arith.subf %216, %223 : vector<8x32xf32>
    %225 = arith.mulf %224, %224 : vector<8x32xf32>
    %cst_145 = arith.constant dense<0.000000e+00> : vector<8xf32>
    %226 = vector.multi_reduction <add>, %225, %cst_145 [1] : vector<8x32xf32> to vector<8xf32>
    %227 = vector.shape_cast %226 : vector<8xf32> to vector<8x1xf32>
    %cst_146 = arith.constant 3.200000e+01 : f32
    %228 = vector.broadcast %cst_146 : f32 to vector<8x1xf32>
    %229 = arith.divf %227, %228 : vector<8x1xf32>
    %cst_147 = arith.constant 9.99999974E-6 : f32
    %230 = vector.broadcast %cst_147 : f32 to vector<8x1xf32>
    %231 = arith.addf %229, %230 : vector<8x1xf32>
    %232 = math.rsqrt %231 : vector<8x1xf32>
    %233 = vector.broadcast %232 : vector<8x1xf32> to vector<8x32xf32>
    %234 = arith.mulf %224, %233 : vector<8x32xf32>
    %235 = vector.broadcast %217 : vector<1x32xf32> to vector<8x32xf32>
    %236 = arith.mulf %234, %235 : vector<8x32xf32>
    %237 = vector.broadcast %218 : vector<1x32xf32> to vector<8x32xf32>
    %238 = arith.addf %236, %237 : vector<8x32xf32>
    %c0_148 = arith.constant 0 : index
    %c0_149 = arith.constant 0 : index
    %239 = vector.load %arg19[%c0_148, %c0_149] : memref<32x64xf32, #tpu.memory_space<vmem>>, vector<32x64xf32>
    %cst_150 = arith.constant dense<0.000000e+00> : vector<8x64xf32>
    %240 = tpu.matmul %238, %239, %cst_150 {dimension_numbers = #tpu.dot_dimension_numbers<[1], [0], [0], [1], [0, 0, 1, 1], [], []>} : vector<8x32xf32>, vector<32x64xf32>, vector<8x64xf32> -> vector<8x64xf32>
    %c0_151 = arith.constant 0 : index
    %c0_152 = arith.constant 0 : index
    %241 = vector.load %arg20[%c0_151, %c0_152] : memref<1x64xf32, #tpu.memory_space<vmem>>, vector<1x64xf32>
    %242 = vector.broadcast %241 : vector<1x64xf32> to vector<8x64xf32>
    %243 = arith.addf %240, %242 : vector<8x64xf32>
    %c0_153 = arith.constant 0 : index
    %c0_154 = arith.constant 0 : index
    %c0_155 = arith.constant 0 : index
    %244 = vector.load %arg21[%c0_153, %c0_154, %c0_155] : memref<1x8x64xf32, #tpu.memory_space<vmem>>, vector<1x8x64xf32>
    %245 = vector.shape_cast %244 : vector<1x8x64xf32> to vector<8x64xf32>
    %246 = vector.shape_cast %243 : vector<8x64xf32> to vector<1x8x64xf32>
    tpu.vector_store %arg21[%c0_153, %c0_154, %c0_155], %246 {strides = array<i32>} : memref<1x8x64xf32, #tpu.memory_space<vmem>>, vector<1x8x64xf32>,
    return
  }
  func.func @transform_0(%arg0: i32) -> (i32, i32, i32) {
    %c0_i32 = arith.constant 0 : i32
    %c0_i32_0 = arith.constant 0 : i32
    %c0_i32_1 = arith.constant 0 : i32
    return %arg0, %c0_i32, %c0_i32_0 : i32, i32, i32
  }
  func.func @transform_1(%arg0: i32) -> (i32, i32) {
    %c0_i32 = arith.constant 0 : i32
    %c0_i32_0 = arith.constant 0 : i32
    %c0_i32_1 = arith.constant 0 : i32
    return %c0_i32, %c0_i32_0 : i32, i32
  }
  func.func @transform_2(%arg0: i32) -> (i32, i32) {
    %c0_i32 = arith.constant 0 : i32
    %c0_i32_0 = arith.constant 0 : i32
    %c0_i32_1 = arith.constant 0 : i32
    return %c0_i32, %c0_i32_0 : i32, i32
  }
  func.func @transform_3(%arg0: i32) -> (i32, i32, i32) {
    %c0_i32 = arith.constant 0 : i32
    %c0_i32_0 = arith.constant 0 : i32
    %c0_i32_1 = arith.constant 0 : i32
    %c0_i32_2 = arith.constant 0 : i32
    return %c0_i32, %c0_i32_0, %c0_i32_1 : i32, i32, i32
  }
  func.func @transform_4(%arg0: i32) -> (i32, i32, i32) {
    %c0_i32 = arith.constant 0 : i32
    %c0_i32_0 = arith.constant 0 : i32
    %c0_i32_1 = arith.constant 0 : i32
    %c0_i32_2 = arith.constant 0 : i32
    return %c0_i32, %c0_i32_0, %c0_i32_1 : i32, i32, i32
  }
  func.func @transform_5(%arg0: i32) -> (i32, i32, i32, i32) {
    %c0_i32 = arith.constant 0 : i32
    %c0_i32_0 = arith.constant 0 : i32
    %c0_i32_1 = arith.constant 0 : i32
    %c0_i32_2 = arith.constant 0 : i32
    %c0_i32_3 = arith.constant 0 : i32
    return %c0_i32, %c0_i32_0, %c0_i32_1, %c0_i32_2 : i32, i32, i32, i32
  }
  func.func @transform_6(%arg0: i32) -> (i32, i32, i32, i32) {
    %c0_i32 = arith.constant 0 : i32
    %c0_i32_0 = arith.constant 0 : i32
    %c0_i32_1 = arith.constant 0 : i32
    %c0_i32_2 = arith.constant 0 : i32
    %c0_i32_3 = arith.constant 0 : i32
    return %c0_i32, %c0_i32_0, %c0_i32_1, %c0_i32_2 : i32, i32, i32, i32
  }
  func.func @transform_7(%arg0: i32) -> (i32, i32, i32, i32) {
    %c0_i32 = arith.constant 0 : i32
    %c0_i32_0 = arith.constant 0 : i32
    %c0_i32_1 = arith.constant 0 : i32
    %c0_i32_2 = arith.constant 0 : i32
    %c0_i32_3 = arith.constant 0 : i32
    return %c0_i32, %c0_i32_0, %c0_i32_1, %c0_i32_2 : i32, i32, i32, i32
  }
  func.func @transform_8(%arg0: i32) -> (i32, i32, i32, i32) {
    %c0_i32 = arith.constant 0 : i32
    %c0_i32_0 = arith.constant 0 : i32
    %c0_i32_1 = arith.constant 0 : i32
    %c0_i32_2 = arith.constant 0 : i32
    %c0_i32_3 = arith.constant 0 : i32
    return %c0_i32, %c0_i32_0, %c0_i32_1, %c0_i32_2 : i32, i32, i32, i32
  }
  func.func @transform_9(%arg0: i32) -> (i32, i32, i32) {
    %c0_i32 = arith.constant 0 : i32
    %c0_i32_0 = arith.constant 0 : i32
    %c0_i32_1 = arith.constant 0 : i32
    %c0_i32_2 = arith.constant 0 : i32
    return %c0_i32, %c0_i32_0, %c0_i32_1 : i32, i32, i32
  }
  func.func @transform_10(%arg0: i32) -> (i32, i32, i32) {
    %c0_i32 = arith.constant 0 : i32
    %c0_i32_0 = arith.constant 0 : i32
    %c0_i32_1 = arith.constant 0 : i32
    %c0_i32_2 = arith.constant 0 : i32
    return %c0_i32, %c0_i32_0, %c0_i32_1 : i32, i32, i32
  }
  func.func @transform_11(%arg0: i32) -> (i32, i32, i32) {
    %c0_i32 = arith.constant 0 : i32
    %c0_i32_0 = arith.constant 0 : i32
    %c0_i32_1 = arith.constant 0 : i32
    %c0_i32_2 = arith.constant 0 : i32
    return %c0_i32, %c0_i32_0, %c0_i32_1 : i32, i32, i32
  }
  func.func @transform_12(%arg0: i32) -> (i32, i32, i32) {
    %c0_i32 = arith.constant 0 : i32
    %c0_i32_0 = arith.constant 0 : i32
    %c0_i32_1 = arith.constant 0 : i32
    %c0_i32_2 = arith.constant 0 : i32
    return %c0_i32, %c0_i32_0, %c0_i32_1 : i32, i32, i32
  }
  func.func @transform_13(%arg0: i32) -> (i32, i32, i32) {
    %c0_i32 = arith.constant 0 : i32
    %c0_i32_0 = arith.constant 0 : i32
    %c0_i32_1 = arith.constant 0 : i32
    %c0_i32_2 = arith.constant 0 : i32
    return %c0_i32, %c0_i32_0, %c0_i32_1 : i32, i32, i32
  }
  func.func @transform_14(%arg0: i32) -> (i32, i32, i32) {
    %c0_i32 = arith.constant 0 : i32
    %c0_i32_0 = arith.constant 0 : i32
    %c0_i32_1 = arith.constant 0 : i32
    %c0_i32_2 = arith.constant 0 : i32
    return %c0_i32, %c0_i32_0, %c0_i32_1 : i32, i32, i32
  }
  func.func @transform_15(%arg0: i32) -> (i32, i32, i32) {
    %c0_i32 = arith.constant 0 : i32
    %c0_i32_0 = arith.constant 0 : i32
    %c0_i32_1 = arith.constant 0 : i32
    %c0_i32_2 = arith.constant 0 : i32
    return %c0_i32, %c0_i32_0, %c0_i32_1 : i32, i32, i32
  }
  func.func @transform_16(%arg0: i32) -> (i32, i32) {
    %c0_i32 = arith.constant 0 : i32
    %c0_i32_0 = arith.constant 0 : i32
    %c0_i32_1 = arith.constant 0 : i32
    return %c0_i32, %c0_i32_0 : i32, i32
  }
  func.func @transform_17(%arg0: i32) -> (i32, i32) {
    %c0_i32 = arith.constant 0 : i32
    %c0_i32_0 = arith.constant 0 : i32
    %c0_i32_1 = arith.constant 0 : i32
    return %c0_i32, %c0_i32_0 : i32, i32
  }
  func.func @transform_18(%arg0: i32) -> (i32, i32) {
    %c0_i32 = arith.constant 0 : i32
    %c0_i32_0 = arith.constant 0 : i32
    %c0_i32_1 = arith.constant 0 : i32
    return %c0_i32, %c0_i32_0 : i32, i32
  }
  func.func @transform_19(%arg0: i32) -> (i32, i32) {
    %c0_i32 = arith.constant 0 : i32
    %c0_i32_0 = arith.constant 0 : i32
    %c0_i32_1 = arith.constant 0 : i32
    return %c0_i32, %c0_i32_0 : i32, i32
  }
  func.func @transform_20(%arg0: i32) -> (i32, i32, i32) {
    %c0_i32 = arith.constant 0 : i32
    %c0_i32_0 = arith.constant 0 : i32
    %c0_i32_1 = arith.constant 0 : i32
    return %arg0, %c0_i32, %c0_i32_0 : i32, i32, i32
  }
}

</mosaic_0001>

<llo_original>
// kernel: nanoshakes_forward.1
$region0: #{nanoshakes_forward.1}
  #allocation0 [shape = 'u32[]', space=smem, size = 0x4, offset = 0x4, fixed_abs, tag = 'smem constant byte address 0x4 - core index']
  #allocation1 [shape = 'u32[144,128]{1,0:T(1,128)}', space=vmem, size = 0x12000, scoped, tag = 'internal scratch']
  %s0 = inlined_call_operand.vmem [shape: s32[2,8,1], index: 0, kind: input, shape index: {}]
  %s1 = inlined_call_operand.vmem [shape: f32[64,32], index: 1, kind: input, shape index: {}]
  %s2 = inlined_call_operand.vmem [shape: f32[8,32], index: 2, kind: input, shape index: {}]
  %s3 = inlined_call_operand.vmem [shape: f32[2,1,32], index: 3, kind: input, shape index: {}]
  %s4 = inlined_call_operand.vmem [shape: f32[2,1,32], index: 4, kind: input, shape index: {}]
  %s5 = inlined_call_operand.vmem [shape: f32[2,4,32,8], index: 5, kind: input, shape index: {}]
  %s6 = inlined_call_operand.vmem [shape: f32[2,4,32,8], index: 6, kind: input, shape index: {}]
  %s7 = inlined_call_operand.vmem [shape: f32[2,4,32,8], index: 7, kind: input, shape index: {}]
  %s8 = inlined_call_operand.vmem [shape: f32[2,4,8,32], index: 8, kind: input, shape index: {}]
  %s9 = inlined_call_operand.vmem [shape: f32[2,1,32], index: 9, kind: input, shape index: {}]
  %s10 = inlined_call_operand.vmem [shape: f32[2,1,32], index: 10, kind: input, shape index: {}]
  %s11 = inlined_call_operand.vmem [shape: f32[2,1,32], index: 11, kind: input, shape index: {}]
  %s12 = inlined_call_operand.vmem [shape: f32[2,32,128], index: 12, kind: input, shape index: {}]
  %s13 = inlined_call_operand.vmem [shape: f32[2,1,128], index: 13, kind: input, shape index: {}]
  %s14 = inlined_call_operand.vmem [shape: f32[2,128,32], index: 14, kind: input, shape index: {}]
  %s15 = inlined_call_operand.vmem [shape: f32[2,1,32], index: 15, kind: input, shape index: {}]
  %s16 = inlined_call_operand.vmem [shape: f32[1,32], index: 16, kind: input, shape index: {}]
  %s17 = inlined_call_operand.vmem [shape: f32[1,32], index: 17, kind: input, shape index: {}]
  %s18 = inlined_call_operand.vmem [shape: f32[32,64], index: 18, kind: input, shape index: {}]
  %s19 = inlined_call_operand.vmem [shape: f32[1,64], index: 19, kind: input, shape index: {}]
  %s20 = inlined_call_operand.hbm [shape: f32[2,8,64], index: 20, kind: output, shape index: {}]
  %s21 = sld [smem:[#allocation0]]
  $region113: #{nanoshakes_forward.1} parent=0
    _
  %s23 = ssub.s32 1, %s21
  %s24 = scalar_select 0, %s23, %s21
  $region1: #{nanoshakes_forward.1} parent=0
    #allocation2 [shape = 'u8[8192]{0}', space=vmem, size = 0x2000, scoped, tag = 'output window, operand 0']
    #allocation3 [shape = 's32[2]{0}', space=sflag, size = 0x8, scoped, tag = 'scoped memory for nanoshakes_forward.1']
    %25 = vsyncpa [#allocation3], 0
    %s26 = scalar_lea.sflag [#allocation3], 1
    %27 = vsyncpa %s26, 0
    loop: start=0, step=1, limit=4
    $region2: #{nanoshakes_forward.1} parent=1 // loop_pre_header
      _
    $region3: #{nanoshakes_forward.1} parent=1 // loop_header
      %s29 = sphi 0, %s33
      %p30 = scmp.ge.s32.totalorder %s29, 4
      %s39 = sphi 0, %s41
      %s42 = sphi 0, %s39
      %s43 = sphi 0, %s42
      %s59 = sphi 0, %s43
      %s63 = sphi 0, %s63
      %s65 = sphi 0, %s63
      %s66 = sphi 0, %s65
      %s80 = sphi 0, %s66
      %s84 = sphi 0, %s84
      %s86 = sphi 0, %s84
      %s87 = sphi 0, %s86
      %s101 = sphi 0, %s87
      %s105 = sphi 0, %s105
      %s107 = sphi 0, %s105
      %s108 = sphi 0, %s107
      %s122 = sphi 0, %s108
      %s126 = sphi 0, %s126
      %s128 = sphi 0, %s126
      %s129 = sphi 0, %s128
      %s143 = sphi 0, %s129
      %s147 = sphi 0, %s147
      %s149 = sphi 0, %s147
      %s150 = sphi 0, %s149
      %s164 = sphi 0, %s150
      %s168 = sphi 0, %s168
      %s170 = sphi 0, %s168
      %s171 = sphi 0, %s170
      %s185 = sphi 0, %s171
      %s189 = sphi 0, %s189
      %s191 = sphi 0, %s189
      %s192 = sphi 0, %s191
      %s206 = sphi 0, %s192
      %s210 = sphi 0, %s210
      %s212 = sphi 0, %s210
      %s213 = sphi 0, %s212
      %s227 = sphi 0, %s213
      %s231 = sphi 0, %s231
      %s233 = sphi 0, %s231
      %s234 = sphi 0, %s233
      %s248 = sphi 0, %s234
      %s252 = sphi 0, %s252
      %s254 = sphi 0, %s252
      %s255 = sphi 0, %s254
      %s269 = sphi 0, %s255
      %s273 = sphi 0, %s273
      %s275 = sphi 0, %s273
      %s276 = sphi 0, %s275
      %s290 = sphi 0, %s276
      %s294 = sphi 0, %s294
      %s296 = sphi 0, %s294
      %s297 = sphi 0, %s296
      %s311 = sphi 0, %s297
      %s315 = sphi 0, %s315
      %s317 = sphi 0, %s315
      %s318 = sphi 0, %s317
      %s332 = sphi 0, %s318
      %s336 = sphi 0, %s336
      %s338 = sphi 0, %s336
      %s339 = sphi 0, %s338
      %s353 = sphi 0, %s339
      %s357 = sphi 0, %s357
      %s359 = sphi 0, %s357
      %s360 = sphi 0, %s359
      %s374 = sphi 0, %s360
      %s378 = sphi 0, %s378
      %s380 = sphi 0, %s378
      %s381 = sphi 0, %s380
      %s395 = sphi 0, %s381
      %s399 = sphi 0, %s399
      %s401 = sphi 0, %s399
      %s402 = sphi 0, %s401
      %s416 = sphi 0, %s402
      %s420 = sphi 0, %s420
      %s422 = sphi 0, %s420
      %s423 = sphi 0, %s422
      %s437 = sphi 0, %s423
      %s441 = sphi 0, %s441
      %s443 = sphi 0, %s441
      %s444 = sphi 0, %s443
      %s458 = sphi 0, %s444
      %s464 = sphi 0, %s466
      %s467 = sphi 0, %s464
      %s468 = sphi 0, %s467
      %s484 = sphi 0, %s468
    $region4: #{nanoshakes_forward.1} parent=1 // loop_header_branch
      %32 = sbr.rel (%p30) target = $region8
    $region5: #{nanoshakes_forward.1} parent=1 // loop_body
      %s34 = ssub.s32 %s29, 1
      %s35 = ssub.s32 %s29, 2
      %s36 = sadd.s32 %s29, 1
      %s37 = ssub.s32 %s29, %s36
      %p38 = scmp.eq.s32.totalorder %s37, 0
      %s40 = sadd.s32 %s39, 1
      %s41 = scalar_select %p38, %s39, %s40
      %p44 = pneg %p38
      %p45 = scmp.eq.s32.totalorder %s29, 1
      %p46 = por %p44, %p45
      %p47 = scmp.ne.s32.totalorder %s39, %s42
      %p48 = scmp.eq.s32.totalorder %s29, 0
      %p49 = por %p47, %p48
      %p50 = scmp.ne.s32.totalorder %s39, %s42
      %p51 = scmp.eq.s32.totalorder %s34, 1
      %p52 = por %p50, %p51
      %p53 = scmp.ne.s32.totalorder %s42, %s43
      %p54 = scmp.eq.s32.totalorder %s34, 0
      %p55 = por %p53, %p54
      %p56 = scmp.ne.s32.totalorder %s42, %s43
      %p57 = scmp.eq.s32.totalorder %s35, 1
      %p58 = por %p56, %p57
      %p60 = scmp.ne.s32.totalorder %s43, %s59
      %p61 = scmp.eq.s32.totalorder %s35, 0
      %p62 = por %p60, %p61
      %s64 = sadd.s32 %s63, 1
      %p67 = scmp.eq.s32.totalorder %s29, 1
      %p68 = scmp.ne.s32.totalorder %s63, %s65
      %p69 = scmp.eq.s32.totalorder %s29, 0
      %p70 = por %p68, %p69
      %p71 = scmp.ne.s32.totalorder %s63, %s65
      %p72 = scmp.eq.s32.totalorder %s34, 1
      %p73 = por %p71, %p72
      %p74 = scmp.ne.s32.totalorder %s65, %s66
      %p75 = scmp.eq.s32.totalorder %s34, 0
      %p76 = por %p74, %p75
      %p77 = scmp.ne.s32.totalorder %s65, %s66
      %p78 = scmp.eq.s32.totalorder %s35, 1
      %p79 = por %p77, %p78
      %p81 = scmp.ne.s32.totalorder %s66, %s80
      %p82 = scmp.eq.s32.totalorder %s35, 0
      %p83 = por %p81, %p82
      %s85 = sadd.s32 %s84, 1
      %p88 = scmp.eq.s32.totalorder %s29, 1
      %p89 = scmp.ne.s32.totalorder %s84, %s86
      %p90 = scmp.eq.s32.totalorder %s29, 0
      %p91 = por %p89, %p90
      %p92 = scmp.ne.s32.totalorder %s84, %s86
      %p93 = scmp.eq.s32.totalorder %s34, 1
      %p94 = por %p92, %p93
      %p95 = scmp.ne.s32.totalorder %s86, %s87
      %p96 = scmp.eq.s32.totalorder %s34, 0
      %p97 = por %p95, %p96
      %p98 = scmp.ne.s32.totalorder %s86, %s87
      %p99 = scmp.eq.s32.totalorder %s35, 1
      %p100 = por %p98, %p99
      %p102 = scmp.ne.s32.totalorder %s87, %s101
      %p103 = scmp.eq.s32.totalorder %s35, 0
      %p104 = por %p102, %p103
      %s106 = sadd.s32 %s105, 1
      %p109 = scmp.eq.s32.totalorder %s29, 1
      %p110 = scmp.ne.s32.totalorder %s105, %s107
      %p111 = scmp.eq.s32.totalorder %s29, 0
      %p112 = por %p110, %p111
      %p113 = scmp.ne.s32.totalorder %s105, %s107
      %p114 = scmp.eq.s32.totalorder %s34, 1
      %p115 = por %p113, %p114
      %p116 = scmp.ne.s32.totalorder %s107, %s108
      %p117 = scmp.eq.s32.totalorder %s34, 0
      %p118 = por %p116, %p117
      %p119 = scmp.ne.s32.totalorder %s107, %s108
      %p120 = scmp.eq.s32.totalorder %s35, 1
      %p121 = por %p119, %p120
      %p123 = scmp.ne.s32.totalorder %s108, %s122
      %p124 = scmp.eq.s32.totalorder %s35, 0
      %p125 = por %p123, %p124
      %s127 = sadd.s32 %s126, 1
      %p130 = scmp.eq.s32.totalorder %s29, 1
      %p131 = scmp.ne.s32.totalorder %s126, %s128
      %p132 = scmp.eq.s32.totalorder %s29, 0
      %p133 = por %p131, %p132
      %p134 = scmp.ne.s32.totalorder %s126, %s128
      %p135 = scmp.eq.s32.totalorder %s34, 1
      %p136 = por %p134, %p135
      %p137 = scmp.ne.s32.totalorder %s128, %s129
      %p138 = scmp.eq.s32.totalorder %s34, 0
      %p139 = por %p137, %p138
      %p140 = scmp.ne.s32.totalorder %s128, %s129
      %p141 = scmp.eq.s32.totalorder %s35, 1
      %p142 = por %p140, %p141
      %p144 = scmp.ne.s32.totalorder %s129, %s143
      %p145 = scmp.eq.s32.totalorder %s35, 0
      %p146 = por %p144, %p145
      %s148 = sadd.s32 %s147, 1
      %p151 = scmp.eq.s32.totalorder %s29, 1
      %p152 = scmp.ne.s32.totalorder %s147, %s149
      %p153 = scmp.eq.s32.totalorder %s29, 0
      %p154 = por %p152, %p153
      %p155 = scmp.ne.s32.totalorder %s147, %s149
      %p156 = scmp.eq.s32.totalorder %s34, 1
      %p157 = por %p155, %p156
      %p158 = scmp.ne.s32.totalorder %s149, %s150
      %p159 = scmp.eq.s32.totalorder %s34, 0
      %p160 = por %p158, %p159
      %p161 = scmp.ne.s32.totalorder %s149, %s150
      %p162 = scmp.eq.s32.totalorder %s35, 1
      %p163 = por %p161, %p162
      %p165 = scmp.ne.s32.totalorder %s150, %s164
      %p166 = scmp.eq.s32.totalorder %s35, 0
      %p167 = por %p165, %p166
      %s169 = sadd.s32 %s168, 1
      %p172 = scmp.eq.s32.totalorder %s29, 1
      %p173 = scmp.ne.s32.totalorder %s168, %s170
      %p174 = scmp.eq.s32.totalorder %s29, 0
      %p175 = por %p173, %p174
      %p176 = scmp.ne.s32.totalorder %s168, %s170
      %p177 = scmp.eq.s32.totalorder %s34, 1
      %p178 = por %p176, %p177
      %p179 = scmp.ne.s32.totalorder %s170, %s171
      %p180 = scmp.eq.s32.totalorder %s34, 0
      %p181 = por %p179, %p180
      %p182 = scmp.ne.s32.totalorder %s170, %s171
      %p183 = scmp.eq.s32.totalorder %s35, 1
      %p184 = por %p182, %p183
      %p186 = scmp.ne.s32.totalorder %s171, %s185
      %p187 = scmp.eq.s32.totalorder %s35, 0
      %p188 = por %p186, %p187
      %s190 = sadd.s32 %s189, 1
      %p193 = scmp.eq.s32.totalorder %s29, 1
      %p194 = scmp.ne.s32.totalorder %s189, %s191
      %p195 = scmp.eq.s32.totalorder %s29, 0
      %p196 = por %p194, %p195
      %p197 = scmp.ne.s32.totalorder %s189, %s191
      %p198 = scmp.eq.s32.totalorder %s34, 1
      %p199 = por %p197, %p198
      %p200 = scmp.ne.s32.totalorder %s191, %s192
      %p201 = scmp.eq.s32.totalorder %s34, 0
      %p202 = por %p200, %p201
      %p203 = scmp.ne.s32.totalorder %s191, %s192
      %p204 = scmp.eq.s32.totalorder %s35, 1
      %p205 = por %p203, %p204
      %p207 = scmp.ne.s32.totalorder %s192, %s206
      %p208 = scmp.eq.s32.totalorder %s35, 0
      %p209 = por %p207, %p208
      %s211 = sadd.s32 %s210, 1
      %p214 = scmp.eq.s32.totalorder %s29, 1
      %p215 = scmp.ne.s32.totalorder %s210, %s212
      %p216 = scmp.eq.s32.totalorder %s29, 0
      %p217 = por %p215, %p216
      %p218 = scmp.ne.s32.totalorder %s210, %s212
      %p219 = scmp.eq.s32.totalorder %s34, 1
      %p220 = por %p218, %p219
      %p221 = scmp.ne.s32.totalorder %s212, %s213
      %p222 = scmp.eq.s32.totalorder %s34, 0
      %p223 = por %p221, %p222
      %p224 = scmp.ne.s32.totalorder %s212, %s213
      %p225 = scmp.eq.s32.totalorder %s35, 1
      %p226 = por %p224, %p225
      %p228 = scmp.ne.s32.totalorder %s213, %s227
      %p229 = scmp.eq.s32.totalorder %s35, 0
      %p230 = por %p228, %p229
      %s232 = sadd.s32 %s231, 1
      %p235 = scmp.eq.s32.totalorder %s29, 1
      %p236 = scmp.ne.s32.totalorder %s231, %s233
      %p237 = scmp.eq.s32.totalorder %s29, 0
      %p238 = por %p236, %p237
      %p239 = scmp.ne.s32.totalorder %s231, %s233
      %p240 = scmp.eq.s32.totalorder %s34, 1
      %p241 = por %p239, %p240
      %p242 = scmp.ne.s32.totalorder %s233, %s234
      %p243 = scmp.eq.s32.totalorder %s34, 0
      %p244 = por %p242, %p243
      %p245 = scmp.ne.s32.totalorder %s233, %s234
      %p246 = scmp.eq.s32.totalorder %s35, 1
      %p247 = por %p245, %p246
      %p249 = scmp.ne.s32.totalorder %s234, %s248
      %p250 = scmp.eq.s32.totalorder %s35, 0
      %p251 = por %p249, %p250
      %s253 = sadd.s32 %s252, 1
      %p256 = scmp.eq.s32.totalorder %s29, 1
      %p257 = scmp.ne.s32.totalorder %s252, %s254
      %p258 = scmp.eq.s32.totalorder %s29, 0
      %p259 = por %p257, %p258
      %p260 = scmp.ne.s32.totalorder %s252, %s254
      %p261 = scmp.eq.s32.totalorder %s34, 1
      %p262 = por %p260, %p261
      %p263 = scmp.ne.s32.totalorder %s254, %s255
      %p264 = scmp.eq.s32.totalorder %s34, 0
      %p265 = por %p263, %p264
      %p266 = scmp.ne.s32.totalorder %s254, %s255
      %p267 = scmp.eq.s32.totalorder %s35, 1
      %p268 = por %p266, %p267
      %p270 = scmp.ne.s32.totalorder %s255, %s269
      %p271 = scmp.eq.s32.totalorder %s35, 0
      %p272 = por %p270, %p271
      %s274 = sadd.s32 %s273, 1
      %p277 = scmp.eq.s32.totalorder %s29, 1
      %p278 = scmp.ne.s32.totalorder %s273, %s275
      %p279 = scmp.eq.s32.totalorder %s29, 0
      %p280 = por %p278, %p279
      %p281 = scmp.ne.s32.totalorder %s273, %s275
      %p282 = scmp.eq.s32.totalorder %s34, 1
      %p283 = por %p281, %p282
      %p284 = scmp.ne.s32.totalorder %s275, %s276
      %p285 = scmp.eq.s32.totalorder %s34, 0
      %p286 = por %p284, %p285
      %p287 = scmp.ne.s32.totalorder %s275, %s276
      %p288 = scmp.eq.s32.totalorder %s35, 1
      %p289 = por %p287, %p288
      %p291 = scmp.ne.s32.totalorder %s276, %s290
      %p292 = scmp.eq.s32.totalorder %s35, 0
      %p293 = por %p291, %p292
      %s295 = sadd.s32 %s294, 1
      %p298 = scmp.eq.s32.totalorder %s29, 1
      %p299 = scmp.ne.s32.totalorder %s294, %s296
      %p300 = scmp.eq.s32.totalorder %s29, 0
      %p301 = por %p299, %p300
      %p302 = scmp.ne.s32.totalorder %s294, %s296
      %p303 = scmp.eq.s32.totalorder %s34, 1
      %p304 = por %p302, %p303
      %p305 = scmp.ne.s32.totalorder %s296, %s297
      %p306 = scmp.eq.s32.totalorder %s34, 0
      %p307 = por %p305, %p306
      %p308 = scmp.ne.s32.totalorder %s296, %s297
      %p309 = scmp.eq.s32.totalorder %s35, 1
      %p310 = por %p308, %p309
      %p312 = scmp.ne.s32.totalorder %s297, %s311
      %p313 = scmp.eq.s32.totalorder %s35, 0
      %p314 = por %p312, %p313
      %s316 = sadd.s32 %s315, 1
      %p319 = scmp.eq.s32.totalorder %s29, 1
      %p320 = scmp.ne.s32.totalorder %s315, %s317
      %p321 = scmp.eq.s32.totalorder %s29, 0
      %p322 = por %p320, %p321
      %p323 = scmp.ne.s32.totalorder %s315, %s317
      %p324 = scmp.eq.s32.totalorder %s34, 1
      %p325 = por %p323, %p324
      %p326 = scmp.ne.s32.totalorder %s317, %s318
      %p327 = scmp.eq.s32.totalorder %s34, 0
      %p328 = por %p326, %p327
      %p329 = scmp.ne.s32.totalorder %s317, %s318
      %p330 = scmp.eq.s32.totalorder %s35, 1
      %p331 = por %p329, %p330
      %p333 = scmp.ne.s32.totalorder %s318, %s332
      %p334 = scmp.eq.s32.totalorder %s35, 0
      %p335 = por %p333, %p334
      %s337 = sadd.s32 %s336, 1
      %p340 = scmp.eq.s32.totalorder %s29, 1
      %p341 = scmp.ne.s32.totalorder %s336, %s338
      %p342 = scmp.eq.s32.totalorder %s29, 0
      %p343 = por %p341, %p342
      %p344 = scmp.ne.s32.totalorder %s336, %s338
      %p345 = scmp.eq.s32.totalorder %s34, 1
      %p346 = por %p344, %p345
      %p347 = scmp.ne.s32.totalorder %s338, %s339
      %p348 = scmp.eq.s32.totalorder %s34, 0
      %p349 = por %p347, %p348
      %p350 = scmp.ne.s32.totalorder %s338, %s339
      %p351 = scmp.eq.s32.totalorder %s35, 1
      %p352 = por %p350, %p351
      %p354 = scmp.ne.s32.totalorder %s339, %s353
      %p355 = scmp.eq.s32.totalorder %s35, 0
      %p356 = por %p354, %p355
      %s358 = sadd.s32 %s357, 1
      %p361 = scmp.eq.s32.totalorder %s29, 1
      %p362 = scmp.ne.s32.totalorder %s357, %s359
      %p363 = scmp.eq.s32.totalorder %s29, 0
      %p364 = por %p362, %p363
      %p365 = scmp.ne.s32.totalorder %s357, %s359
      %p366 = scmp.eq.s32.totalorder %s34, 1
      %p367 = por %p365, %p366
      %p368 = scmp.ne.s32.totalorder %s359, %s360
      %p369 = scmp.eq.s32.totalorder %s34, 0
      %p370 = por %p368, %p369
      %p371 = scmp.ne.s32.totalorder %s359, %s360
      %p372 = scmp.eq.s32.totalorder %s35, 1
      %p373 = por %p371, %p372
      %p375 = scmp.ne.s32.totalorder %s360, %s374
      %p376 = scmp.eq.s32.totalorder %s35, 0
      %p377 = por %p375, %p376
      %s379 = sadd.s32 %s378, 1
      %p382 = scmp.eq.s32.totalorder %s29, 1
      %p383 = scmp.ne.s32.totalorder %s378, %s380
      %p384 = scmp.eq.s32.totalorder %s29, 0
      %p385 = por %p383, %p384
      %p386 = scmp.ne.s32.totalorder %s378, %s380
      %p387 = scmp.eq.s32.totalorder %s34, 1
      %p388 = por %p386, %p387
      %p389 = scmp.ne.s32.totalorder %s380, %s381
      %p390 = scmp.eq.s32.totalorder %s34, 0
      %p391 = por %p389, %p390
      %p392 = scmp.ne.s32.totalorder %s380, %s381
      %p393 = scmp.eq.s32.totalorder %s35, 1
      %p394 = por %p392, %p393
      %p396 = scmp.ne.s32.totalorder %s381, %s395
      %p397 = scmp.eq.s32.totalorder %s35, 0
      %p398 = por %p396, %p397
      %s400 = sadd.s32 %s399, 1
      %p403 = scmp.eq.s32.totalorder %s29, 1
      %p404 = scmp.ne.s32.totalorder %s399, %s401
      %p405 = scmp.eq.s32.totalorder %s29, 0
      %p406 = por %p404, %p405
      %p407 = scmp.ne.s32.totalorder %s399, %s401
      %p408 = scmp.eq.s32.totalorder %s34, 1
      %p409 = por %p407, %p408
      %p410 = scmp.ne.s32.totalorder %s401, %s402
      %p411 = scmp.eq.s32.totalorder %s34, 0
      %p412 = por %p410, %p411
      %p413 = scmp.ne.s32.totalorder %s401, %s402
      %p414 = scmp.eq.s32.totalorder %s35, 1
      %p415 = por %p413, %p414
      %p417 = scmp.ne.s32.totalorder %s402, %s416
      %p418 = scmp.eq.s32.totalorder %s35, 0
      %p419 = por %p417, %p418
      %s421 = sadd.s32 %s420, 1
      %p424 = scmp.eq.s32.totalorder %s29, 1
      %p425 = scmp.ne.s32.totalorder %s420, %s422
      %p426 = scmp.eq.s32.totalorder %s29, 0
      %p427 = por %p425, %p426
      %p428 = scmp.ne.s32.totalorder %s420, %s422
      %p429 = scmp.eq.s32.totalorder %s34, 1
      %p430 = por %p428, %p429
      %p431 = scmp.ne.s32.totalorder %s422, %s423
      %p432 = scmp.eq.s32.totalorder %s34, 0
      %p433 = por %p431, %p432
      %p434 = scmp.ne.s32.totalorder %s422, %s423
      %p435 = scmp.eq.s32.totalorder %s35, 1
      %p436 = por %p434, %p435
      %p438 = scmp.ne.s32.totalorder %s423, %s437
      %p439 = scmp.eq.s32.totalorder %s35, 0
      %p440 = por %p438, %p439
      %s442 = sadd.s32 %s441, 1
      %p445 = scmp.eq.s32.totalorder %s29, 1
      %p446 = scmp.ne.s32.totalorder %s441, %s443
      %p447 = scmp.eq.s32.totalorder %s29, 0
      %p448 = por %p446, %p447
      %p449 = scmp.ne.s32.totalorder %s441, %s443
      %p450 = scmp.eq.s32.totalorder %s34, 1
      %p451 = por %p449, %p450
      %p452 = scmp.ne.s32.totalorder %s443, %s444
      %p453 = scmp.eq.s32.totalorder %s34, 0
      %p454 = por %p452, %p453
      %p455 = scmp.ne.s32.totalorder %s443, %s444
      %p456 = scmp.eq.s32.totalorder %s35, 1
      %p457 = por %p455, %p456
      %p459 = scmp.ne.s32.totalorder %s444, %s458
      %p460 = scmp.eq.s32.totalorder %s35, 0
      %p461 = por %p459, %p460
      %s462 = ssub.s32 %s29, %s36
      %p463 = scmp.eq.s32.totalorder %s462, 0
      %s465 = sadd.s32 %s464, 1
      %s466 = scalar_select %p463, %s464, %s465
      %p469 = pneg %p463
      %p470 = scmp.eq.s32.totalorder %s29, 1
      %p471 = por %p469, %p470
      %p472 = scmp.ne.s32.totalorder %s464, %s467
      %p473 = scmp.eq.s32.totalorder %s29, 0
      %p474 = por %p472, %p473
      %p475 = scmp.ne.s32.totalorder %s464, %s467
      %p476 = scmp.eq.s32.totalorder %s34, 1
      %p477 = por %p475, %p476
      %p478 = scmp.ne.s32.totalorder %s467, %s468
      %p479 = scmp.eq.s32.totalorder %s34, 0
      %p480 = por %p478, %p479
      %p481 = scmp.ne.s32.totalorder %s467, %s468
      %p482 = scmp.eq.s32.totalorder %s35, 1
      %p483 = por %p481, %p482
      %p485 = scmp.ne.s32.totalorder %s468, %s484
      %p486 = scmp.eq.s32.totalorder %s35, 0
      %p487 = por %p485, %p486
      %p488 = scmp.le.s32.totalorder 1, %s29
      %p489 = scmp.lt.s32.totalorder %s29, 3
      %p490 = pnand %p488, %p489
      %p491 = pneg %p490
      // Predicated region
      $region9: #{nanoshakes_forward.1} parent=5 // pred_check
        _
      $region10: #{nanoshakes_forward.1} parent=5 // pred_check_branch
        %493 = sbr.rel (%p490) target = $region12
      $region11: #{nanoshakes_forward.1} parent=5 // pred_region
        %s494 = ssub.s32 %s29, 1
        // Predicated region
        $region13: #{nanoshakes_forward.1} parent=11 // pred_check
          %p495 = pneg %p76
        $region14: #{nanoshakes_forward.1} parent=11 // pred_check_branch
          %497 = sbr.rel (%p495) target = $region16
        $region15: #{nanoshakes_forward.1} parent=11 // pred_region
          _
        $region16: #{nanoshakes_forward.1} parent=11 // pred_fallthru
          _
        // Predicated region
        $region17: #{nanoshakes_forward.1} parent=11 // pred_check
          %p498 = pneg %p97
        $region18: #{nanoshakes_forward.1} parent=11 // pred_check_branch
          %500 = sbr.rel (%p498) target = $region20
        $region19: #{nanoshakes_forward.1} parent=11 // pred_region
          _
        $region20: #{nanoshakes_forward.1} parent=11 // pred_fallthru
          _
        // Predicated region
        $region21: #{nanoshakes_forward.1} parent=11 // pred_check
          %p501 = pneg %p118
        $region22: #{nanoshakes_forward.1} parent=11 // pred_check_branch
          %503 = sbr.rel (%p501) target = $region24
        $region23: #{nanoshakes_forward.1} parent=11 // pred_region
          _
        $region24: #{nanoshakes_forward.1} parent=11 // pred_fallthru
          _
        // Predicated region
        $region25: #{nanoshakes_forward.1} parent=11 // pred_check
          %p504 = pneg %p139
        $region26: #{nanoshakes_forward.1} parent=11 // pred_check_branch
          %506 = sbr.rel (%p504) target = $region28
        $region27: #{nanoshakes_forward.1} parent=11 // pred_region
          _
        $region28: #{nanoshakes_forward.1} parent=11 // pred_fallthru
          _
        // Predicated region
        $region29: #{nanoshakes_forward.1} parent=11 // pred_check
          %p507 = pneg %p160
        $region30: #{nanoshakes_forward.1} parent=11 // pred_check_branch
          %509 = sbr.rel (%p507) target = $region32
        $region31: #{nanoshakes_forward.1} parent=11 // pred_region
          _
        $region32: #{nanoshakes_forward.1} parent=11 // pred_fallthru
          _
        // Predicated region
        $region33: #{nanoshakes_forward.1} parent=11 // pred_check
          %p510 = pneg %p181
        $region34: #{nanoshakes_forward.1} parent=11 // pred_check_branch
          %512 = sbr.rel (%p510) target = $region36
        $region35: #{nanoshakes_forward.1} parent=11 // pred_region
          _
        $region36: #{nanoshakes_forward.1} parent=11 // pred_fallthru
          _
        // Predicated region
        $region37: #{nanoshakes_forward.1} parent=11 // pred_check
          %p513 = pneg %p202
        $region38: #{nanoshakes_forward.1} parent=11 // pred_check_branch
          %515 = sbr.rel (%p513) target = $region40
        $region39: #{nanoshakes_forward.1} parent=11 // pred_region
          _
        $region40: #{nanoshakes_forward.1} parent=11 // pred_fallthru
          _
        // Predicated region
        $region41: #{nanoshakes_forward.1} parent=11 // pred_check
          %p516 = pneg %p223
        $region42: #{nanoshakes_forward.1} parent=11 // pred_check_branch
          %518 = sbr.rel (%p516) target = $region44
        $region43: #{nanoshakes_forward.1} parent=11 // pred_region
          _
        $region44: #{nanoshakes_forward.1} parent=11 // pred_fallthru
          _
        // Predicated region
        $region45: #{nanoshakes_forward.1} parent=11 // pred_check
          %p519 = pneg %p244
        $region46: #{nanoshakes_forward.1} parent=11 // pred_check_branch
          %521 = sbr.rel (%p519) target = $region48
        $region47: #{nanoshakes_forward.1} parent=11 // pred_region
          _
        $region48: #{nanoshakes_forward.1} parent=11 // pred_fallthru
          _
        // Predicated region
        $region49: #{nanoshakes_forward.1} parent=11 // pred_check
          %p522 = pneg %p265
        $region50: #{nanoshakes_forward.1} parent=11 // pred_check_branch
          %524 = sbr.rel (%p522) target = $region52
        $region51: #{nanoshakes_forward.1} parent=11 // pred_region
          _
        $region52: #{nanoshakes_forward.1} parent=11 // pred_fallthru
          _
        // Predicated region
        $region53: #{nanoshakes_forward.1} parent=11 // pred_check
          %p525 = pneg %p286
        $region54: #{nanoshakes_forward.1} parent=11 // pred_check_branch
          %527 = sbr.rel (%p525) target = $region56
        $region55: #{nanoshakes_forward.1} parent=11 // pred_region
          _
        $region56: #{nanoshakes_forward.1} parent=11 // pred_fallthru
          _
        // Predicated region
        $region57: #{nanoshakes_forward.1} parent=11 // pred_check
          %p528 = pneg %p307
        $region58: #{nanoshakes_forward.1} parent=11 // pred_check_branch
          %530 = sbr.rel (%p528) target = $region60
        $region59: #{nanoshakes_forward.1} parent=11 // pred_region
          _
        $region60: #{nanoshakes_forward.1} parent=11 // pred_fallthru
          _
        // Predicated region
        $region61: #{nanoshakes_forward.1} parent=11 // pred_check
          %p531 = pneg %p328
        $region62: #{nanoshakes_forward.1} parent=11 // pred_check_branch
          %533 = sbr.rel (%p531) target = $region64
        $region63: #{nanoshakes_forward.1} parent=11 // pred_region
          _
        $region64: #{nanoshakes_forward.1} parent=11 // pred_fallthru
          _
        // Predicated region
        $region65: #{nanoshakes_forward.1} parent=11 // pred_check
          %p534 = pneg %p349
        $region66: #{nanoshakes_forward.1} parent=11 // pred_check_branch
          %536 = sbr.rel (%p534) target = $region68
        $region67: #{nanoshakes_forward.1} parent=11 // pred_region
          _
        $region68: #{nanoshakes_forward.1} parent=11 // pred_fallthru
          _
        // Predicated region
        $region69: #{nanoshakes_forward.1} parent=11 // pred_check
          %p537 = pneg %p370
        $region70: #{nanoshakes_forward.1} parent=11 // pred_check_branch
          %539 = sbr.rel (%p537) target = $region72
        $region71: #{nanoshakes_forward.1} parent=11 // pred_region
          _
        $region72: #{nanoshakes_forward.1} parent=11 // pred_fallthru
          _
        // Predicated region
        $region73: #{nanoshakes_forward.1} parent=11 // pred_check
          %p540 = pneg %p391
        $region74: #{nanoshakes_forward.1} parent=11 // pred_check_branch
          %542 = sbr.rel (%p540) target = $region76
        $region75: #{nanoshakes_forward.1} parent=11 // pred_region
          _
        $region76: #{nanoshakes_forward.1} parent=11 // pred_fallthru
          _
        // Predicated region
        $region77: #{nanoshakes_forward.1} parent=11 // pred_check
          %p543 = pneg %p412
        $region78: #{nanoshakes_forward.1} parent=11 // pred_check_branch
          %545 = sbr.rel (%p543) target = $region80
        $region79: #{nanoshakes_forward.1} parent=11 // pred_region
          _
        $region80: #{nanoshakes_forward.1} parent=11 // pred_fallthru
          _
        // Predicated region
        $region81: #{nanoshakes_forward.1} parent=11 // pred_check
          %p546 = pneg %p433
        $region82: #{nanoshakes_forward.1} parent=11 // pred_check_branch
          %548 = sbr.rel (%p546) target = $region84
        $region83: #{nanoshakes_forward.1} parent=11 // pred_region
          _
        $region84: #{nanoshakes_forward.1} parent=11 // pred_fallthru
          _
        // Predicated region
        $region85: #{nanoshakes_forward.1} parent=11 // pred_check
          %p549 = pneg %p454
        $region86: #{nanoshakes_forward.1} parent=11 // pred_check_branch
          %551 = sbr.rel (%p549) target = $region88
        $region87: #{nanoshakes_forward.1} parent=11 // pred_region
          _
        $region88: #{nanoshakes_forward.1} parent=11 // pred_fallthru
          _
      $region12: #{nanoshakes_forward.1} parent=5 // pred_fallthru
        _
      %p552 = scmp.lt.s32.totalorder %s29, 2
      // Predicated region
      $region89: #{nanoshakes_forward.1} parent=5 // pred_check
        %p553 = pneg %p552
      $region90: #{nanoshakes_forward.1} parent=5 // pred_check_branch
        %555 = sbr.rel (%p553) target = $region92
      $region91: #{nanoshakes_forward.1} parent=5 // pred_region
        // Predicated region
        $region93: #{nanoshakes_forward.1} parent=91 // pred_check
          %p556 = pneg %p49
        $region94: #{nanoshakes_forward.1} parent=91 // pred_check_branch
          %558 = sbr.rel (%p556) target = $region96
        $region95: #{nanoshakes_forward.1} parent=91 // pred_region
          %p559 = scmp.lt.s32.totalorder %s29, 1
          %s560 = scalar_select %p559, %s29, 1
          %s561 = smul.addr %s560, 8
          %s562 = scalar_lea.vmem %s0, %s561
        $region96: #{nanoshakes_forward.1} parent=91 // pred_fallthru
          _
      $region92: #{nanoshakes_forward.1} parent=5 // pred_fallthru
        _
      %p563 = scmp.le.s32.totalorder 1, %s29
      %p564 = scmp.lt.s32.totalorder %s29, 3
      %p565 = pnand %p563, %p564
      %p566 = pneg %p565
      // Predicated region
      $region97: #{nanoshakes_forward.1} parent=5 // pred_check
        _
      $region98: #{nanoshakes_forward.1} parent=5 // pred_check_branch
        %568 = sbr.rel (%p565) target = $region100
      $region99: #{nanoshakes_forward.1} parent=5 // pred_region
        %s569 = ssub.s32 %s29, 1
        %p570 = scmp.lt.s32.totalorder %s34, 1
        %s571 = scalar_select %p570, %s34, 1
        %s572 = smul.addr %s571, 8
        %s573 = scalar_lea.vmem %s0, %s572
        %p574 = pneg %p55
        %p575 = pneg %p52
        %p576 = pneg %p76
        %p577 = pneg %p73
        %p578 = pneg %p97
        %p579 = pneg %p94
        %p580 = pneg %p118
        %p581 = pneg %p115
        %p582 = pneg %p139
        %p583 = pneg %p136
        %p584 = pneg %p160
        %p585 = pneg %p157
        %p586 = pneg %p181
        %p587 = pneg %p178
        %p588 = pneg %p202
        %p589 = pneg %p199
        %p590 = pneg %p223
        %p591 = pneg %p220
        %p592 = pneg %p244
        %p593 = pneg %p241
        %p594 = pneg %p265
        %p595 = pneg %p262
        %p596 = pneg %p286
        %p597 = pneg %p283
        %p598 = pneg %p307
        %p599 = pneg %p304
        %p600 = pneg %p328
        %p601 = pneg %p325
        %p602 = pneg %p349
        %p603 = pneg %p346
        %p604 = pneg %p370
        %p605 = pneg %p367
        %p606 = pneg %p391
        %p607 = pneg %p388
        %p608 = pneg %p412
        %p609 = pneg %p409
        %p610 = pneg %p433
        %p611 = pneg %p430
        %p612 = pneg %p454
        %p613 = pneg %p451
        %p614 = pneg %p480
        %p615 = pneg %p477
        %s616 = sand.u32 %s467, 1
        %s617 = scalar_lea.sflag [#allocation3], %s616
        %s618 = sand.u32 %s467, 1
        %s619 = smul.addr %s618, 8
        %s620 = scalar_lea.vmem [#allocation2], %s619
        %p621 = scmp.lt.s32.totalorder %s34, 1
        %s622 = scalar_select %p621, %s34, 1
        %s623 = smul.addr %s622, 8
        %s624 = scalar_lea.vmem %s0, %s623
        %v625 = vld [vmem:[%s624] sm:$0xff]
        %v626 = vlaneseq
        %v627 = vand.u32 %v626, 127
        %628 = vset.pattern.permute.xlu0 0
        %629 = vperm.xlu0 %628, %v625
        %v630 = vpop.permute.xlu0 %629
        %vm631 = vcmp.eq.s32.totalorder %v627, %v630
        %v632 = vsel %vm631, 1, 0
        %v633 = vcvt.s32.f32 %v632
        %v634 = vld [vmem:[%s1] sm:$0xff]
        %v635 = vld [vmem:[%s1 + $0x8] sm:$0xff]
        %v636 = vld [vmem:[%s1 + $0x10] sm:$0xff]
        %v637 = vld [vmem:[%s1 + $0x18] sm:$0xff]
        %v638 = vld [vmem:[%s1 + $0x20] sm:$0xff]
        %v639 = vld [vmem:[%s1 + $0x28] sm:$0xff]
        %v640 = vld [vmem:[%s1 + $0x30] sm:$0xff]
        %v641 = vld [vmem:[%s1 + $0x38] sm:$0xff]
        %v642 = vld [vmem:[%s2] sm:$0xff]
        %vm643 = vcmask 523264
        %v645 = vsel %vm643, %v633, 0
        %647 = vmatprep.subr.mxu0 0.0
        %648 = vmatpush1.msra.mxu0 %v634
        %649 = vmatprep.subr.mxu0 0.0
        %650 = vmatpush1.msra.mxu0 %v635
        %651 = vmatprep.subr.mxu0 0.0
        %652 = vmatpush1.msra.mxu0 %v636
        %653 = vmatprep.subr.mxu0 0.0
        %654 = vmatpush1.msra.mxu0 %v637
        %655 = vmatprep.subr.mxu0 0.0
        %656 = vmatpush1.msra.mxu0 %v638
        %657 = vmatprep.subr.mxu0 0.0
        %658 = vmatpush1.msra.mxu0 %v639
        %659 = vmatprep.subr.mxu0 0.0
        %660 = vmatpush1.msra.mxu0 %v640
        %661 = vmatprep.subr.mxu0 0.0
        %662 = vmatpush1.msra.mxu0 %v641
        %663 = vmatprep.subr.mxu0 0.0
        %664 = vmatpush1.msra.mxu0 0.0
        %665 = vmatprep.subr.mxu0 0.0
        %666 = vmatpush1.msra.mxu0 0.0
        %667 = vmatprep.subr.mxu0 0.0
        %668 = vmatpush1.msra.mxu0 0.0
        %669 = vmatprep.subr.mxu0 0.0
        %670 = vmatpush1.msra.mxu0 0.0
        %671 = vmatprep.subr.mxu0 0.0
        %672 = vmatpush1.msra.mxu0 0.0
        %673 = vmatprep.subr.mxu0 0.0
        %674 = vmatpush1.msra.mxu0 0.0
        %675 = vmatprep.subr.mxu0 0.0
        %676 = vmatpush1.msra.mxu0 0.0
        %677 = vmatprep.subr.mxu0 0.0
        %678 = vmatpush1.msra.mxu0 0.0
        %679 = vmatprep.subr.mxu0 0.0
        %680 = vmatpush1.msra.mxu0 0.0
        %681 = vmatprep.subr.mxu0 0.0
        %682 = vmatpush1.msra.mxu0 0.0
        %683 = vmatprep.subr.mxu0 0.0
        %684 = vmatpush1.msra.mxu0 0.0
        %685 = vmatprep.subr.mxu0 0.0
        %686 = vmatpush1.msra.mxu0 0.0
        %687 = vmatprep.subr.mxu0 0.0
        %688 = vmatpush1.msra.mxu0 0.0
        %689 = vmatprep.subr.mxu0 0.0
        %690 = vmatpush1.msra.mxu0 0.0
        %691 = vmatprep.subr.mxu0 0.0
        %692 = vmatpush1.msra.mxu0 0.0
        %693 = vmatprep.subr.mxu0 0.0
        %694 = vmatpush1.msra.mxu0 0.0
        %695 = vmatprep.subr.mxu0 0.0
        %696 = vmatpush1.msra.mxu0 0.0
        %697 = vmatprep.subr.mxu0 0.0
        %698 = vmatpush1.msra.mxu0 0.0
        %699 = vmatprep.subr.mxu0 0.0
        %700 = vmatpush1.msra.mxu0 0.0
        %701 = vmatprep.subr.mxu0 0.0
        %702 = vmatpush1.msra.mxu0 0.0
        %703 = vmatprep.subr.mxu0 0.0
        %704 = vmatpush1.msra.mxu0 0.0
        %705 = vmatprep.subr.mxu0 0.0
        %706 = vmatpush1.msra.mxu0 0.0
        %707 = vmatprep.subr.mxu0 0.0
        %708 = vmatpush1.msra.mxu0 0.0
        %709 = vmatprep.subr.mxu0 0.0
        %710 = vmatpush1.msra.mxu0 0.0
        %711 = vmatprep.mubr.f32.mxu0 0.0
        %712 = vmatmul.mubr.f32.gmra.mrb[0].mxu0 %v645
        %v713 = vpop.f32.mrb[0].mxu0
        %v714 = vadd.f32 %v642, %v713
        %v715 = vpop.f32.mrb[0].mxu0
        %716 = vdwg.mxu0
        %v717 = vlaneseq
        %v718 = vshrl.u32 %v717, 7
        %vm719 = vcmp.ge.s32.totalorder %v718, %v627
        %v720 = vld [vmem:[%s3] sm:$0x1]
        %v721 = vld [vmem:[%s4] sm:$0x1]
        %vm722 = vcmask 261120
        %v723 = vsel %vm722, %v714, 0.0
        %724 = vadd.xlane.f32.xlu0 %v723
        %v725 = vpop.xlane.xlu0 %724
        %v726 = vrcp.pop 32.0
        %v727 = vmul.f32 %v725, %v726
        %v728 = vsub.f32 %v714, %v727
        %v729 = vmul.f32 %v728, %v728
        %v730 = vsel %vm722, %v729, 0.0
        %731 = vadd.xlane.f32.xlu0 %v730
        %v732 = vpop.xlane.xlu0 %731
        %v733 = vmul.f32 %v732, %v726
        %v734 = vadd.f32 %v733, 1e-05
        %v735 = vrsqrt.pop %v734
        %v736 = vmul.f32 %v728, %v735
        %v738 = vlaneseq
        %v739 = vshrl.u32 %v738, 7
        %v740 = vsub.s32 0, %v739
        %v741 = vrot.slane %v720, %v740
        %v743 = vmul.f32 %v736, %v741
        %v745 = vlaneseq
        %v746 = vshrl.u32 %v745, 7
        %v747 = vsub.s32 0, %v746
        %v748 = vrot.slane %v721, %v747
        %v750 = vadd.f32 %v743, %v748
        %v751 = vld [vmem:[%s5] sm:$0xff]
        %v752 = vld [vmem:[%s5 + $0x8] sm:$0xff]
        %v753 = vld [vmem:[%s5 + $0x10] sm:$0xff]
        %v754 = vld [vmem:[%s5 + $0x18] sm:$0xff]
        %v755 = vld [vmem:[%s5 + $0x20] sm:$0xff]
        %v756 = vld [vmem:[%s5 + $0x28] sm:$0xff]
        %v757 = vld [vmem:[%s5 + $0x30] sm:$0xff]
        %v758 = vld [vmem:[%s5 + $0x38] sm:$0xff]
        %v759 = vld [vmem:[%s5 + $0x40] sm:$0xff]
        %v760 = vld [vmem:[%s5 + $0x48] sm:$0xff]
        %v761 = vld [vmem:[%s5 + $0x50] sm:$0xff]
        %v762 = vld [vmem:[%s5 + $0x58] sm:$0xff]
        %v763 = vld [vmem:[%s5 + $0x60] sm:$0xff]
        %v764 = vld [vmem:[%s5 + $0x68] sm:$0xff]
        %v765 = vld [vmem:[%s5 + $0x70] sm:$0xff]
        %v766 = vld [vmem:[%s5 + $0x78] sm:$0xff]
        %v768 = vsel %vm722, %v750, 0
        %770 = vmatprep.subr.mxu0 0.0
        %771 = vmatpush1.msra.mxu0 %v751
        %772 = vmatprep.subr.mxu0 0.0
        %773 = vmatpush1.msra.mxu0 %v752
        %774 = vmatprep.subr.mxu0 0.0
        %775 = vmatpush1.msra.mxu0 %v753
        %776 = vmatprep.subr.mxu0 0.0
        %777 = vmatpush1.msra.mxu0 %v754
        %778 = vmatprep.subr.mxu0 0.0
        %779 = vmatpush1.msra.mxu0 0.0
        %780 = vmatprep.subr.mxu0 0.0
        %781 = vmatpush1.msra.mxu0 0.0
        %782 = vmatprep.subr.mxu0 0.0
        %783 = vmatpush1.msra.mxu0 0.0
        %784 = vmatprep.subr.mxu0 0.0
        %785 = vmatpush1.msra.mxu0 0.0
        %786 = vmatprep.subr.mxu0 0.0
        %787 = vmatpush1.msra.mxu0 0.0
        %788 = vmatprep.subr.mxu0 0.0
        %789 = vmatpush1.msra.mxu0 0.0
        %790 = vmatprep.subr.mxu0 0.0
        %791 = vmatpush1.msra.mxu0 0.0
        %792 = vmatprep.subr.mxu0 0.0
        %793 = vmatpush1.msra.mxu0 0.0
        %794 = vmatprep.subr.mxu0 0.0
        %795 = vmatpush1.msra.mxu0 0.0
        %796 = vmatprep.subr.mxu0 0.0
        %797 = vmatpush1.msra.mxu0 0.0
        %798 = vmatprep.subr.mxu0 0.0
        %799 = vmatpush1.msra.mxu0 0.0
        %800 = vmatprep.subr.mxu0 0.0
        %801 = vmatpush1.msra.mxu0 0.0
        %802 = vmatprep.subr.mxu0 0.0
        %803 = vmatpush1.msra.mxu0 0.0
        %804 = vmatprep.subr.mxu0 0.0
        %805 = vmatpush1.msra.mxu0 0.0
        %806 = vmatprep.subr.mxu0 0.0
        %807 = vmatpush1.msra.mxu0 0.0
        %808 = vmatprep.subr.mxu0 0.0
        %809 = vmatpush1.msra.mxu0 0.0
        %810 = vmatprep.subr.mxu0 0.0
        %811 = vmatpush1.msra.mxu0 0.0
        %812 = vmatprep.subr.mxu0 0.0
        %813 = vmatpush1.msra.mxu0 0.0
        %814 = vmatprep.subr.mxu0 0.0
        %815 = vmatpush1.msra.mxu0 0.0
        %816 = vmatprep.subr.mxu0 0.0
        %817 = vmatpush1.msra.mxu0 0.0
        %818 = vmatprep.subr.mxu0 0.0
        %819 = vmatpush1.msra.mxu0 0.0
        %820 = vmatprep.subr.mxu0 0.0
        %821 = vmatpush1.msra.mxu0 0.0
        %822 = vmatprep.subr.mxu0 0.0
        %823 = vmatpush1.msra.mxu0 0.0
        %824 = vmatprep.subr.mxu0 0.0
        %825 = vmatpush1.msra.mxu0 0.0
        %826 = vmatprep.subr.mxu0 0.0
        %827 = vmatpush1.msra.mxu0 0.0
        %828 = vmatprep.subr.mxu0 0.0
        %829 = vmatpush1.msra.mxu0 0.0
        %830 = vmatprep.subr.mxu0 0.0
        %831 = vmatpush1.msra.mxu0 0.0
        %832 = vmatprep.subr.mxu0 0.0
        %833 = vmatpush1.msra.mxu0 0.0
        %834 = vmatprep.mubr.f32.mxu0 0.0
        %835 = vmatmul.mubr.f32.gmra.mrb[0].mxu0 %v768
        %v836 = vpop.f32.mrb[0].mxu0
        %v837 = vadd.f32 0.0, %v836
        %v838 = vpop.f32.mrb[0].mxu0
        %839 = vdwg.mxu0
        %840 = vmatprep.subr.mxu0 0.0
        %841 = vmatpush1.msra.mxu0 %v755
        %842 = vmatprep.subr.mxu0 0.0
        %843 = vmatpush1.msra.mxu0 %v756
        %844 = vmatprep.subr.mxu0 0.0
        %845 = vmatpush1.msra.mxu0 %v757
        %846 = vmatprep.subr.mxu0 0.0
        %847 = vmatpush1.msra.mxu0 %v758
        %848 = vmatprep.subr.mxu0 0.0
        %849 = vmatpush1.msra.mxu0 0.0
        %850 = vmatprep.subr.mxu0 0.0
        %851 = vmatpush1.msra.mxu0 0.0
        %852 = vmatprep.subr.mxu0 0.0
        %853 = vmatpush1.msra.mxu0 0.0
        %854 = vmatprep.subr.mxu0 0.0
        %855 = vmatpush1.msra.mxu0 0.0
        %856 = vmatprep.subr.mxu0 0.0
        %857 = vmatpush1.msra.mxu0 0.0
        %858 = vmatprep.subr.mxu0 0.0
        %859 = vmatpush1.msra.mxu0 0.0
        %860 = vmatprep.subr.mxu0 0.0
        %861 = vmatpush1.msra.mxu0 0.0
        %862 = vmatprep.subr.mxu0 0.0
        %863 = vmatpush1.msra.mxu0 0.0
        %864 = vmatprep.subr.mxu0 0.0
        %865 = vmatpush1.msra.mxu0 0.0
        %866 = vmatprep.subr.mxu0 0.0
        %867 = vmatpush1.msra.mxu0 0.0
        %868 = vmatprep.subr.mxu0 0.0
        %869 = vmatpush1.msra.mxu0 0.0
        %870 = vmatprep.subr.mxu0 0.0
        %871 = vmatpush1.msra.mxu0 0.0
        %872 = vmatprep.subr.mxu0 0.0
        %873 = vmatpush1.msra.mxu0 0.0
        %874 = vmatprep.subr.mxu0 0.0
        %875 = vmatpush1.msra.mxu0 0.0
        %876 = vmatprep.subr.mxu0 0.0
        %877 = vmatpush1.msra.mxu0 0.0
        %878 = vmatprep.subr.mxu0 0.0
        %879 = vmatpush1.msra.mxu0 0.0
        %880 = vmatprep.subr.mxu0 0.0
        %881 = vmatpush1.msra.mxu0 0.0
        %882 = vmatprep.subr.mxu0 0.0
        %883 = vmatpush1.msra.mxu0 0.0
        %884 = vmatprep.subr.mxu0 0.0
        %885 = vmatpush1.msra.mxu0 0.0
        %886 = vmatprep.subr.mxu0 0.0
        %887 = vmatpush1.msra.mxu0 0.0
        %888 = vmatprep.subr.mxu0 0.0
        %889 = vmatpush1.msra.mxu0 0.0
        %890 = vmatprep.subr.mxu0 0.0
        %891 = vmatpush1.msra.mxu0 0.0
        %892 = vmatprep.subr.mxu0 0.0
        %893 = vmatpush1.msra.mxu0 0.0
        %894 = vmatprep.subr.mxu0 0.0
        %895 = vmatpush1.msra.mxu0 0.0
        %896 = vmatprep.subr.mxu0 0.0
        %897 = vmatpush1.msra.mxu0 0.0
        %898 = vmatprep.subr.mxu0 0.0
        %899 = vmatpush1.msra.mxu0 0.0
        %900 = vmatprep.subr.mxu0 0.0
        %901 = vmatpush1.msra.mxu0 0.0
        %902 = vmatprep.subr.mxu0 0.0
        %903 = vmatpush1.msra.mxu0 0.0
        %904 = vmatprep.mubr.f32.mxu0 0.0
        %905 = vmatmul.mubr.f32.gmra.mrb[0].mxu0 %v768
        %v906 = vpop.f32.mrb[0].mxu0
        %v907 = vadd.f32 0.0, %v906
        %v908 = vpop.f32.mrb[0].mxu0
        %909 = vdwg.mxu0
        %910 = vmatprep.subr.mxu0 0.0
        %911 = vmatpush1.msra.mxu0 %v759
        %912 = vmatprep.subr.mxu0 0.0
        %913 = vmatpush1.msra.mxu0 %v760
        %914 = vmatprep.subr.mxu0 0.0
        %915 = vmatpush1.msra.mxu0 %v761
        %916 = vmatprep.subr.mxu0 0.0
        %917 = vmatpush1.msra.mxu0 %v762
        %918 = vmatprep.subr.mxu0 0.0
        %919 = vmatpush1.msra.mxu0 0.0
        %920 = vmatprep.subr.mxu0 0.0
        %921 = vmatpush1.msra.mxu0 0.0
        %922 = vmatprep.subr.mxu0 0.0
        %923 = vmatpush1.msra.mxu0 0.0
        %924 = vmatprep.subr.mxu0 0.0
        %925 = vmatpush1.msra.mxu0 0.0
        %926 = vmatprep.subr.mxu0 0.0
        %927 = vmatpush1.msra.mxu0 0.0
        %928 = vmatprep.subr.mxu0 0.0
        %929 = vmatpush1.msra.mxu0 0.0
        %930 = vmatprep.subr.mxu0 0.0
        %931 = vmatpush1.msra.mxu0 0.0
        %932 = vmatprep.subr.mxu0 0.0
        %933 = vmatpush1.msra.mxu0 0.0
        %934 = vmatprep.subr.mxu0 0.0
        %935 = vmatpush1.msra.mxu0 0.0
        %936 = vmatprep.subr.mxu0 0.0
        %937 = vmatpush1.msra.mxu0 0.0
        %938 = vmatprep.subr.mxu0 0.0
        %939 = vmatpush1.msra.mxu0 0.0
        %940 = vmatprep.subr.mxu0 0.0
        %941 = vmatpush1.msra.mxu0 0.0
        %942 = vmatprep.subr.mxu0 0.0
        %943 = vmatpush1.msra.mxu0 0.0
        %944 = vmatprep.subr.mxu0 0.0
        %945 = vmatpush1.msra.mxu0 0.0
        %946 = vmatprep.subr.mxu0 0.0
        %947 = vmatpush1.msra.mxu0 0.0
        %948 = vmatprep.subr.mxu0 0.0
        %949 = vmatpush1.msra.mxu0 0.0
        %950 = vmatprep.subr.mxu0 0.0
        %951 = vmatpush1.msra.mxu0 0.0
        %952 = vmatprep.subr.mxu0 0.0
        %953 = vmatpush1.msra.mxu0 0.0
        %954 = vmatprep.subr.mxu0 0.0
        %955 = vmatpush1.msra.mxu0 0.0
        %956 = vmatprep.subr.mxu0 0.0
        %957 = vmatpush1.msra.mxu0 0.0
        %958 = vmatprep.subr.mxu0 0.0
        %959 = vmatpush1.msra.mxu0 0.0
        %960 = vmatprep.subr.mxu0 0.0
        %961 = vmatpush1.msra.mxu0 0.0
        %962 = vmatprep.subr.mxu0 0.0
        %963 = vmatpush1.msra.mxu0 0.0
        %964 = vmatprep.subr.mxu0 0.0
        %965 = vmatpush1.msra.mxu0 0.0
        %966 = vmatprep.subr.mxu0 0.0
        %967 = vmatpush1.msra.mxu0 0.0
        %968 = vmatprep.subr.mxu0 0.0
        %969 = vmatpush1.msra.mxu0 0.0
        %970 = vmatprep.subr.mxu0 0.0
        %971 = vmatpush1.msra.mxu0 0.0
        %972 = vmatprep.subr.mxu0 0.0
        %973 = vmatpush1.msra.mxu0 0.0
        %974 = vmatprep.mubr.f32.mxu0 0.0
        %975 = vmatmul.mubr.f32.gmra.mrb[0].mxu0 %v768
        %v976 = vpop.f32.mrb[0].mxu0
        %v977 = vadd.f32 0.0, %v976
        %v978 = vpop.f32.mrb[0].mxu0
        %979 = vdwg.mxu0
        %980 = vmatprep.subr.mxu0 0.0
        %981 = vmatpush1.msra.mxu0 %v763
        %982 = vmatprep.subr.mxu0 0.0
        %983 = vmatpush1.msra.mxu0 %v764
        %984 = vmatprep.subr.mxu0 0.0
        %985 = vmatpush1.msra.mxu0 %v765
        %986 = vmatprep.subr.mxu0 0.0
        %987 = vmatpush1.msra.mxu0 %v766
        %988 = vmatprep.subr.mxu0 0.0
        %989 = vmatpush1.msra.mxu0 0.0
        %990 = vmatprep.subr.mxu0 0.0
        %991 = vmatpush1.msra.mxu0 0.0
        %992 = vmatprep.subr.mxu0 0.0
        %993 = vmatpush1.msra.mxu0 0.0
        %994 = vmatprep.subr.mxu0 0.0
        %995 = vmatpush1.msra.mxu0 0.0
        %996 = vmatprep.subr.mxu0 0.0
        %997 = vmatpush1.msra.mxu0 0.0
        %998 = vmatprep.subr.mxu0 0.0
        %999 = vmatpush1.msra.mxu0 0.0
        %1000 = vmatprep.subr.mxu0 0.0
        %1001 = vmatpush1.msra.mxu0 0.0
        %1002 = vmatprep.subr.mxu0 0.0
        %1003 = vmatpush1.msra.mxu0 0.0
        %1004 = vmatprep.subr.mxu0 0.0
        %1005 = vmatpush1.msra.mxu0 0.0
        %1006 = vmatprep.subr.mxu0 0.0
        %1007 = vmatpush1.msra.mxu0 0.0
        %1008 = vmatprep.subr.mxu0 0.0
        %1009 = vmatpush1.msra.mxu0 0.0
        %1010 = vmatprep.subr.mxu0 0.0
        %1011 = vmatpush1.msra.mxu0 0.0
        %1012 = vmatprep.subr.mxu0 0.0
        %1013 = vmatpush1.msra.mxu0 0.0
        %1014 = vmatprep.subr.mxu0 0.0
        %1015 = vmatpush1.msra.mxu0 0.0
        %1016 = vmatprep.subr.mxu0 0.0
        %1017 = vmatpush1.msra.mxu0 0.0
        %1018 = vmatprep.subr.mxu0 0.0
        %1019 = vmatpush1.msra.mxu0 0.0
        %1020 = vmatprep.subr.mxu0 0.0
        %1021 = vmatpush1.msra.mxu0 0.0
        %1022 = vmatprep.subr.mxu0 0.0
        %1023 = vmatpush1.msra.mxu0 0.0
        %1024 = vmatprep.subr.mxu0 0.0
        %1025 = vmatpush1.msra.mxu0 0.0
        %1026 = vmatprep.subr.mxu0 0.0
        %1027 = vmatpush1.msra.mxu0 0.0
        %1028 = vmatprep.subr.mxu0 0.0
        %1029 = vmatpush1.msra.mxu0 0.0
        %1030 = vmatprep.subr.mxu0 0.0
        %1031 = vmatpush1.msra.mxu0 0.0
        %1032 = vmatprep.subr.mxu0 0.0
        %1033 = vmatpush1.msra.mxu0 0.0
        %1034 = vmatprep.subr.mxu0 0.0
        %1035 = vmatpush1.msra.mxu0 0.0
        %1036 = vmatprep.subr.mxu0 0.0
        %1037 = vmatpush1.msra.mxu0 0.0
        %1038 = vmatprep.subr.mxu0 0.0
        %1039 = vmatpush1.msra.mxu0 0.0
        %1040 = vmatprep.subr.mxu0 0.0
        %1041 = vmatpush1.msra.mxu0 0.0
        %1042 = vmatprep.subr.mxu0 0.0
        %1043 = vmatpush1.msra.mxu0 0.0
        %1044 = vmatprep.mubr.f32.mxu0 0.0
        %1045 = vmatmul.mubr.f32.gmra.mrb[0].mxu0 %v768
        %v1046 = vpop.f32.mrb[0].mxu0
        %v1047 = vadd.f32 0.0, %v1046
        %v1048 = vpop.f32.mrb[0].mxu0
        %1049 = vdwg.mxu0
        %v1050 = vld [vmem:[%s6] sm:$0xff]
        %v1051 = vld [vmem:[%s6 + $0x8] sm:$0xff]
        %v1052 = vld [vmem:[%s6 + $0x10] sm:$0xff]
        %v1053 = vld [vmem:[%s6 + $0x18] sm:$0xff]
        %v1054 = vld [vmem:[%s6 + $0x20] sm:$0xff]
        %v1055 = vld [vmem:[%s6 + $0x28] sm:$0xff]
        %v1056 = vld [vmem:[%s6 + $0x30] sm:$0xff]
        %v1057 = vld [vmem:[%s6 + $0x38] sm:$0xff]
        %v1058 = vld [vmem:[%s6 + $0x40] sm:$0xff]
        %v1059 = vld [vmem:[%s6 + $0x48] sm:$0xff]
        %v1060 = vld [vmem:[%s6 + $0x50] sm:$0xff]
        %v1061 = vld [vmem:[%s6 + $0x58] sm:$0xff]
        %v1062 = vld [vmem:[%s6 + $0x60] sm:$0xff]
        %v1063 = vld [vmem:[%s6 + $0x68] sm:$0xff]
        %v1064 = vld [vmem:[%s6 + $0x70] sm:$0xff]
        %v1065 = vld [vmem:[%s6 + $0x78] sm:$0xff]
        %1066 = vmatprep.subr.mxu0 0.0
        %1067 = vmatpush1.msra.mxu0 %v1050
        %1068 = vmatprep.subr.mxu0 0.0
        %1069 = vmatpush1.msra.mxu0 %v1051
        %1070 = vmatprep.subr.mxu0 0.0
        %1071 = vmatpush1.msra.mxu0 %v1052
        %1072 = vmatprep.subr.mxu0 0.0
        %1073 = vmatpush1.msra.mxu0 %v1053
        %1074 = vmatprep.subr.mxu0 0.0
        %1075 = vmatpush1.msra.mxu0 0.0
        %1076 = vmatprep.subr.mxu0 0.0
        %1077 = vmatpush1.msra.mxu0 0.0
        %1078 = vmatprep.subr.mxu0 0.0
        %1079 = vmatpush1.msra.mxu0 0.0
        %1080 = vmatprep.subr.mxu0 0.0
        %1081 = vmatpush1.msra.mxu0 0.0
        %1082 = vmatprep.subr.mxu0 0.0
        %1083 = vmatpush1.msra.mxu0 0.0
        %1084 = vmatprep.subr.mxu0 0.0
        %1085 = vmatpush1.msra.mxu0 0.0
        %1086 = vmatprep.subr.mxu0 0.0
        %1087 = vmatpush1.msra.mxu0 0.0
        %1088 = vmatprep.subr.mxu0 0.0
        %1089 = vmatpush1.msra.mxu0 0.0
        %1090 = vmatprep.subr.mxu0 0.0
        %1091 = vmatpush1.msra.mxu0 0.0
        %1092 = vmatprep.subr.mxu0 0.0
        %1093 = vmatpush1.msra.mxu0 0.0
        %1094 = vmatprep.subr.mxu0 0.0
        %1095 = vmatpush1.msra.mxu0 0.0
        %1096 = vmatprep.subr.mxu0 0.0
        %1097 = vmatpush1.msra.mxu0 0.0
        %1098 = vmatprep.subr.mxu0 0.0
        %1099 = vmatpush1.msra.mxu0 0.0
        %1100 = vmatprep.subr.mxu0 0.0
        %1101 = vmatpush1.msra.mxu0 0.0
        %1102 = vmatprep.subr.mxu0 0.0
        %1103 = vmatpush1.msra.mxu0 0.0
        %1104 = vmatprep.subr.mxu0 0.0
        %1105 = vmatpush1.msra.mxu0 0.0
        %1106 = vmatprep.subr.mxu0 0.0
        %1107 = vmatpush1.msra.mxu0 0.0
        %1108 = vmatprep.subr.mxu0 0.0
        %1109 = vmatpush1.msra.mxu0 0.0
        %1110 = vmatprep.subr.mxu0 0.0
        %1111 = vmatpush1.msra.mxu0 0.0
        %1112 = vmatprep.subr.mxu0 0.0
        %1113 = vmatpush1.msra.mxu0 0.0
        %1114 = vmatprep.subr.mxu0 0.0
        %1115 = vmatpush1.msra.mxu0 0.0
        %1116 = vmatprep.subr.mxu0 0.0
        %1117 = vmatpush1.msra.mxu0 0.0
        %1118 = vmatprep.subr.mxu0 0.0
        %1119 = vmatpush1.msra.mxu0 0.0
        %1120 = vmatprep.subr.mxu0 0.0
        %1121 = vmatpush1.msra.mxu0 0.0
        %1122 = vmatprep.subr.mxu0 0.0
        %1123 = vmatpush1.msra.mxu0 0.0
        %1124 = vmatprep.subr.mxu0 0.0
        %1125 = vmatpush1.msra.mxu0 0.0
        %1126 = vmatprep.subr.mxu0 0.0
        %1127 = vmatpush1.msra.mxu0 0.0
        %1128 = vmatprep.subr.mxu0 0.0
        %1129 = vmatpush1.msra.mxu0 0.0
        %1130 = vmatprep.mubr.f32.mxu0 0.0
        %1131 = vmatmul.mubr.f32.gmra.mrb[0].mxu0 %v768
        %v1132 = vpop.f32.mrb[0].mxu0
        %v1133 = vadd.f32 0.0, %v1132
        %v1134 = vpop.f32.mrb[0].mxu0
        %1135 = vdwg.mxu0
        %1136 = vmatprep.subr.mxu0 0.0
        %1137 = vmatpush1.msra.mxu0 %v1054
        %1138 = vmatprep.subr.mxu0 0.0
        %1139 = vmatpush1.msra.mxu0 %v1055
        %1140 = vmatprep.subr.mxu0 0.0
        %1141 = vmatpush1.msra.mxu0 %v1056
        %1142 = vmatprep.subr.mxu0 0.0
        %1143 = vmatpush1.msra.mxu0 %v1057
        %1144 = vmatprep.subr.mxu0 0.0
        %1145 = vmatpush1.msra.mxu0 0.0
        %1146 = vmatprep.subr.mxu0 0.0
        %1147 = vmatpush1.msra.mxu0 0.0
        %1148 = vmatprep.subr.mxu0 0.0
        %1149 = vmatpush1.msra.mxu0 0.0
        %1150 = vmatprep.subr.mxu0 0.0
        %1151 = vmatpush1.msra.mxu0 0.0
        %1152 = vmatprep.subr.mxu0 0.0
        %1153 = vmatpush1.msra.mxu0 0.0
        %1154 = vmatprep.subr.mxu0 0.0
        %1155 = vmatpush1.msra.mxu0 0.0
        %1156 = vmatprep.subr.mxu0 0.0
        %1157 = vmatpush1.msra.mxu0 0.0
        %1158 = vmatprep.subr.mxu0 0.0
        %1159 = vmatpush1.msra.mxu0 0.0
        %1160 = vmatprep.subr.mxu0 0.0
        %1161 = vmatpush1.msra.mxu0 0.0
        %1162 = vmatprep.subr.mxu0 0.0
        %1163 = vmatpush1.msra.mxu0 0.0
        %1164 = vmatprep.subr.mxu0 0.0
        %1165 = vmatpush1.msra.mxu0 0.0
        %1166 = vmatprep.subr.mxu0 0.0
        %1167 = vmatpush1.msra.mxu0 0.0
        %1168 = vmatprep.subr.mxu0 0.0
        %1169 = vmatpush1.msra.mxu0 0.0
        %1170 = vmatprep.subr.mxu0 0.0
        %1171 = vmatpush1.msra.mxu0 0.0
        %1172 = vmatprep.subr.mxu0 0.0
        %1173 = vmatpush1.msra.mxu0 0.0
        %1174 = vmatprep.subr.mxu0 0.0
        %1175 = vmatpush1.msra.mxu0 0.0
        %1176 = vmatprep.subr.mxu0 0.0
        %1177 = vmatpush1.msra.mxu0 0.0
        %1178 = vmatprep.subr.mxu0 0.0
        %1179 = vmatpush1.msra.mxu0 0.0
        %1180 = vmatprep.subr.mxu0 0.0
        %1181 = vmatpush1.msra.mxu0 0.0
        %1182 = vmatprep.subr.mxu0 0.0
        %1183 = vmatpush1.msra.mxu0 0.0
        %1184 = vmatprep.subr.mxu0 0.0
        %1185 = vmatpush1.msra.mxu0 0.0
        %1186 = vmatprep.subr.mxu0 0.0
        %1187 = vmatpush1.msra.mxu0 0.0
        %1188 = vmatprep.subr.mxu0 0.0
        %1189 = vmatpush1.msra.mxu0 0.0
        %1190 = vmatprep.subr.mxu0 0.0
        %1191 = vmatpush1.msra.mxu0 0.0
        %1192 = vmatprep.subr.mxu0 0.0
        %1193 = vmatpush1.msra.mxu0 0.0
        %1194 = vmatprep.subr.mxu0 0.0
        %1195 = vmatpush1.msra.mxu0 0.0
        %1196 = vmatprep.subr.mxu0 0.0
        %1197 = vmatpush1.msra.mxu0 0.0
        %1198 = vmatprep.subr.mxu0 0.0
        %1199 = vmatpush1.msra.mxu0 0.0
        %1200 = vmatprep.mubr.f32.mxu0 0.0
        %1201 = vmatmul.mubr.f32.gmra.mrb[0].mxu0 %v768
        %v1202 = vpop.f32.mrb[0].mxu0
        %v1203 = vadd.f32 0.0, %v1202
        %v1204 = vpop.f32.mrb[0].mxu0
        %1205 = vdwg.mxu0
        %1206 = vmatprep.subr.mxu0 0.0
        %1207 = vmatpush1.msra.mxu0 %v1058
        %1208 = vmatprep.subr.mxu0 0.0
        %1209 = vmatpush1.msra.mxu0 %v1059
        %1210 = vmatprep.subr.mxu0 0.0
        %1211 = vmatpush1.msra.mxu0 %v1060
        %1212 = vmatprep.subr.mxu0 0.0
        %1213 = vmatpush1.msra.mxu0 %v1061
        %1214 = vmatprep.subr.mxu0 0.0
        %1215 = vmatpush1.msra.mxu0 0.0
        %1216 = vmatprep.subr.mxu0 0.0
        %1217 = vmatpush1.msra.mxu0 0.0
        %1218 = vmatprep.subr.mxu0 0.0
        %1219 = vmatpush1.msra.mxu0 0.0
        %1220 = vmatprep.subr.mxu0 0.0
        %1221 = vmatpush1.msra.mxu0 0.0
        %1222 = vmatprep.subr.mxu0 0.0
        %1223 = vmatpush1.msra.mxu0 0.0
        %1224 = vmatprep.subr.mxu0 0.0
        %1225 = vmatpush1.msra.mxu0 0.0
        %1226 = vmatprep.subr.mxu0 0.0
        %1227 = vmatpush1.msra.mxu0 0.0
        %1228 = vmatprep.subr.mxu0 0.0
        %1229 = vmatpush1.msra.mxu0 0.0
        %1230 = vmatprep.subr.mxu0 0.0
        %1231 = vmatpush1.msra.mxu0 0.0
        %1232 = vmatprep.subr.mxu0 0.0
        %1233 = vmatpush1.msra.mxu0 0.0
        %1234 = vmatprep.subr.mxu0 0.0
        %1235 = vmatpush1.msra.mxu0 0.0
        %1236 = vmatprep.subr.mxu0 0.0
        %1237 = vmatpush1.msra.mxu0 0.0
        %1238 = vmatprep.subr.mxu0 0.0
        %1239 = vmatpush1.msra.mxu0 0.0
        %1240 = vmatprep.subr.mxu0 0.0
        %1241 = vmatpush1.msra.mxu0 0.0
        %1242 = vmatprep.subr.mxu0 0.0
        %1243 = vmatpush1.msra.mxu0 0.0
        %1244 = vmatprep.subr.mxu0 0.0
        %1245 = vmatpush1.msra.mxu0 0.0
        %1246 = vmatprep.subr.mxu0 0.0
        %1247 = vmatpush1.msra.mxu0 0.0
        %1248 = vmatprep.subr.mxu0 0.0
        %1249 = vmatpush1.msra.mxu0 0.0
        %1250 = vmatprep.subr.mxu0 0.0
        %1251 = vmatpush1.msra.mxu0 0.0
        %1252 = vmatprep.subr.mxu0 0.0
        %1253 = vmatpush1.msra.mxu0 0.0
        %1254 = vmatprep.subr.mxu0 0.0
        %1255 = vmatpush1.msra.mxu0 0.0
        %1256 = vmatprep.subr.mxu0 0.0
        %1257 = vmatpush1.msra.mxu0 0.0
        %1258 = vmatprep.subr.mxu0 0.0
        %1259 = vmatpush1.msra.mxu0 0.0
        %1260 = vmatprep.subr.mxu0 0.0
        %1261 = vmatpush1.msra.mxu0 0.0
        %1262 = vmatprep.subr.mxu0 0.0
        %1263 = vmatpush1.msra.mxu0 0.0
        %1264 = vmatprep.subr.mxu0 0.0
        %1265 = vmatpush1.msra.mxu0 0.0
        %1266 = vmatprep.subr.mxu0 0.0
        %1267 = vmatpush1.msra.mxu0 0.0
        %1268 = vmatprep.subr.mxu0 0.0
        %1269 = vmatpush1.msra.mxu0 0.0
        %1270 = vmatprep.mubr.f32.mxu0 0.0
        %1271 = vmatmul.mubr.f32.gmra.mrb[0].mxu0 %v768
        %v1272 = vpop.f32.mrb[0].mxu0
        %v1273 = vadd.f32 0.0, %v1272
        %v1274 = vpop.f32.mrb[0].mxu0
        %1275 = vdwg.mxu0
        %1276 = vmatprep.subr.mxu0 0.0
        %1277 = vmatpush1.msra.mxu0 %v1062
        %1278 = vmatprep.subr.mxu0 0.0
        %1279 = vmatpush1.msra.mxu0 %v1063
        %1280 = vmatprep.subr.mxu0 0.0
        %1281 = vmatpush1.msra.mxu0 %v1064
        %1282 = vmatprep.subr.mxu0 0.0
        %1283 = vmatpush1.msra.mxu0 %v1065
        %1284 = vmatprep.subr.mxu0 0.0
        %1285 = vmatpush1.msra.mxu0 0.0
        %1286 = vmatprep.subr.mxu0 0.0
        %1287 = vmatpush1.msra.mxu0 0.0
        %1288 = vmatprep.subr.mxu0 0.0
        %1289 = vmatpush1.msra.mxu0 0.0
        %1290 = vmatprep.subr.mxu0 0.0
        %1291 = vmatpush1.msra.mxu0 0.0
        %1292 = vmatprep.subr.mxu0 0.0
        %1293 = vmatpush1.msra.mxu0 0.0
        %1294 = vmatprep.subr.mxu0 0.0
        %1295 = vmatpush1.msra.mxu0 0.0
        %1296 = vmatprep.subr.mxu0 0.0
        %1297 = vmatpush1.msra.mxu0 0.0
        %1298 = vmatprep.subr.mxu0 0.0
        %1299 = vmatpush1.msra.mxu0 0.0
        %1300 = vmatprep.subr.mxu0 0.0
        %1301 = vmatpush1.msra.mxu0 0.0
        %1302 = vmatprep.subr.mxu0 0.0
        %1303 = vmatpush1.msra.mxu0 0.0
        %1304 = vmatprep.subr.mxu0 0.0
        %1305 = vmatpush1.msra.mxu0 0.0
        %1306 = vmatprep.subr.mxu0 0.0
        %1307 = vmatpush1.msra.mxu0 0.0
        %1308 = vmatprep.subr.mxu0 0.0
        %1309 = vmatpush1.msra.mxu0 0.0
        %1310 = vmatprep.subr.mxu0 0.0
        %1311 = vmatpush1.msra.mxu0 0.0
        %1312 = vmatprep.subr.mxu0 0.0
        %1313 = vmatpush1.msra.mxu0 0.0
        %1314 = vmatprep.subr.mxu0 0.0
        %1315 = vmatpush1.msra.mxu0 0.0
        %1316 = vmatprep.subr.mxu0 0.0
        %1317 = vmatpush1.msra.mxu0 0.0
        %1318 = vmatprep.subr.mxu0 0.0
        %1319 = vmatpush1.msra.mxu0 0.0
        %1320 = vmatprep.subr.mxu0 0.0
        %1321 = vmatpush1.msra.mxu0 0.0
        %1322 = vmatprep.subr.mxu0 0.0
        %1323 = vmatpush1.msra.mxu0 0.0
        %1324 = vmatprep.subr.mxu0 0.0
        %1325 = vmatpush1.msra.mxu0 0.0
        %1326 = vmatprep.subr.mxu0 0.0
        %1327 = vmatpush1.msra.mxu0 0.0
        %1328 = vmatprep.subr.mxu0 0.0
        %1329 = vmatpush1.msra.mxu0 0.0
        %1330 = vmatprep.subr.mxu0 0.0
        %1331 = vmatpush1.msra.mxu0 0.0
        %1332 = vmatprep.subr.mxu0 0.0
        %1333 = vmatpush1.msra.mxu0 0.0
        %1334 = vmatprep.subr.mxu0 0.0
        %1335 = vmatpush1.msra.mxu0 0.0
        %1336 = vmatprep.subr.mxu0 0.0
        %1337 = vmatpush1.msra.mxu0 0.0
        %1338 = vmatprep.subr.mxu0 0.0
        %1339 = vmatpush1.msra.mxu0 0.0
        %1340 = vmatprep.mubr.f32.mxu0 0.0
        %1341 = vmatmul.mubr.f32.gmra.mrb[0].mxu0 %v768
        %v1342 = vpop.f32.mrb[0].mxu0
        %v1343 = vadd.f32 0.0, %v1342
        %v1344 = vpop.f32.mrb[0].mxu0
        %1345 = vdwg.mxu0
        %v1346 = vld [vmem:[%s7] sm:$0xff]
        %v1347 = vld [vmem:[%s7 + $0x8] sm:$0xff]
        %v1348 = vld [vmem:[%s7 + $0x10] sm:$0xff]
        %v1349 = vld [vmem:[%s7 + $0x18] sm:$0xff]
        %v1350 = vld [vmem:[%s7 + $0x20] sm:$0xff]
        %v1351 = vld [vmem:[%s7 + $0x28] sm:$0xff]
        %v1352 = vld [vmem:[%s7 + $0x30] sm:$0xff]
        %v1353 = vld [vmem:[%s7 + $0x38] sm:$0xff]
        %v1354 = vld [vmem:[%s7 + $0x40] sm:$0xff]
        %v1355 = vld [vmem:[%s7 + $0x48] sm:$0xff]
        %v1356 = vld [vmem:[%s7 + $0x50] sm:$0xff]
        %v1357 = vld [vmem:[%s7 + $0x58] sm:$0xff]
        %v1358 = vld [vmem:[%s7 + $0x60] sm:$0xff]
        %v1359 = vld [vmem:[%s7 + $0x68] sm:$0xff]
        %v1360 = vld [vmem:[%s7 + $0x70] sm:$0xff]
        %v1361 = vld [vmem:[%s7 + $0x78] sm:$0xff]
        %1362 = vmatprep.subr.mxu0 0.0
        %1363 = vmatpush1.msra.mxu0 %v1346
        %1364 = vmatprep.subr.mxu0 0.0
        %1365 = vmatpush1.msra.mxu0 %v1347
        %1366 = vmatprep.subr.mxu0 0.0
        %1367 = vmatpush1.msra.mxu0 %v1348
        %1368 = vmatprep.subr.mxu0 0.0
        %1369 = vmatpush1.msra.mxu0 %v1349
        %1370 = vmatprep.subr.mxu0 0.0
        %1371 = vmatpush1.msra.mxu0 0.0
        %1372 = vmatprep.subr.mxu0 0.0
        %1373 = vmatpush1.msra.mxu0 0.0
        %1374 = vmatprep.subr.mxu0 0.0
        %1375 = vmatpush1.msra.mxu0 0.0
        %1376 = vmatprep.subr.mxu0 0.0
        %1377 = vmatpush1.msra.mxu0 0.0
        %1378 = vmatprep.subr.mxu0 0.0
        %1379 = vmatpush1.msra.mxu0 0.0
        %1380 = vmatprep.subr.mxu0 0.0
        %1381 = vmatpush1.msra.mxu0 0.0
        %1382 = vmatprep.subr.mxu0 0.0
        %1383 = vmatpush1.msra.mxu0 0.0
        %1384 = vmatprep.subr.mxu0 0.0
        %1385 = vmatpush1.msra.mxu0 0.0
        %1386 = vmatprep.subr.mxu0 0.0
        %1387 = vmatpush1.msra.mxu0 0.0
        %1388 = vmatprep.subr.mxu0 0.0
        %1389 = vmatpush1.msra.mxu0 0.0
        %1390 = vmatprep.subr.mxu0 0.0
        %1391 = vmatpush1.msra.mxu0 0.0
        %1392 = vmatprep.subr.mxu0 0.0
        %1393 = vmatpush1.msra.mxu0 0.0
        %1394 = vmatprep.subr.mxu0 0.0
        %1395 = vmatpush1.msra.mxu0 0.0
        %1396 = vmatprep.subr.mxu0 0.0
        %1397 = vmatpush1.msra.mxu0 0.0
        %1398 = vmatprep.subr.mxu0 0.0
        %1399 = vmatpush1.msra.mxu0 0.0
        %1400 = vmatprep.subr.mxu0 0.0
        %1401 = vmatpush1.msra.mxu0 0.0
        %1402 = vmatprep.subr.mxu0 0.0
        %1403 = vmatpush1.msra.mxu0 0.0
        %1404 = vmatprep.subr.mxu0 0.0
        %1405 = vmatpush1.msra.mxu0 0.0
        %1406 = vmatprep.subr.mxu0 0.0
        %1407 = vmatpush1.msra.mxu0 0.0
        %1408 = vmatprep.subr.mxu0 0.0
        %1409 = vmatpush1.msra.mxu0 0.0
        %1410 = vmatprep.subr.mxu0 0.0
        %1411 = vmatpush1.msra.mxu0 0.0
        %1412 = vmatprep.subr.mxu0 0.0
        %1413 = vmatpush1.msra.mxu0 0.0
        %1414 = vmatprep.subr.mxu0 0.0
        %1415 = vmatpush1.msra.mxu0 0.0
        %1416 = vmatprep.subr.mxu0 0.0
        %1417 = vmatpush1.msra.mxu0 0.0
        %1418 = vmatprep.subr.mxu0 0.0
        %1419 = vmatpush1.msra.mxu0 0.0
        %1420 = vmatprep.subr.mxu0 0.0
        %1421 = vmatpush1.msra.mxu0 0.0
        %1422 = vmatprep.subr.mxu0 0.0
        %1423 = vmatpush1.msra.mxu0 0.0
        %1424 = vmatprep.subr.mxu0 0.0
        %1425 = vmatpush1.msra.mxu0 0.0
        %1426 = vmatprep.mubr.f32.mxu0 0.0
        %1427 = vmatmul.mubr.f32.gmra.mrb[0].mxu0 %v768
        %v1428 = vpop.f32.mrb[0].mxu0
        %v1429 = vadd.f32 0.0, %v1428
        %v1430 = vpop.f32.mrb[0].mxu0
        %1431 = vdwg.mxu0
        %1432 = vmatprep.subr.mxu0 0.0
        %1433 = vmatpush1.msra.mxu0 %v1350
        %1434 = vmatprep.subr.mxu0 0.0
        %1435 = vmatpush1.msra.mxu0 %v1351
        %1436 = vmatprep.subr.mxu0 0.0
        %1437 = vmatpush1.msra.mxu0 %v1352
        %1438 = vmatprep.subr.mxu0 0.0
        %1439 = vmatpush1.msra.mxu0 %v1353
        %1440 = vmatprep.subr.mxu0 0.0
        %1441 = vmatpush1.msra.mxu0 0.0
        %1442 = vmatprep.subr.mxu0 0.0
        %1443 = vmatpush1.msra.mxu0 0.0
        %1444 = vmatprep.subr.mxu0 0.0
        %1445 = vmatpush1.msra.mxu0 0.0
        %1446 = vmatprep.subr.mxu0 0.0
        %1447 = vmatpush1.msra.mxu0 0.0
        %1448 = vmatprep.subr.mxu0 0.0
        %1449 = vmatpush1.msra.mxu0 0.0
        %1450 = vmatprep.subr.mxu0 0.0
        %1451 = vmatpush1.msra.mxu0 0.0
        %1452 = vmatprep.subr.mxu0 0.0
        %1453 = vmatpush1.msra.mxu0 0.0
        %1454 = vmatprep.subr.mxu0 0.0
        %1455 = vmatpush1.msra.mxu0 0.0
        %1456 = vmatprep.subr.mxu0 0.0
        %1457 = vmatpush1.msra.mxu0 0.0
        %1458 = vmatprep.subr.mxu0 0.0
        %1459 = vmatpush1.msra.mxu0 0.0
        %1460 = vmatprep.subr.mxu0 0.0
        %1461 = vmatpush1.msra.mxu0 0.0
        %1462 = vmatprep.subr.mxu0 0.0
        %1463 = vmatpush1.msra.mxu0 0.0
        %1464 = vmatprep.subr.mxu0 0.0
        %1465 = vmatpush1.msra.mxu0 0.0
        %1466 = vmatprep.subr.mxu0 0.0
        %1467 = vmatpush1.msra.mxu0 0.0
        %1468 = vmatprep.subr.mxu0 0.0
        %1469 = vmatpush1.msra.mxu0 0.0
        %1470 = vmatprep.subr.mxu0 0.0
        %1471 = vmatpush1.msra.mxu0 0.0
        %1472 = vmatprep.subr.mxu0 0.0
        %1473 = vmatpush1.msra.mxu0 0.0
        %1474 = vmatprep.subr.mxu0 0.0
        %1475 = vmatpush1.msra.mxu0 0.0
        %1476 = vmatprep.subr.mxu0 0.0
        %1477 = vmatpush1.msra.mxu0 0.0
        %1478 = vmatprep.subr.mxu0 0.0
        %1479 = vmatpush1.msra.mxu0 0.0
        %1480 = vmatprep.subr.mxu0 0.0
        %1481 = vmatpush1.msra.mxu0 0.0
        %1482 = vmatprep.subr.mxu0 0.0
        %1483 = vmatpush1.msra.mxu0 0.0
        %1484 = vmatprep.subr.mxu0 0.0
        %1485 = vmatpush1.msra.mxu0 0.0
        %1486 = vmatprep.subr.mxu0 0.0
        %1487 = vmatpush1.msra.mxu0 0.0
        %1488 = vmatprep.subr.mxu0 0.0
        %1489 = vmatpush1.msra.mxu0 0.0
        %1490 = vmatprep.subr.mxu0 0.0
        %1491 = vmatpush1.msra.mxu0 0.0
        %1492 = vmatprep.subr.mxu0 0.0
        %1493 = vmatpush1.msra.mxu0 0.0
        %1494 = vmatprep.subr.mxu0 0.0
        %1495 = vmatpush1.msra.mxu0 0.0
        %1496 = vmatprep.mubr.f32.mxu0 0.0
        %1497 = vmatmul.mubr.f32.gmra.mrb[0].mxu0 %v768
        %v1498 = vpop.f32.mrb[0].mxu0
        %v1499 = vadd.f32 0.0, %v1498
        %v1500 = vpop.f32.mrb[0].mxu0
        %1501 = vdwg.mxu0
        %1502 = vmatprep.subr.mxu0 0.0
        %1503 = vmatpush1.msra.mxu0 %v1354
        %1504 = vmatprep.subr.mxu0 0.0
        %1505 = vmatpush1.msra.mxu0 %v1355
        %1506 = vmatprep.subr.mxu0 0.0
        %1507 = vmatpush1.msra.mxu0 %v1356
        %1508 = vmatprep.subr.mxu0 0.0
        %1509 = vmatpush1.msra.mxu0 %v1357
        %1510 = vmatprep.subr.mxu0 0.0
        %1511 = vmatpush1.msra.mxu0 0.0
        %1512 = vmatprep.subr.mxu0 0.0
        %1513 = vmatpush1.msra.mxu0 0.0
        %1514 = vmatprep.subr.mxu0 0.0
        %1515 = vmatpush1.msra.mxu0 0.0
        %1516 = vmatprep.subr.mxu0 0.0
        %1517 = vmatpush1.msra.mxu0 0.0
        %1518 = vmatprep.subr.mxu0 0.0
        %1519 = vmatpush1.msra.mxu0 0.0
        %1520 = vmatprep.subr.mxu0 0.0
        %1521 = vmatpush1.msra.mxu0 0.0
        %1522 = vmatprep.subr.mxu0 0.0
        %1523 = vmatpush1.msra.mxu0 0.0
        %1524 = vmatprep.subr.mxu0 0.0
        %1525 = vmatpush1.msra.mxu0 0.0
        %1526 = vmatprep.subr.mxu0 0.0
        %1527 = vmatpush1.msra.mxu0 0.0
        %1528 = vmatprep.subr.mxu0 0.0
        %1529 = vmatpush1.msra.mxu0 0.0
        %1530 = vmatprep.subr.mxu0 0.0
        %1531 = vmatpush1.msra.mxu0 0.0
        %1532 = vmatprep.subr.mxu0 0.0
        %1533 = vmatpush1.msra.mxu0 0.0
        %1534 = vmatprep.subr.mxu0 0.0
        %1535 = vmatpush1.msra.mxu0 0.0
        %1536 = vmatprep.subr.mxu0 0.0
        %1537 = vmatpush1.msra.mxu0 0.0
        %1538 = vmatprep.subr.mxu0 0.0
        %1539 = vmatpush1.msra.mxu0 0.0
        %1540 = vmatprep.subr.mxu0 0.0
        %1541 = vmatpush1.msra.mxu0 0.0
        %1542 = vmatprep.subr.mxu0 0.0
        %1543 = vmatpush1.msra.mxu0 0.0
        %1544 = vmatprep.subr.mxu0 0.0
        %1545 = vmatpush1.msra.mxu0 0.0
        %1546 = vmatprep.subr.mxu0 0.0
        %1547 = vmatpush1.msra.mxu0 0.0
        %1548 = vmatprep.subr.mxu0 0.0
        %1549 = vmatpush1.msra.mxu0 0.0
        %1550 = vmatprep.subr.mxu0 0.0
        %1551 = vmatpush1.msra.mxu0 0.0
        %1552 = vmatprep.subr.mxu0 0.0
        %1553 = vmatpush1.msra.mxu0 0.0
        %1554 = vmatprep.subr.mxu0 0.0
        %1555 = vmatpush1.msra.mxu0 0.0
        %1556 = vmatprep.subr.mxu0 0.0
        %1557 = vmatpush1.msra.mxu0 0.0
        %1558 = vmatprep.subr.mxu0 0.0
        %1559 = vmatpush1.msra.mxu0 0.0
        %1560 = vmatprep.subr.mxu0 0.0
        %1561 = vmatpush1.msra.mxu0 0.0
        %1562 = vmatprep.subr.mxu0 0.0
        %1563 = vmatpush1.msra.mxu0 0.0
        %1564 = vmatprep.subr.mxu0 0.0
        %1565 = vmatpush1.msra.mxu0 0.0
        %1566 = vmatprep.mubr.f32.mxu0 0.0
        %1567 = vmatmul.mubr.f32.gmra.mrb[0].mxu0 %v768
        %v1568 = vpop.f32.mrb[0].mxu0
        %v1569 = vadd.f32 0.0, %v1568
        %v1570 = vpop.f32.mrb[0].mxu0
        %1571 = vdwg.mxu0
        %1572 = vmatprep.subr.mxu0 0.0
        %1573 = vmatpush1.msra.mxu0 %v1358
        %1574 = vmatprep.subr.mxu0 0.0
        %1575 = vmatpush1.msra.mxu0 %v1359
        %1576 = vmatprep.subr.mxu0 0.0
        %1577 = vmatpush1.msra.mxu0 %v1360
        %1578 = vmatprep.subr.mxu0 0.0
        %1579 = vmatpush1.msra.mxu0 %v1361
        %1580 = vmatprep.subr.mxu0 0.0
        %1581 = vmatpush1.msra.mxu0 0.0
        %1582 = vmatprep.subr.mxu0 0.0
        %1583 = vmatpush1.msra.mxu0 0.0
        %1584 = vmatprep.subr.mxu0 0.0
        %1585 = vmatpush1.msra.mxu0 0.0
        %1586 = vmatprep.subr.mxu0 0.0
        %1587 = vmatpush1.msra.mxu0 0.0
        %1588 = vmatprep.subr.mxu0 0.0
        %1589 = vmatpush1.msra.mxu0 0.0
        %1590 = vmatprep.subr.mxu0 0.0
        %1591 = vmatpush1.msra.mxu0 0.0
        %1592 = vmatprep.subr.mxu0 0.0
        %1593 = vmatpush1.msra.mxu0 0.0
        %1594 = vmatprep.subr.mxu0 0.0
        %1595 = vmatpush1.msra.mxu0 0.0
        %1596 = vmatprep.subr.mxu0 0.0
        %1597 = vmatpush1.msra.mxu0 0.0
        %1598 = vmatprep.subr.mxu0 0.0
        %1599 = vmatpush1.msra.mxu0 0.0
        %1600 = vmatprep.subr.mxu0 0.0
        %1601 = vmatpush1.msra.mxu0 0.0
        %1602 = vmatprep.subr.mxu0 0.0
        %1603 = vmatpush1.msra.mxu0 0.0
        %1604 = vmatprep.subr.mxu0 0.0
        %1605 = vmatpush1.msra.mxu0 0.0
        %1606 = vmatprep.subr.mxu0 0.0
        %1607 = vmatpush1.msra.mxu0 0.0
        %1608 = vmatprep.subr.mxu0 0.0
        %1609 = vmatpush1.msra.mxu0 0.0
        %1610 = vmatprep.subr.mxu0 0.0
        %1611 = vmatpush1.msra.mxu0 0.0
        %1612 = vmatprep.subr.mxu0 0.0
        %1613 = vmatpush1.msra.mxu0 0.0
        %1614 = vmatprep.subr.mxu0 0.0
        %1615 = vmatpush1.msra.mxu0 0.0
        %1616 = vmatprep.subr.mxu0 0.0
        %1617 = vmatpush1.msra.mxu0 0.0
        %1618 = vmatprep.subr.mxu0 0.0
        %1619 = vmatpush1.msra.mxu0 0.0
        %1620 = vmatprep.subr.mxu0 0.0
        %1621 = vmatpush1.msra.mxu0 0.0
        %1622 = vmatprep.subr.mxu0 0.0
        %1623 = vmatpush1.msra.mxu0 0.0
        %1624 = vmatprep.subr.mxu0 0.0
        %1625 = vmatpush1.msra.mxu0 0.0
        %1626 = vmatprep.subr.mxu0 0.0
        %1627 = vmatpush1.msra.mxu0 0.0
        %1628 = vmatprep.subr.mxu0 0.0
        %1629 = vmatpush1.msra.mxu0 0.0
        %1630 = vmatprep.subr.mxu0 0.0
        %1631 = vmatpush1.msra.mxu0 0.0
        %1632 = vmatprep.subr.mxu0 0.0
        %1633 = vmatpush1.msra.mxu0 0.0
        %1634 = vmatprep.subr.mxu0 0.0
        %1635 = vmatpush1.msra.mxu0 0.0
        %1636 = vmatprep.mubr.f32.mxu0 0.0
        %1637 = vmatmul.mubr.f32.gmra.mrb[0].mxu0 %v768
        %v1638 = vpop.f32.mrb[0].mxu0
        %v1639 = vadd.f32 0.0, %v1638
        %v1640 = vpop.f32.mrb[0].mxu0
        %1641 = vdwg.mxu0
        %vm1642 = vcmask 64512
        %v1644 = vsel %vm1642, %v837, 0
        %v1647 = vsel %vm1642, %v1133, 0
        %1649 = vmatprep.subr.mxu0 0.0
        %1650 = vmatpush1.xpose.msra.mxu0 %v1647
        %1651 = vmatprep.subr.mxu0 0.0
        %1652 = vmatpush1.xpose.msra.mxu0 0.0
        %1653 = vmatprep.subr.mxu0 0.0
        %1654 = vmatpush1.xpose.msra.mxu0 0.0
        %1655 = vmatprep.subr.mxu0 0.0
        %1656 = vmatpush1.xpose.msra.mxu0 0.0
        %1657 = vmatprep.subr.mxu0 0.0
        %1658 = vmatpush1.xpose.msra.mxu0 0.0
        %1659 = vmatprep.subr.mxu0 0.0
        %1660 = vmatpush1.xpose.msra.mxu0 0.0
        %1661 = vmatprep.subr.mxu0 0.0
        %1662 = vmatpush1.xpose.msra.mxu0 0.0
        %1663 = vmatprep.subr.mxu0 0.0
        %1664 = vmatpush1.xpose.msra.mxu0 0.0
        %1665 = vmatprep.subr.mxu0 0.0
        %1666 = vmatpush1.xpose.msra.mxu0 0.0
        %1667 = vmatprep.subr.mxu0 0.0
        %1668 = vmatpush1.xpose.msra.mxu0 0.0
        %1669 = vmatprep.subr.mxu0 0.0
        %1670 = vmatpush1.xpose.msra.mxu0 0.0
        %1671 = vmatprep.subr.mxu0 0.0
        %1672 = vmatpush1.xpose.msra.mxu0 0.0
        %1673 = vmatprep.subr.mxu0 0.0
        %1674 = vmatpush1.xpose.msra.mxu0 0.0
        %1675 = vmatprep.subr.mxu0 0.0
        %1676 = vmatpush1.xpose.msra.mxu0 0.0
        %1677 = vmatprep.subr.mxu0 0.0
        %1678 = vmatpush1.xpose.msra.mxu0 0.0
        %1679 = vmatprep.subr.mxu0 0.0
        %1680 = vmatpush1.xpose.msra.mxu0 0.0
        %1681 = vmatprep.subr.mxu0 0.0
        %1682 = vmatpush1.xpose.msra.mxu0 0.0
        %1683 = vmatprep.subr.mxu0 0.0
        %1684 = vmatpush1.xpose.msra.mxu0 0.0
        %1685 = vmatprep.subr.mxu0 0.0
        %1686 = vmatpush1.xpose.msra.mxu0 0.0
        %1687 = vmatprep.subr.mxu0 0.0
        %1688 = vmatpush1.xpose.msra.mxu0 0.0
        %1689 = vmatprep.subr.mxu0 0.0
        %1690 = vmatpush1.xpose.msra.mxu0 0.0
        %1691 = vmatprep.subr.mxu0 0.0
        %1692 = vmatpush1.xpose.msra.mxu0 0.0
        %1693 = vmatprep.subr.mxu0 0.0
        %1694 = vmatpush1.xpose.msra.mxu0 0.0
        %1695 = vmatprep.subr.mxu0 0.0
        %1696 = vmatpush1.xpose.msra.mxu0 0.0
        %1697 = vmatprep.subr.mxu0 0.0
        %1698 = vmatpush1.xpose.msra.mxu0 0.0
        %1699 = vmatprep.subr.mxu0 0.0
        %1700 = vmatpush1.xpose.msra.mxu0 0.0
        %1701 = vmatprep.subr.mxu0 0.0
        %1702 = vmatpush1.xpose.msra.mxu0 0.0
        %1703 = vmatprep.subr.mxu0 0.0
        %1704 = vmatpush1.xpose.msra.mxu0 0.0
        %1705 = vmatprep.subr.mxu0 0.0
        %1706 = vmatpush1.xpose.msra.mxu0 0.0
        %1707 = vmatprep.subr.mxu0 0.0
        %1708 = vmatpush1.xpose.msra.mxu0 0.0
        %1709 = vmatprep.subr.mxu0 0.0
        %1710 = vmatpush1.xpose.msra.mxu0 0.0
        %1711 = vmatprep.subr.mxu0 0.0
        %1712 = vmatpush1.xpose.msra.mxu0 0.0
        %1713 = vmatprep.mubr.f32.mxu0 0.0
        %1714 = vmatmul.mubr.f32.gmra.mrb[0].mxu0 %v1644
        %v1715 = vpop.f32.mrb[0].mxu0
        %v1716 = vadd.f32 0.0, %v1715
        %v1717 = vpop.f32.mrb[0].mxu0
        %1718 = vdwg.mxu0
        %v1720 = vsel %vm1642, %v907, 0
        %v1723 = vsel %vm1642, %v1203, 0
        %1725 = vmatprep.subr.mxu0 0.0
        %1726 = vmatpush1.xpose.msra.mxu0 %v1723
        %1727 = vmatprep.subr.mxu0 0.0
        %1728 = vmatpush1.xpose.msra.mxu0 0.0
        %1729 = vmatprep.subr.mxu0 0.0
        %1730 = vmatpush1.xpose.msra.mxu0 0.0
        %1731 = vmatprep.subr.mxu0 0.0
        %1732 = vmatpush1.xpose.msra.mxu0 0.0
        %1733 = vmatprep.subr.mxu0 0.0
        %1734 = vmatpush1.xpose.msra.mxu0 0.0
        %1735 = vmatprep.subr.mxu0 0.0
        %1736 = vmatpush1.xpose.msra.mxu0 0.0
        %1737 = vmatprep.subr.mxu0 0.0
        %1738 = vmatpush1.xpose.msra.mxu0 0.0
        %1739 = vmatprep.subr.mxu0 0.0
        %1740 = vmatpush1.xpose.msra.mxu0 0.0
        %1741 = vmatprep.subr.mxu0 0.0
        %1742 = vmatpush1.xpose.msra.mxu0 0.0
        %1743 = vmatprep.subr.mxu0 0.0
        %1744 = vmatpush1.xpose.msra.mxu0 0.0
        %1745 = vmatprep.subr.mxu0 0.0
        %1746 = vmatpush1.xpose.msra.mxu0 0.0
        %1747 = vmatprep.subr.mxu0 0.0
        %1748 = vmatpush1.xpose.msra.mxu0 0.0
        %1749 = vmatprep.subr.mxu0 0.0
        %1750 = vmatpush1.xpose.msra.mxu0 0.0
        %1751 = vmatprep.subr.mxu0 0.0
        %1752 = vmatpush1.xpose.msra.mxu0 0.0
        %1753 = vmatprep.subr.mxu0 0.0
        %1754 = vmatpush1.xpose.msra.mxu0 0.0
        %1755 = vmatprep.subr.mxu0 0.0
        %1756 = vmatpush1.xpose.msra.mxu0 0.0
        %1757 = vmatprep.subr.mxu0 0.0
        %1758 = vmatpush1.xpose.msra.mxu0 0.0
        %1759 = vmatprep.subr.mxu0 0.0
        %1760 = vmatpush1.xpose.msra.mxu0 0.0
        %1761 = vmatprep.subr.mxu0 0.0
        %1762 = vmatpush1.xpose.msra.mxu0 0.0
        %1763 = vmatprep.subr.mxu0 0.0
        %1764 = vmatpush1.xpose.msra.mxu0 0.0
        %1765 = vmatprep.subr.mxu0 0.0
        %1766 = vmatpush1.xpose.msra.mxu0 0.0
        %1767 = vmatprep.subr.mxu0 0.0
        %1768 = vmatpush1.xpose.msra.mxu0 0.0
        %1769 = vmatprep.subr.mxu0 0.0
        %1770 = vmatpush1.xpose.msra.mxu0 0.0
        %1771 = vmatprep.subr.mxu0 0.0
        %1772 = vmatpush1.xpose.msra.mxu0 0.0
        %1773 = vmatprep.subr.mxu0 0.0
        %1774 = vmatpush1.xpose.msra.mxu0 0.0
        %1775 = vmatprep.subr.mxu0 0.0
        %1776 = vmatpush1.xpose.msra.mxu0 0.0
        %1777 = vmatprep.subr.mxu0 0.0
        %1778 = vmatpush1.xpose.msra.mxu0 0.0
        %1779 = vmatprep.subr.mxu0 0.0
        %1780 = vmatpush1.xpose.msra.mxu0 0.0
        %1781 = vmatprep.subr.mxu0 0.0
        %1782 = vmatpush1.xpose.msra.mxu0 0.0
        %1783 = vmatprep.subr.mxu0 0.0
        %1784 = vmatpush1.xpose.msra.mxu0 0.0
        %1785 = vmatprep.subr.mxu0 0.0
        %1786 = vmatpush1.xpose.msra.mxu0 0.0
        %1787 = vmatprep.subr.mxu0 0.0
        %1788 = vmatpush1.xpose.msra.mxu0 0.0
        %1789 = vmatprep.mubr.f32.mxu0 0.0
        %1790 = vmatmul.mubr.f32.gmra.mrb[0].mxu0 %v1720
        %v1791 = vpop.f32.mrb[0].mxu0
        %v1792 = vadd.f32 0.0, %v1791
        %v1793 = vpop.f32.mrb[0].mxu0
        %1794 = vdwg.mxu0
        %v1796 = vsel %vm1642, %v977, 0
        %v1799 = vsel %vm1642, %v1273, 0
        %1801 = vmatprep.subr.mxu0 0.0
        %1802 = vmatpush1.xpose.msra.mxu0 %v1799
        %1803 = vmatprep.subr.mxu0 0.0
        %1804 = vmatpush1.xpose.msra.mxu0 0.0
        %1805 = vmatprep.subr.mxu0 0.0
        %1806 = vmatpush1.xpose.msra.mxu0 0.0
        %1807 = vmatprep.subr.mxu0 0.0
        %1808 = vmatpush1.xpose.msra.mxu0 0.0
        %1809 = vmatprep.subr.mxu0 0.0
        %1810 = vmatpush1.xpose.msra.mxu0 0.0
        %1811 = vmatprep.subr.mxu0 0.0
        %1812 = vmatpush1.xpose.msra.mxu0 0.0
        %1813 = vmatprep.subr.mxu0 0.0
        %1814 = vmatpush1.xpose.msra.mxu0 0.0
        %1815 = vmatprep.subr.mxu0 0.0
        %1816 = vmatpush1.xpose.msra.mxu0 0.0
        %1817 = vmatprep.subr.mxu0 0.0
        %1818 = vmatpush1.xpose.msra.mxu0 0.0
        %1819 = vmatprep.subr.mxu0 0.0
        %1820 = vmatpush1.xpose.msra.mxu0 0.0
        %1821 = vmatprep.subr.mxu0 0.0
        %1822 = vmatpush1.xpose.msra.mxu0 0.0
        %1823 = vmatprep.subr.mxu0 0.0
        %1824 = vmatpush1.xpose.msra.mxu0 0.0
        %1825 = vmatprep.subr.mxu0 0.0
        %1826 = vmatpush1.xpose.msra.mxu0 0.0
        %1827 = vmatprep.subr.mxu0 0.0
        %1828 = vmatpush1.xpose.msra.mxu0 0.0
        %1829 = vmatprep.subr.mxu0 0.0
        %1830 = vmatpush1.xpose.msra.mxu0 0.0
        %1831 = vmatprep.subr.mxu0 0.0
        %1832 = vmatpush1.xpose.msra.mxu0 0.0
        %1833 = vmatprep.subr.mxu0 0.0
        %1834 = vmatpush1.xpose.msra.mxu0 0.0
        %1835 = vmatprep.subr.mxu0 0.0
        %1836 = vmatpush1.xpose.msra.mxu0 0.0
        %1837 = vmatprep.subr.mxu0 0.0
        %1838 = vmatpush1.xpose.msra.mxu0 0.0
        %1839 = vmatprep.subr.mxu0 0.0
        %1840 = vmatpush1.xpose.msra.mxu0 0.0
        %1841 = vmatprep.subr.mxu0 0.0
        %1842 = vmatpush1.xpose.msra.mxu0 0.0
        %1843 = vmatprep.subr.mxu0 0.0
        %1844 = vmatpush1.xpose.msra.mxu0 0.0
        %1845 = vmatprep.subr.mxu0 0.0
        %1846 = vmatpush1.xpose.msra.mxu0 0.0
        %1847 = vmatprep.subr.mxu0 0.0
        %1848 = vmatpush1.xpose.msra.mxu0 0.0
        %1849 = vmatprep.subr.mxu0 0.0
        %1850 = vmatpush1.xpose.msra.mxu0 0.0
        %1851 = vmatprep.subr.mxu0 0.0
        %1852 = vmatpush1.xpose.msra.mxu0 0.0
        %1853 = vmatprep.subr.mxu0 0.0
        %1854 = vmatpush1.xpose.msra.mxu0 0.0
        %1855 = vmatprep.subr.mxu0 0.0
        %1856 = vmatpush1.xpose.msra.mxu0 0.0
        %1857 = vmatprep.subr.mxu0 0.0
        %1858 = vmatpush1.xpose.msra.mxu0 0.0
        %1859 = vmatprep.subr.mxu0 0.0
        %1860 = vmatpush1.xpose.msra.mxu0 0.0
        %1861 = vmatprep.subr.mxu0 0.0
        %1862 = vmatpush1.xpose.msra.mxu0 0.0
        %1863 = vmatprep.subr.mxu0 0.0
        %1864 = vmatpush1.xpose.msra.mxu0 0.0
        %1865 = vmatprep.mubr.f32.mxu0 0.0
        %1866 = vmatmul.mubr.f32.gmra.mrb[0].mxu0 %v1796
        %v1867 = vpop.f32.mrb[0].mxu0
        %v1868 = vadd.f32 0.0, %v1867
        %v1869 = vpop.f32.mrb[0].mxu0
        %1870 = vdwg.mxu0
        %v1872 = vsel %vm1642, %v1047, 0
        %v1875 = vsel %vm1642, %v1343, 0
        %1877 = vmatprep.subr.mxu0 0.0
        %1878 = vmatpush1.xpose.msra.mxu0 %v1875
        %1879 = vmatprep.subr.mxu0 0.0
        %1880 = vmatpush1.xpose.msra.mxu0 0.0
        %1881 = vmatprep.subr.mxu0 0.0
        %1882 = vmatpush1.xpose.msra.mxu0 0.0
        %1883 = vmatprep.subr.mxu0 0.0
        %1884 = vmatpush1.xpose.msra.mxu0 0.0
        %1885 = vmatprep.subr.mxu0 0.0
        %1886 = vmatpush1.xpose.msra.mxu0 0.0
        %1887 = vmatprep.subr.mxu0 0.0
        %1888 = vmatpush1.xpose.msra.mxu0 0.0
        %1889 = vmatprep.subr.mxu0 0.0
        %1890 = vmatpush1.xpose.msra.mxu0 0.0
        %1891 = vmatprep.subr.mxu0 0.0
        %1892 = vmatpush1.xpose.msra.mxu0 0.0
        %1893 = vmatprep.subr.mxu0 0.0
        %1894 = vmatpush1.xpose.msra.mxu0 0.0
        %1895 = vmatprep.subr.mxu0 0.0
        %1896 = vmatpush1.xpose.msra.mxu0 0.0
        %1897 = vmatprep.subr.mxu0 0.0
        %1898 = vmatpush1.xpose.msra.mxu0 0.0
        %1899 = vmatprep.subr.mxu0 0.0
        %1900 = vmatpush1.xpose.msra.mxu0 0.0
        %1901 = vmatprep.subr.mxu0 0.0
        %1902 = vmatpush1.xpose.msra.mxu0 0.0
        %1903 = vmatprep.subr.mxu0 0.0
        %1904 = vmatpush1.xpose.msra.mxu0 0.0
        %1905 = vmatprep.subr.mxu0 0.0
        %1906 = vmatpush1.xpose.msra.mxu0 0.0
        %1907 = vmatprep.subr.mxu0 0.0
        %1908 = vmatpush1.xpose.msra.mxu0 0.0
        %1909 = vmatprep.subr.mxu0 0.0
        %1910 = vmatpush1.xpose.msra.mxu0 0.0
        %1911 = vmatprep.subr.mxu0 0.0
        %1912 = vmatpush1.xpose.msra.mxu0 0.0
        %1913 = vmatprep.subr.mxu0 0.0
        %1914 = vmatpush1.xpose.msra.mxu0 0.0
        %1915 = vmatprep.subr.mxu0 0.0
        %1916 = vmatpush1.xpose.msra.mxu0 0.0
        %1917 = vmatprep.subr.mxu0 0.0
        %1918 = vmatpush1.xpose.msra.mxu0 0.0
        %1919 = vmatprep.subr.mxu0 0.0
        %1920 = vmatpush1.xpose.msra.mxu0 0.0
        %1921 = vmatprep.subr.mxu0 0.0
        %1922 = vmatpush1.xpose.msra.mxu0 0.0
        %1923 = vmatprep.subr.mxu0 0.0
        %1924 = vmatpush1.xpose.msra.mxu0 0.0
        %1925 = vmatprep.subr.mxu0 0.0
        %1926 = vmatpush1.xpose.msra.mxu0 0.0
        %1927 = vmatprep.subr.mxu0 0.0
        %1928 = vmatpush1.xpose.msra.mxu0 0.0
        %1929 = vmatprep.subr.mxu0 0.0
        %1930 = vmatpush1.xpose.msra.mxu0 0.0
        %1931 = vmatprep.subr.mxu0 0.0
        %1932 = vmatpush1.xpose.msra.mxu0 0.0
        %1933 = vmatprep.subr.mxu0 0.0
        %1934 = vmatpush1.xpose.msra.mxu0 0.0
        %1935 = vmatprep.subr.mxu0 0.0
        %1936 = vmatpush1.xpose.msra.mxu0 0.0
        %1937 = vmatprep.subr.mxu0 0.0
        %1938 = vmatpush1.xpose.msra.mxu0 0.0
        %1939 = vmatprep.subr.mxu0 0.0
        %1940 = vmatpush1.xpose.msra.mxu0 0.0
        %1941 = vmatprep.mubr.f32.mxu0 0.0
        %1942 = vmatmul.mubr.f32.gmra.mrb[0].mxu0 %v1872
        %v1943 = vpop.f32.mrb[0].mxu0
        %v1944 = vadd.f32 0.0, %v1943
        %v1945 = vpop.f32.mrb[0].mxu0
        %1946 = vdwg.mxu0
        %v1947 = vmul.f32 %v1716, 0.35355338
        %v1948 = vmul.f32 %v1792, 0.35355338
        %v1949 = vmul.f32 %v1868, 0.35355338
        %v1950 = vmul.f32 %v1944, 0.35355338
        %v1951 = vsel %vm719, %v1947, -inf
        %v1952 = vsel %vm719, %v1948, -inf
        %v1953 = vsel %vm719, %v1949, -inf
        %v1954 = vsel %vm719, %v1950, -inf
        %v1955 = vsel %vm1642, %v1951, -inf
        %1956 = vmax.xlane.f32.xlu0 %v1955
        %v1957 = vpop.xlane.xlu0 %1956
        %v1958 = vsel %vm1642, %v1952, -inf
        %1959 = vmax.xlane.f32.xlu0 %v1958
        %v1960 = vpop.xlane.xlu0 %1959
        %v1961 = vsel %vm1642, %v1953, -inf
        %1962 = vmax.xlane.f32.xlu0 %v1961
        %v1963 = vpop.xlane.xlu0 %1962
        %v1964 = vsel %vm1642, %v1954, -inf
        %1965 = vmax.xlane.f32.xlu0 %v1964
        %v1966 = vpop.xlane.xlu0 %1965
        %v1967 = vsub.f32 %v1951, %v1957
        %v1968 = vsub.f32 %v1952, %v1960
        %v1969 = vsub.f32 %v1953, %v1963
        %v1970 = vsub.f32 %v1954, %v1966
        %v1971 = vmul.f32 %v1967, 1.442695
        %v1972 = vpow.pop %v1971
        %v1973 = vmul.f32 %v1968, 1.442695
        %v1974 = vpow.pop %v1973
        %v1975 = vmul.f32 %v1969, 1.442695
        %v1976 = vpow.pop %v1975
        %v1977 = vmul.f32 %v1970, 1.442695
        %v1978 = vpow.pop %v1977
        %v1979 = vsel %vm1642, %v1972, 0.0
        %1980 = vadd.xlane.f32.xlu0 %v1979
        %v1981 = vpop.xlane.xlu0 %1980
        %v1982 = vsel %vm1642, %v1974, 0.0
        %1983 = vadd.xlane.f32.xlu0 %v1982
        %v1984 = vpop.xlane.xlu0 %1983
        %v1985 = vsel %vm1642, %v1976, 0.0
        %1986 = vadd.xlane.f32.xlu0 %v1985
        %v1987 = vpop.xlane.xlu0 %1986
        %v1988 = vsel %vm1642, %v1978, 0.0
        %1989 = vadd.xlane.f32.xlu0 %v1988
        %v1990 = vpop.xlane.xlu0 %1989
        %v1991 = vrcp.pop %v1981
        %v1992 = vrcp.pop %v1984
        %v1993 = vrcp.pop %v1987
        %v1994 = vrcp.pop %v1990
        %v1995 = vmul.f32 %v1972, %v1991
        %v1996 = vmul.f32 %v1974, %v1992
        %v1997 = vmul.f32 %v1976, %v1993
        %v1998 = vmul.f32 %v1978, %v1994
        %v2000 = vsel %vm1642, %v1995, 0
        %2002 = vmatprep.subr.mxu0 0.0
        %2003 = vmatpush1.msra.mxu0 %v1429
        %2004 = vmatprep.subr.mxu0 0.0
        %2005 = vmatpush1.msra.mxu0 0.0
        %2006 = vmatprep.subr.mxu0 0.0
        %2007 = vmatpush1.msra.mxu0 0.0
        %2008 = vmatprep.subr.mxu0 0.0
        %2009 = vmatpush1.msra.mxu0 0.0
        %2010 = vmatprep.subr.mxu0 0.0
        %2011 = vmatpush1.msra.mxu0 0.0
        %2012 = vmatprep.subr.mxu0 0.0
        %2013 = vmatpush1.msra.mxu0 0.0
        %2014 = vmatprep.subr.mxu0 0.0
        %2015 = vmatpush1.msra.mxu0 0.0
        %2016 = vmatprep.subr.mxu0 0.0
        %2017 = vmatpush1.msra.mxu0 0.0
        %2018 = vmatprep.subr.mxu0 0.0
        %2019 = vmatpush1.msra.mxu0 0.0
        %2020 = vmatprep.subr.mxu0 0.0
        %2021 = vmatpush1.msra.mxu0 0.0
        %2022 = vmatprep.subr.mxu0 0.0
        %2023 = vmatpush1.msra.mxu0 0.0
        %2024 = vmatprep.subr.mxu0 0.0
        %2025 = vmatpush1.msra.mxu0 0.0
        %2026 = vmatprep.subr.mxu0 0.0
        %2027 = vmatpush1.msra.mxu0 0.0
        %2028 = vmatprep.subr.mxu0 0.0
        %2029 = vmatpush1.msra.mxu0 0.0
        %2030 = vmatprep.subr.mxu0 0.0
        %2031 = vmatpush1.msra.mxu0 0.0
        %2032 = vmatprep.subr.mxu0 0.0
        %2033 = vmatpush1.msra.mxu0 0.0
        %2034 = vmatprep.subr.mxu0 0.0
        %2035 = vmatpush1.msra.mxu0 0.0
        %2036 = vmatprep.subr.mxu0 0.0
        %2037 = vmatpush1.msra.mxu0 0.0
        %2038 = vmatprep.subr.mxu0 0.0
        %2039 = vmatpush1.msra.mxu0 0.0
        %2040 = vmatprep.subr.mxu0 0.0
        %2041 = vmatpush1.msra.mxu0 0.0
        %2042 = vmatprep.subr.mxu0 0.0
        %2043 = vmatpush1.msra.mxu0 0.0
        %2044 = vmatprep.subr.mxu0 0.0
        %2045 = vmatpush1.msra.mxu0 0.0
        %2046 = vmatprep.subr.mxu0 0.0
        %2047 = vmatpush1.msra.mxu0 0.0
        %2048 = vmatprep.subr.mxu0 0.0
        %2049 = vmatpush1.msra.mxu0 0.0
        %2050 = vmatprep.subr.mxu0 0.0
        %2051 = vmatpush1.msra.mxu0 0.0
        %2052 = vmatprep.subr.mxu0 0.0
        %2053 = vmatpush1.msra.mxu0 0.0
        %2054 = vmatprep.subr.mxu0 0.0
        %2055 = vmatpush1.msra.mxu0 0.0
        %2056 = vmatprep.subr.mxu0 0.0
        %2057 = vmatpush1.msra.mxu0 0.0
        %2058 = vmatprep.subr.mxu0 0.0
        %2059 = vmatpush1.msra.mxu0 0.0
        %2060 = vmatprep.subr.mxu0 0.0
        %2061 = vmatpush1.msra.mxu0 0.0
        %2062 = vmatprep.subr.mxu0 0.0
        %2063 = vmatpush1.msra.mxu0 0.0
        %2064 = vmatprep.subr.mxu0 0.0
        %2065 = vmatpush1.msra.mxu0 0.0
        %2066 = vmatprep.mubr.f32.mxu0 0.0
        %2067 = vmatmul.mubr.f32.gmra.mrb[0].mxu0 %v2000
        %v2068 = vpop.f32.mrb[0].mxu0
        %v2069 = vadd.f32 0.0, %v2068
        %v2070 = vpop.f32.mrb[0].mxu0
        %2071 = vdwg.mxu0
        %v2073 = vsel %vm1642, %v1996, 0
        %2075 = vmatprep.subr.mxu0 0.0
        %2076 = vmatpush1.msra.mxu0 %v1499
        %2077 = vmatprep.subr.mxu0 0.0
        %2078 = vmatpush1.msra.mxu0 0.0
        %2079 = vmatprep.subr.mxu0 0.0
        %2080 = vmatpush1.msra.mxu0 0.0
        %2081 = vmatprep.subr.mxu0 0.0
        %2082 = vmatpush1.msra.mxu0 0.0
        %2083 = vmatprep.subr.mxu0 0.0
        %2084 = vmatpush1.msra.mxu0 0.0
        %2085 = vmatprep.subr.mxu0 0.0
        %2086 = vmatpush1.msra.mxu0 0.0
        %2087 = vmatprep.subr.mxu0 0.0
        %2088 = vmatpush1.msra.mxu0 0.0
        %2089 = vmatprep.subr.mxu0 0.0
        %2090 = vmatpush1.msra.mxu0 0.0
        %2091 = vmatprep.subr.mxu0 0.0
        %2092 = vmatpush1.msra.mxu0 0.0
        %2093 = vmatprep.subr.mxu0 0.0
        %2094 = vmatpush1.msra.mxu0 0.0
        %2095 = vmatprep.subr.mxu0 0.0
        %2096 = vmatpush1.msra.mxu0 0.0
        %2097 = vmatprep.subr.mxu0 0.0
        %2098 = vmatpush1.msra.mxu0 0.0
        %2099 = vmatprep.subr.mxu0 0.0
        %2100 = vmatpush1.msra.mxu0 0.0
        %2101 = vmatprep.subr.mxu0 0.0
        %2102 = vmatpush1.msra.mxu0 0.0
        %2103 = vmatprep.subr.mxu0 0.0
        %2104 = vmatpush1.msra.mxu0 0.0
        %2105 = vmatprep.subr.mxu0 0.0
        %2106 = vmatpush1.msra.mxu0 0.0
        %2107 = vmatprep.subr.mxu0 0.0
        %2108 = vmatpush1.msra.mxu0 0.0
        %2109 = vmatprep.subr.mxu0 0.0
        %2110 = vmatpush1.msra.mxu0 0.0
        %2111 = vmatprep.subr.mxu0 0.0
        %2112 = vmatpush1.msra.mxu0 0.0
        %2113 = vmatprep.subr.mxu0 0.0
        %2114 = vmatpush1.msra.mxu0 0.0
        %2115 = vmatprep.subr.mxu0 0.0
        %2116 = vmatpush1.msra.mxu0 0.0
        %2117 = vmatprep.subr.mxu0 0.0
        %2118 = vmatpush1.msra.mxu0 0.0
        %2119 = vmatprep.subr.mxu0 0.0
        %2120 = vmatpush1.msra.mxu0 0.0
        %2121 = vmatprep.subr.mxu0 0.0
        %2122 = vmatpush1.msra.mxu0 0.0
        %2123 = vmatprep.subr.mxu0 0.0
        %2124 = vmatpush1.msra.mxu0 0.0
        %2125 = vmatprep.subr.mxu0 0.0
        %2126 = vmatpush1.msra.mxu0 0.0
        %2127 = vmatprep.subr.mxu0 0.0
        %2128 = vmatpush1.msra.mxu0 0.0
        %2129 = vmatprep.subr.mxu0 0.0
        %2130 = vmatpush1.msra.mxu0 0.0
        %2131 = vmatprep.subr.mxu0 0.0
        %2132 = vmatpush1.msra.mxu0 0.0
        %2133 = vmatprep.subr.mxu0 0.0
        %2134 = vmatpush1.msra.mxu0 0.0
        %2135 = vmatprep.subr.mxu0 0.0
        %2136 = vmatpush1.msra.mxu0 0.0
        %2137 = vmatprep.subr.mxu0 0.0
        %2138 = vmatpush1.msra.mxu0 0.0
        %2139 = vmatprep.mubr.f32.mxu0 0.0
        %2140 = vmatmul.mubr.f32.gmra.mrb[0].mxu0 %v2073
        %v2141 = vpop.f32.mrb[0].mxu0
        %v2142 = vadd.f32 0.0, %v2141
        %v2143 = vpop.f32.mrb[0].mxu0
        %2144 = vdwg.mxu0
        %v2146 = vsel %vm1642, %v1997, 0
        %2148 = vmatprep.subr.mxu0 0.0
        %2149 = vmatpush1.msra.mxu0 %v1569
        %2150 = vmatprep.subr.mxu0 0.0
        %2151 = vmatpush1.msra.mxu0 0.0
        %2152 = vmatprep.subr.mxu0 0.0
        %2153 = vmatpush1.msra.mxu0 0.0
        %2154 = vmatprep.subr.mxu0 0.0
        %2155 = vmatpush1.msra.mxu0 0.0
        %2156 = vmatprep.subr.mxu0 0.0
        %2157 = vmatpush1.msra.mxu0 0.0
        %2158 = vmatprep.subr.mxu0 0.0
        %2159 = vmatpush1.msra.mxu0 0.0
        %2160 = vmatprep.subr.mxu0 0.0
        %2161 = vmatpush1.msra.mxu0 0.0
        %2162 = vmatprep.subr.mxu0 0.0
        %2163 = vmatpush1.msra.mxu0 0.0
        %2164 = vmatprep.subr.mxu0 0.0
        %2165 = vmatpush1.msra.mxu0 0.0
        %2166 = vmatprep.subr.mxu0 0.0
        %2167 = vmatpush1.msra.mxu0 0.0
        %2168 = vmatprep.subr.mxu0 0.0
        %2169 = vmatpush1.msra.mxu0 0.0
        %2170 = vmatprep.subr.mxu0 0.0
        %2171 = vmatpush1.msra.mxu0 0.0
        %2172 = vmatprep.subr.mxu0 0.0
        %2173 = vmatpush1.msra.mxu0 0.0
        %2174 = vmatprep.subr.mxu0 0.0
        %2175 = vmatpush1.msra.mxu0 0.0
        %2176 = vmatprep.subr.mxu0 0.0
        %2177 = vmatpush1.msra.mxu0 0.0
        %2178 = vmatprep.subr.mxu0 0.0
        %2179 = vmatpush1.msra.mxu0 0.0
        %2180 = vmatprep.subr.mxu0 0.0
        %2181 = vmatpush1.msra.mxu0 0.0
        %2182 = vmatprep.subr.mxu0 0.0
        %2183 = vmatpush1.msra.mxu0 0.0
        %2184 = vmatprep.subr.mxu0 0.0
        %2185 = vmatpush1.msra.mxu0 0.0
        %2186 = vmatprep.subr.mxu0 0.0
        %2187 = vmatpush1.msra.mxu0 0.0
        %2188 = vmatprep.subr.mxu0 0.0
        %2189 = vmatpush1.msra.mxu0 0.0
        %2190 = vmatprep.subr.mxu0 0.0
        %2191 = vmatpush1.msra.mxu0 0.0
        %2192 = vmatprep.subr.mxu0 0.0
        %2193 = vmatpush1.msra.mxu0 0.0
        %2194 = vmatprep.subr.mxu0 0.0
        %2195 = vmatpush1.msra.mxu0 0.0
        %2196 = vmatprep.subr.mxu0 0.0
        %2197 = vmatpush1.msra.mxu0 0.0
        %2198 = vmatprep.subr.mxu0 0.0
        %2199 = vmatpush1.msra.mxu0 0.0
        %2200 = vmatprep.subr.mxu0 0.0
        %2201 = vmatpush1.msra.mxu0 0.0
        %2202 = vmatprep.subr.mxu0 0.0
        %2203 = vmatpush1.msra.mxu0 0.0
        %2204 = vmatprep.subr.mxu0 0.0
        %2205 = vmatpush1.msra.mxu0 0.0
        %2206 = vmatprep.subr.mxu0 0.0
        %2207 = vmatpush1.msra.mxu0 0.0
        %2208 = vmatprep.subr.mxu0 0.0
        %2209 = vmatpush1.msra.mxu0 0.0
        %2210 = vmatprep.subr.mxu0 0.0
        %2211 = vmatpush1.msra.mxu0 0.0
        %2212 = vmatprep.mubr.f32.mxu0 0.0
        %2213 = vmatmul.mubr.f32.gmra.mrb[0].mxu0 %v2146
        %v2214 = vpop.f32.mrb[0].mxu0
        %v2215 = vadd.f32 0.0, %v2214
        %v2216 = vpop.f32.mrb[0].mxu0
        %2217 = vdwg.mxu0
        %v2219 = vsel %vm1642, %v1998, 0
        %2221 = vmatprep.subr.mxu0 0.0
        %2222 = vmatpush1.msra.mxu0 %v1639
        %2223 = vmatprep.subr.mxu0 0.0
        %2224 = vmatpush1.msra.mxu0 0.0
        %2225 = vmatprep.subr.mxu0 0.0
        %2226 = vmatpush1.msra.mxu0 0.0
        %2227 = vmatprep.subr.mxu0 0.0
        %2228 = vmatpush1.msra.mxu0 0.0
        %2229 = vmatprep.subr.mxu0 0.0
        %2230 = vmatpush1.msra.mxu0 0.0
        %2231 = vmatprep.subr.mxu0 0.0
        %2232 = vmatpush1.msra.mxu0 0.0
        %2233 = vmatprep.subr.mxu0 0.0
        %2234 = vmatpush1.msra.mxu0 0.0
        %2235 = vmatprep.subr.mxu0 0.0
        %2236 = vmatpush1.msra.mxu0 0.0
        %2237 = vmatprep.subr.mxu0 0.0
        %2238 = vmatpush1.msra.mxu0 0.0
        %2239 = vmatprep.subr.mxu0 0.0
        %2240 = vmatpush1.msra.mxu0 0.0
        %2241 = vmatprep.subr.mxu0 0.0
        %2242 = vmatpush1.msra.mxu0 0.0
        %2243 = vmatprep.subr.mxu0 0.0
        %2244 = vmatpush1.msra.mxu0 0.0
        %2245 = vmatprep.subr.mxu0 0.0
        %2246 = vmatpush1.msra.mxu0 0.0
        %2247 = vmatprep.subr.mxu0 0.0
        %2248 = vmatpush1.msra.mxu0 0.0
        %2249 = vmatprep.subr.mxu0 0.0
        %2250 = vmatpush1.msra.mxu0 0.0
        %2251 = vmatprep.subr.mxu0 0.0
        %2252 = vmatpush1.msra.mxu0 0.0
        %2253 = vmatprep.subr.mxu0 0.0
        %2254 = vmatpush1.msra.mxu0 0.0
        %2255 = vmatprep.subr.mxu0 0.0
        %2256 = vmatpush1.msra.mxu0 0.0
        %2257 = vmatprep.subr.mxu0 0.0
        %2258 = vmatpush1.msra.mxu0 0.0
        %2259 = vmatprep.subr.mxu0 0.0
        %2260 = vmatpush1.msra.mxu0 0.0
        %2261 = vmatprep.subr.mxu0 0.0
        %2262 = vmatpush1.msra.mxu0 0.0
        %2263 = vmatprep.subr.mxu0 0.0
        %2264 = vmatpush1.msra.mxu0 0.0
        %2265 = vmatprep.subr.mxu0 0.0
        %2266 = vmatpush1.msra.mxu0 0.0
        %2267 = vmatprep.subr.mxu0 0.0
        %2268 = vmatpush1.msra.mxu0 0.0
        %2269 = vmatprep.subr.mxu0 0.0
        %2270 = vmatpush1.msra.mxu0 0.0
        %2271 = vmatprep.subr.mxu0 0.0
        %2272 = vmatpush1.msra.mxu0 0.0
        %2273 = vmatprep.subr.mxu0 0.0
        %2274 = vmatpush1.msra.mxu0 0.0
        %2275 = vmatprep.subr.mxu0 0.0
        %2276 = vmatpush1.msra.mxu0 0.0
        %2277 = vmatprep.subr.mxu0 0.0
        %2278 = vmatpush1.msra.mxu0 0.0
        %2279 = vmatprep.subr.mxu0 0.0
        %2280 = vmatpush1.msra.mxu0 0.0
        %2281 = vmatprep.subr.mxu0 0.0
        %2282 = vmatpush1.msra.mxu0 0.0
        %2283 = vmatprep.subr.mxu0 0.0
        %2284 = vmatpush1.msra.mxu0 0.0
        %2285 = vmatprep.mubr.f32.mxu0 0.0
        %2286 = vmatmul.mubr.f32.gmra.mrb[0].mxu0 %v2219
        %v2287 = vpop.f32.mrb[0].mxu0
        %v2288 = vadd.f32 0.0, %v2287
        %v2289 = vpop.f32.mrb[0].mxu0
        %2290 = vdwg.mxu0
        %v2291 = vld [vmem:[%s8] sm:$0xff]
        %v2292 = vld [vmem:[%s8 + $0x8] sm:$0xff]
        %v2293 = vld [vmem:[%s8 + $0x10] sm:$0xff]
        %v2294 = vld [vmem:[%s8 + $0x18] sm:$0xff]
        %v2296 = vsel %vm1642, %v2069, 0
        %2298 = vmatprep.subr.mxu0 0.0
        %2299 = vmatpush1.msra.mxu0 %v2291
        %2300 = vmatprep.subr.mxu0 0.0
        %2301 = vmatpush1.msra.mxu0 0.0
        %2302 = vmatprep.subr.mxu0 0.0
        %2303 = vmatpush1.msra.mxu0 0.0
        %2304 = vmatprep.subr.mxu0 0.0
        %2305 = vmatpush1.msra.mxu0 0.0
        %2306 = vmatprep.subr.mxu0 0.0
        %2307 = vmatpush1.msra.mxu0 0.0
        %2308 = vmatprep.subr.mxu0 0.0
        %2309 = vmatpush1.msra.mxu0 0.0
        %2310 = vmatprep.subr.mxu0 0.0
        %2311 = vmatpush1.msra.mxu0 0.0
        %2312 = vmatprep.subr.mxu0 0.0
        %2313 = vmatpush1.msra.mxu0 0.0
        %2314 = vmatprep.subr.mxu0 0.0
        %2315 = vmatpush1.msra.mxu0 0.0
        %2316 = vmatprep.subr.mxu0 0.0
        %2317 = vmatpush1.msra.mxu0 0.0
        %2318 = vmatprep.subr.mxu0 0.0
        %2319 = vmatpush1.msra.mxu0 0.0
        %2320 = vmatprep.subr.mxu0 0.0
        %2321 = vmatpush1.msra.mxu0 0.0
        %2322 = vmatprep.subr.mxu0 0.0
        %2323 = vmatpush1.msra.mxu0 0.0
        %2324 = vmatprep.subr.mxu0 0.0
        %2325 = vmatpush1.msra.mxu0 0.0
        %2326 = vmatprep.subr.mxu0 0.0
        %2327 = vmatpush1.msra.mxu0 0.0
        %2328 = vmatprep.subr.mxu0 0.0
        %2329 = vmatpush1.msra.mxu0 0.0
        %2330 = vmatprep.subr.mxu0 0.0
        %2331 = vmatpush1.msra.mxu0 0.0
        %2332 = vmatprep.subr.mxu0 0.0
        %2333 = vmatpush1.msra.mxu0 0.0
        %2334 = vmatprep.subr.mxu0 0.0
        %2335 = vmatpush1.msra.mxu0 0.0
        %2336 = vmatprep.subr.mxu0 0.0
        %2337 = vmatpush1.msra.mxu0 0.0
        %2338 = vmatprep.subr.mxu0 0.0
        %2339 = vmatpush1.msra.mxu0 0.0
        %2340 = vmatprep.subr.mxu0 0.0
        %2341 = vmatpush1.msra.mxu0 0.0
        %2342 = vmatprep.subr.mxu0 0.0
        %2343 = vmatpush1.msra.mxu0 0.0
        %2344 = vmatprep.subr.mxu0 0.0
        %2345 = vmatpush1.msra.mxu0 0.0
        %2346 = vmatprep.subr.mxu0 0.0
        %2347 = vmatpush1.msra.mxu0 0.0
        %2348 = vmatprep.subr.mxu0 0.0
        %2349 = vmatpush1.msra.mxu0 0.0
        %2350 = vmatprep.subr.mxu0 0.0
        %2351 = vmatpush1.msra.mxu0 0.0
        %2352 = vmatprep.subr.mxu0 0.0
        %2353 = vmatpush1.msra.mxu0 0.0
        %2354 = vmatprep.subr.mxu0 0.0
        %2355 = vmatpush1.msra.mxu0 0.0
        %2356 = vmatprep.subr.mxu0 0.0
        %2357 = vmatpush1.msra.mxu0 0.0
        %2358 = vmatprep.subr.mxu0 0.0
        %2359 = vmatpush1.msra.mxu0 0.0
        %2360 = vmatprep.subr.mxu0 0.0
        %2361 = vmatpush1.msra.mxu0 0.0
        %2362 = vmatprep.mubr.f32.mxu0 0.0
        %2363 = vmatmul.mubr.f32.gmra.mrb[0].mxu0 %v2296
        %v2364 = vpop.f32.mrb[0].mxu0
        %v2365 = vadd.f32 0.0, %v2364
        %v2366 = vpop.f32.mrb[0].mxu0
        %2367 = vdwg.mxu0
        %v2369 = vsel %vm1642, %v2142, 0
        %2371 = vmatprep.subr.mxu0 0.0
        %2372 = vmatpush1.msra.mxu0 %v2292
        %2373 = vmatprep.subr.mxu0 0.0
        %2374 = vmatpush1.msra.mxu0 0.0
        %2375 = vmatprep.subr.mxu0 0.0
        %2376 = vmatpush1.msra.mxu0 0.0
        %2377 = vmatprep.subr.mxu0 0.0
        %2378 = vmatpush1.msra.mxu0 0.0
        %2379 = vmatprep.subr.mxu0 0.0
        %2380 = vmatpush1.msra.mxu0 0.0
        %2381 = vmatprep.subr.mxu0 0.0
        %2382 = vmatpush1.msra.mxu0 0.0
        %2383 = vmatprep.subr.mxu0 0.0
        %2384 = vmatpush1.msra.mxu0 0.0
        %2385 = vmatprep.subr.mxu0 0.0
        %2386 = vmatpush1.msra.mxu0 0.0
        %2387 = vmatprep.subr.mxu0 0.0
        %2388 = vmatpush1.msra.mxu0 0.0
        %2389 = vmatprep.subr.mxu0 0.0
        %2390 = vmatpush1.msra.mxu0 0.0
        %2391 = vmatprep.subr.mxu0 0.0
        %2392 = vmatpush1.msra.mxu0 0.0
        %2393 = vmatprep.subr.mxu0 0.0
        %2394 = vmatpush1.msra.mxu0 0.0
        %2395 = vmatprep.subr.mxu0 0.0
        %2396 = vmatpush1.msra.mxu0 0.0
        %2397 = vmatprep.subr.mxu0 0.0
        %2398 = vmatpush1.msra.mxu0 0.0
        %2399 = vmatprep.subr.mxu0 0.0
        %2400 = vmatpush1.msra.mxu0 0.0
        %2401 = vmatprep.subr.mxu0 0.0
        %2402 = vmatpush1.msra.mxu0 0.0
        %2403 = vmatprep.subr.mxu0 0.0
        %2404 = vmatpush1.msra.mxu0 0.0
        %2405 = vmatprep.subr.mxu0 0.0
        %2406 = vmatpush1.msra.mxu0 0.0
        %2407 = vmatprep.subr.mxu0 0.0
        %2408 = vmatpush1.msra.mxu0 0.0
        %2409 = vmatprep.subr.mxu0 0.0
        %2410 = vmatpush1.msra.mxu0 0.0
        %2411 = vmatprep.subr.mxu0 0.0
        %2412 = vmatpush1.msra.mxu0 0.0
        %2413 = vmatprep.subr.mxu0 0.0
        %2414 = vmatpush1.msra.mxu0 0.0
        %2415 = vmatprep.subr.mxu0 0.0
        %2416 = vmatpush1.msra.mxu0 0.0
        %2417 = vmatprep.subr.mxu0 0.0
        %2418 = vmatpush1.msra.mxu0 0.0
        %2419 = vmatprep.subr.mxu0 0.0
        %2420 = vmatpush1.msra.mxu0 0.0
        %2421 = vmatprep.subr.mxu0 0.0
        %2422 = vmatpush1.msra.mxu0 0.0
        %2423 = vmatprep.subr.mxu0 0.0
        %2424 = vmatpush1.msra.mxu0 0.0
        %2425 = vmatprep.subr.mxu0 0.0
        %2426 = vmatpush1.msra.mxu0 0.0
        %2427 = vmatprep.subr.mxu0 0.0
        %2428 = vmatpush1.msra.mxu0 0.0
        %2429 = vmatprep.subr.mxu0 0.0
        %2430 = vmatpush1.msra.mxu0 0.0
        %2431 = vmatprep.subr.mxu0 0.0
        %2432 = vmatpush1.msra.mxu0 0.0
        %2433 = vmatprep.subr.mxu0 0.0
        %2434 = vmatpush1.msra.mxu0 0.0
        %2435 = vmatprep.mubr.f32.mxu0 0.0
        %2436 = vmatmul.mubr.f32.gmra.mrb[0].mxu0 %v2369
        %v2437 = vpop.f32.mrb[0].mxu0
        %v2438 = vadd.f32 0.0, %v2437
        %v2439 = vpop.f32.mrb[0].mxu0
        %2440 = vdwg.mxu0
        %v2442 = vsel %vm1642, %v2215, 0
        %2444 = vmatprep.subr.mxu0 0.0
        %2445 = vmatpush1.msra.mxu0 %v2293
        %2446 = vmatprep.subr.mxu0 0.0
        %2447 = vmatpush1.msra.mxu0 0.0
        %2448 = vmatprep.subr.mxu0 0.0
        %2449 = vmatpush1.msra.mxu0 0.0
        %2450 = vmatprep.subr.mxu0 0.0
        %2451 = vmatpush1.msra.mxu0 0.0
        %2452 = vmatprep.subr.mxu0 0.0
        %2453 = vmatpush1.msra.mxu0 0.0
        %2454 = vmatprep.subr.mxu0 0.0
        %2455 = vmatpush1.msra.mxu0 0.0
        %2456 = vmatprep.subr.mxu0 0.0
        %2457 = vmatpush1.msra.mxu0 0.0
        %2458 = vmatprep.subr.mxu0 0.0
        %2459 = vmatpush1.msra.mxu0 0.0
        %2460 = vmatprep.subr.mxu0 0.0
        %2461 = vmatpush1.msra.mxu0 0.0
        %2462 = vmatprep.subr.mxu0 0.0
        %2463 = vmatpush1.msra.mxu0 0.0
        %2464 = vmatprep.subr.mxu0 0.0
        %2465 = vmatpush1.msra.mxu0 0.0
        %2466 = vmatprep.subr.mxu0 0.0
        %2467 = vmatpush1.msra.mxu0 0.0
        %2468 = vmatprep.subr.mxu0 0.0
        %2469 = vmatpush1.msra.mxu0 0.0
        %2470 = vmatprep.subr.mxu0 0.0
        %2471 = vmatpush1.msra.mxu0 0.0
        %2472 = vmatprep.subr.mxu0 0.0
        %2473 = vmatpush1.msra.mxu0 0.0
        %2474 = vmatprep.subr.mxu0 0.0
        %2475 = vmatpush1.msra.mxu0 0.0
        %2476 = vmatprep.subr.mxu0 0.0
        %2477 = vmatpush1.msra.mxu0 0.0
        %2478 = vmatprep.subr.mxu0 0.0
        %2479 = vmatpush1.msra.mxu0 0.0
        %2480 = vmatprep.subr.mxu0 0.0
        %2481 = vmatpush1.msra.mxu0 0.0
        %2482 = vmatprep.subr.mxu0 0.0
        %2483 = vmatpush1.msra.mxu0 0.0
        %2484 = vmatprep.subr.mxu0 0.0
        %2485 = vmatpush1.msra.mxu0 0.0
        %2486 = vmatprep.subr.mxu0 0.0
        %2487 = vmatpush1.msra.mxu0 0.0
        %2488 = vmatprep.subr.mxu0 0.0
        %2489 = vmatpush1.msra.mxu0 0.0
        %2490 = vmatprep.subr.mxu0 0.0
        %2491 = vmatpush1.msra.mxu0 0.0
        %2492 = vmatprep.subr.mxu0 0.0
        %2493 = vmatpush1.msra.mxu0 0.0
        %2494 = vmatprep.subr.mxu0 0.0
        %2495 = vmatpush1.msra.mxu0 0.0
        %2496 = vmatprep.subr.mxu0 0.0
        %2497 = vmatpush1.msra.mxu0 0.0
        %2498 = vmatprep.subr.mxu0 0.0
        %2499 = vmatpush1.msra.mxu0 0.0
        %2500 = vmatprep.subr.mxu0 0.0
        %2501 = vmatpush1.msra.mxu0 0.0
        %2502 = vmatprep.subr.mxu0 0.0
        %2503 = vmatpush1.msra.mxu0 0.0
        %2504 = vmatprep.subr.mxu0 0.0
        %2505 = vmatpush1.msra.mxu0 0.0
        %2506 = vmatprep.subr.mxu0 0.0
        %2507 = vmatpush1.msra.mxu0 0.0
        %2508 = vmatprep.mubr.f32.mxu0 0.0
        %2509 = vmatmul.mubr.f32.gmra.mrb[0].mxu0 %v2442
        %v2510 = vpop.f32.mrb[0].mxu0
        %v2511 = vadd.f32 0.0, %v2510
        %v2512 = vpop.f32.mrb[0].mxu0
        %2513 = vdwg.mxu0
        %v2515 = vsel %vm1642, %v2288, 0
        %2517 = vmatprep.subr.mxu0 0.0
        %2518 = vmatpush1.msra.mxu0 %v2294
        %2519 = vmatprep.subr.mxu0 0.0
        %2520 = vmatpush1.msra.mxu0 0.0
        %2521 = vmatprep.subr.mxu0 0.0
        %2522 = vmatpush1.msra.mxu0 0.0
        %2523 = vmatprep.subr.mxu0 0.0
        %2524 = vmatpush1.msra.mxu0 0.0
        %2525 = vmatprep.subr.mxu0 0.0
        %2526 = vmatpush1.msra.mxu0 0.0
        %2527 = vmatprep.subr.mxu0 0.0
        %2528 = vmatpush1.msra.mxu0 0.0
        %2529 = vmatprep.subr.mxu0 0.0
        %2530 = vmatpush1.msra.mxu0 0.0
        %2531 = vmatprep.subr.mxu0 0.0
        %2532 = vmatpush1.msra.mxu0 0.0
        %2533 = vmatprep.subr.mxu0 0.0
        %2534 = vmatpush1.msra.mxu0 0.0
        %2535 = vmatprep.subr.mxu0 0.0
        %2536 = vmatpush1.msra.mxu0 0.0
        %2537 = vmatprep.subr.mxu0 0.0
        %2538 = vmatpush1.msra.mxu0 0.0
        %2539 = vmatprep.subr.mxu0 0.0
        %2540 = vmatpush1.msra.mxu0 0.0
        %2541 = vmatprep.subr.mxu0 0.0
        %2542 = vmatpush1.msra.mxu0 0.0
        %2543 = vmatprep.subr.mxu0 0.0
        %2544 = vmatpush1.msra.mxu0 0.0
        %2545 = vmatprep.subr.mxu0 0.0
        %2546 = vmatpush1.msra.mxu0 0.0
        %2547 = vmatprep.subr.mxu0 0.0
        %2548 = vmatpush1.msra.mxu0 0.0
        %2549 = vmatprep.subr.mxu0 0.0
        %2550 = vmatpush1.msra.mxu0 0.0
        %2551 = vmatprep.subr.mxu0 0.0
        %2552 = vmatpush1.msra.mxu0 0.0
        %2553 = vmatprep.subr.mxu0 0.0
        %2554 = vmatpush1.msra.mxu0 0.0
        %2555 = vmatprep.subr.mxu0 0.0
        %2556 = vmatpush1.msra.mxu0 0.0
        %2557 = vmatprep.subr.mxu0 0.0
        %2558 = vmatpush1.msra.mxu0 0.0
        %2559 = vmatprep.subr.mxu0 0.0
        %2560 = vmatpush1.msra.mxu0 0.0
        %2561 = vmatprep.subr.mxu0 0.0
        %2562 = vmatpush1.msra.mxu0 0.0
        %2563 = vmatprep.subr.mxu0 0.0
        %2564 = vmatpush1.msra.mxu0 0.0
        %2565 = vmatprep.subr.mxu0 0.0
        %2566 = vmatpush1.msra.mxu0 0.0
        %2567 = vmatprep.subr.mxu0 0.0
        %2568 = vmatpush1.msra.mxu0 0.0
        %2569 = vmatprep.subr.mxu0 0.0
        %2570 = vmatpush1.msra.mxu0 0.0
        %2571 = vmatprep.subr.mxu0 0.0
        %2572 = vmatpush1.msra.mxu0 0.0
        %2573 = vmatprep.subr.mxu0 0.0
        %2574 = vmatpush1.msra.mxu0 0.0
        %2575 = vmatprep.subr.mxu0 0.0
        %2576 = vmatpush1.msra.mxu0 0.0
        %2577 = vmatprep.subr.mxu0 0.0
        %2578 = vmatpush1.msra.mxu0 0.0
        %2579 = vmatprep.subr.mxu0 0.0
        %2580 = vmatpush1.msra.mxu0 0.0
        %2581 = vmatprep.mubr.f32.mxu0 0.0
        %2582 = vmatmul.mubr.f32.gmra.mrb[0].mxu0 %v2515
        %v2583 = vpop.f32.mrb[0].mxu0
        %v2584 = vadd.f32 0.0, %v2583
        %v2585 = vpop.f32.mrb[0].mxu0
        %2586 = vdwg.mxu0
        %v2587 = vsel %vm722, %v2365, 0.0
        %v2588 = vsel %vm722, %v2438, 0.0
        %v2589 = vadd.f32 %v2587, %v2588
        %v2590 = vsel %vm722, %v2511, 0.0
        %v2591 = vadd.f32 %v2589, %v2590
        %v2592 = vsel %vm722, %v2584, 0.0
        %v2593 = vadd.f32 %v2591, %v2592
        %v2594 = vadd.f32 %v714, %v2593
        %v2595 = vld [vmem:[%s9] sm:$0x1]
        %v2597 = vlaneseq
        %v2598 = vshrl.u32 %v2597, 7
        %v2599 = vsub.s32 0, %v2598
        %v2600 = vrot.slane %v2595, %v2599
        %v2602 = vadd.f32 %v2594, %v2600
        %v2603 = vld [vmem:[%s10] sm:$0x1]
        %v2604 = vld [vmem:[%s11] sm:$0x1]
        %v2605 = vsel %vm722, %v2602, 0.0
        %2606 = vadd.xlane.f32.xlu0 %v2605
        %v2607 = vpop.xlane.xlu0 %2606
        %v2608 = vmul.f32 %v2607, %v726
        %v2609 = vsub.f32 %v2602, %v2608
        %v2610 = vmul.f32 %v2609, %v2609
        %v2611 = vsel %vm722, %v2610, 0.0
        %2612 = vadd.xlane.f32.xlu0 %v2611
        %v2613 = vpop.xlane.xlu0 %2612
        %v2614 = vmul.f32 %v2613, %v726
        %v2615 = vadd.f32 %v2614, 1e-05
        %v2616 = vrsqrt.pop %v2615
        %v2617 = vmul.f32 %v2609, %v2616
        %v2619 = vlaneseq
        %v2620 = vshrl.u32 %v2619, 7
        %v2621 = vsub.s32 0, %v2620
        %v2622 = vrot.slane %v2603, %v2621
        %v2624 = vmul.f32 %v2617, %v2622
        %v2626 = vlaneseq
        %v2627 = vshrl.u32 %v2626, 7
        %v2628 = vsub.s32 0, %v2627
        %v2629 = vrot.slane %v2604, %v2628
        %v2631 = vadd.f32 %v2624, %v2629
        %v2632 = vld [vmem:[%s12] sm:$0xff]
        %v2633 = vld [vmem:[%s12 + $0x8] sm:$0xff]
        %v2634 = vld [vmem:[%s12 + $0x10] sm:$0xff]
        %v2635 = vld [vmem:[%s12 + $0x18] sm:$0xff]
        %v2636 = vld [vmem:[%s13] sm:$0x1]
        %v2638 = vlaneseq
        %v2639 = vshrl.u32 %v2638, 7
        %v2640 = vsub.s32 0, %v2639
        %v2641 = vrot.slane %v2636, %v2640
        %v2644 = vsel %vm722, %v2631, 0
        %2646 = vmatprep.subr.mxu0 0.0
        %2647 = vmatpush1.msra.mxu0 %v2632
        %2648 = vmatprep.subr.mxu0 0.0
        %2649 = vmatpush1.msra.mxu0 %v2633
        %2650 = vmatprep.subr.mxu0 0.0
        %2651 = vmatpush1.msra.mxu0 %v2634
        %2652 = vmatprep.subr.mxu0 0.0
        %2653 = vmatpush1.msra.mxu0 %v2635
        %2654 = vmatprep.subr.mxu0 0.0
        %2655 = vmatpush1.msra.mxu0 0.0
        %2656 = vmatprep.subr.mxu0 0.0
        %2657 = vmatpush1.msra.mxu0 0.0
        %2658 = vmatprep.subr.mxu0 0.0
        %2659 = vmatpush1.msra.mxu0 0.0
        %2660 = vmatprep.subr.mxu0 0.0
        %2661 = vmatpush1.msra.mxu0 0.0
        %2662 = vmatprep.subr.mxu0 0.0
        %2663 = vmatpush1.msra.mxu0 0.0
        %2664 = vmatprep.subr.mxu0 0.0
        %2665 = vmatpush1.msra.mxu0 0.0
        %2666 = vmatprep.subr.mxu0 0.0
        %2667 = vmatpush1.msra.mxu0 0.0
        %2668 = vmatprep.subr.mxu0 0.0
        %2669 = vmatpush1.msra.mxu0 0.0
        %2670 = vmatprep.subr.mxu0 0.0
        %2671 = vmatpush1.msra.mxu0 0.0
        %2672 = vmatprep.subr.mxu0 0.0
        %2673 = vmatpush1.msra.mxu0 0.0
        %2674 = vmatprep.subr.mxu0 0.0
        %2675 = vmatpush1.msra.mxu0 0.0
        %2676 = vmatprep.subr.mxu0 0.0
        %2677 = vmatpush1.msra.mxu0 0.0
        %2678 = vmatprep.subr.mxu0 0.0
        %2679 = vmatpush1.msra.mxu0 0.0
        %2680 = vmatprep.subr.mxu0 0.0
        %2681 = vmatpush1.msra.mxu0 0.0
        %2682 = vmatprep.subr.mxu0 0.0
        %2683 = vmatpush1.msra.mxu0 0.0
        %2684 = vmatprep.subr.mxu0 0.0
        %2685 = vmatpush1.msra.mxu0 0.0
        %2686 = vmatprep.subr.mxu0 0.0
        %2687 = vmatpush1.msra.mxu0 0.0
        %2688 = vmatprep.subr.mxu0 0.0
        %2689 = vmatpush1.msra.mxu0 0.0
        %2690 = vmatprep.subr.mxu0 0.0
        %2691 = vmatpush1.msra.mxu0 0.0
        %2692 = vmatprep.subr.mxu0 0.0
        %2693 = vmatpush1.msra.mxu0 0.0
        %2694 = vmatprep.subr.mxu0 0.0
        %2695 = vmatpush1.msra.mxu0 0.0
        %2696 = vmatprep.subr.mxu0 0.0
        %2697 = vmatpush1.msra.mxu0 0.0
        %2698 = vmatprep.subr.mxu0 0.0
        %2699 = vmatpush1.msra.mxu0 0.0
        %2700 = vmatprep.subr.mxu0 0.0
        %2701 = vmatpush1.msra.mxu0 0.0
        %2702 = vmatprep.subr.mxu0 0.0
        %2703 = vmatpush1.msra.mxu0 0.0
        %2704 = vmatprep.subr.mxu0 0.0
        %2705 = vmatpush1.msra.mxu0 0.0
        %2706 = vmatprep.subr.mxu0 0.0
        %2707 = vmatpush1.msra.mxu0 0.0
        %2708 = vmatprep.subr.mxu0 0.0
        %2709 = vmatpush1.msra.mxu0 0.0
        %2710 = vmatprep.mubr.f32.mxu0 0.0
        %2711 = vmatmul.mubr.f32.gmra.mrb[0].mxu0 %v2644
        %v2712 = vpop.f32.mrb[0].mxu0
        %v2713 = vadd.f32 %v2641, %v2712
        %v2714 = vpop.f32.mrb[0].mxu0
        %2715 = vdwg.mxu0
        %v2716 = vmax.f32 %v2713, 0.0
        %v2717 = vld [vmem:[%s14] sm:$0xff]
        %v2718 = vld [vmem:[%s14 + $0x8] sm:$0xff]
        %v2719 = vld [vmem:[%s14 + $0x10] sm:$0xff]
        %v2720 = vld [vmem:[%s14 + $0x18] sm:$0xff]
        %v2721 = vld [vmem:[%s14 + $0x20] sm:$0xff]
        %v2722 = vld [vmem:[%s14 + $0x28] sm:$0xff]
        %v2723 = vld [vmem:[%s14 + $0x30] sm:$0xff]
        %v2724 = vld [vmem:[%s14 + $0x38] sm:$0xff]
        %v2725 = vld [vmem:[%s14 + $0x40] sm:$0xff]
        %v2726 = vld [vmem:[%s14 + $0x48] sm:$0xff]
        %v2727 = vld [vmem:[%s14 + $0x50] sm:$0xff]
        %v2728 = vld [vmem:[%s14 + $0x58] sm:$0xff]
        %v2729 = vld [vmem:[%s14 + $0x60] sm:$0xff]
        %v2730 = vld [vmem:[%s14 + $0x68] sm:$0xff]
        %v2731 = vld [vmem:[%s14 + $0x70] sm:$0xff]
        %v2732 = vld [vmem:[%s14 + $0x78] sm:$0xff]
        %2733 = vmatprep.subr.mxu0 0.0
        %2734 = vmatpush1.msra.mxu0 %v2717
        %2735 = vmatprep.subr.mxu0 0.0
        %2736 = vmatpush1.msra.mxu0 %v2718
        %2737 = vmatprep.subr.mxu0 0.0
        %2738 = vmatpush1.msra.mxu0 %v2719
        %2739 = vmatprep.subr.mxu0 0.0
        %2740 = vmatpush1.msra.mxu0 %v2720
        %2741 = vmatprep.subr.mxu0 0.0
        %2742 = vmatpush1.msra.mxu0 %v2721
        %2743 = vmatprep.subr.mxu0 0.0
        %2744 = vmatpush1.msra.mxu0 %v2722
        %2745 = vmatprep.subr.mxu0 0.0
        %2746 = vmatpush1.msra.mxu0 %v2723
        %2747 = vmatprep.subr.mxu0 0.0
        %2748 = vmatpush1.msra.mxu0 %v2724
        %2749 = vmatprep.subr.mxu0 0.0
        %2750 = vmatpush1.msra.mxu0 %v2725
        %2751 = vmatprep.subr.mxu0 0.0
        %2752 = vmatpush1.msra.mxu0 %v2726
        %2753 = vmatprep.subr.mxu0 0.0
        %2754 = vmatpush1.msra.mxu0 %v2727
        %2755 = vmatprep.subr.mxu0 0.0
        %2756 = vmatpush1.msra.mxu0 %v2728
        %2757 = vmatprep.subr.mxu0 0.0
        %2758 = vmatpush1.msra.mxu0 %v2729
        %2759 = vmatprep.subr.mxu0 0.0
        %2760 = vmatpush1.msra.mxu0 %v2730
        %2761 = vmatprep.subr.mxu0 0.0
        %2762 = vmatpush1.msra.mxu0 %v2731
        %2763 = vmatprep.subr.mxu0 0.0
        %2764 = vmatpush1.msra.mxu0 %v2732
        %2765 = vmatprep.subr.mxu0 0.0
        %2766 = vmatpush1.msra.mxu0 0.0
        %2767 = vmatprep.subr.mxu0 0.0
        %2768 = vmatpush1.msra.mxu0 0.0
        %2769 = vmatprep.subr.mxu0 0.0
        %2770 = vmatpush1.msra.mxu0 0.0
        %2771 = vmatprep.subr.mxu0 0.0
        %2772 = vmatpush1.msra.mxu0 0.0
        %2773 = vmatprep.subr.mxu0 0.0
        %2774 = vmatpush1.msra.mxu0 0.0
        %2775 = vmatprep.subr.mxu0 0.0
        %2776 = vmatpush1.msra.mxu0 0.0
        %2777 = vmatprep.subr.mxu0 0.0
        %2778 = vmatpush1.msra.mxu0 0.0
        %2779 = vmatprep.subr.mxu0 0.0
        %2780 = vmatpush1.msra.mxu0 0.0
        %2781 = vmatprep.subr.mxu0 0.0
        %2782 = vmatpush1.msra.mxu0 0.0
        %2783 = vmatprep.subr.mxu0 0.0
        %2784 = vmatpush1.msra.mxu0 0.0
        %2785 = vmatprep.subr.mxu0 0.0
        %2786 = vmatpush1.msra.mxu0 0.0
        %2787 = vmatprep.subr.mxu0 0.0
        %2788 = vmatpush1.msra.mxu0 0.0
        %2789 = vmatprep.subr.mxu0 0.0
        %2790 = vmatpush1.msra.mxu0 0.0
        %2791 = vmatprep.subr.mxu0 0.0
        %2792 = vmatpush1.msra.mxu0 0.0
        %2793 = vmatprep.subr.mxu0 0.0
        %2794 = vmatpush1.msra.mxu0 0.0
        %2795 = vmatprep.subr.mxu0 0.0
        %2796 = vmatpush1.msra.mxu0 0.0
        %2797 = vmatprep.mubr.f32.mxu0 0.0
        %2798 = vmatmul.mubr.f32.gmra.mrb[0].mxu0 %v2716
        %v2799 = vpop.f32.mrb[0].mxu0
        %v2800 = vadd.f32 0.0, %v2799
        %v2801 = vpop.f32.mrb[0].mxu0
        %2802 = vdwg.mxu0
        %v2803 = vadd.f32 %v2602, %v2800
        %v2804 = vld [vmem:[%s15] sm:$0x1]
        %v2806 = vlaneseq
        %v2807 = vshrl.u32 %v2806, 7
        %v2808 = vsub.s32 0, %v2807
        %v2809 = vrot.slane %v2804, %v2808
        %v2811 = vadd.f32 %v2803, %v2809
        %s2812 = scalar_lea.vmem %s3, 1
        %v2813 = vld [vmem:[%s2812] sm:$0x1]
        %s2814 = scalar_lea.vmem %s4, 1
        %v2815 = vld [vmem:[%s2814] sm:$0x1]
        %v2816 = vsel %vm722, %v2811, 0.0
        %2817 = vadd.xlane.f32.xlu0 %v2816
        %v2818 = vpop.xlane.xlu0 %2817
        %v2819 = vmul.f32 %v2818, %v726
        %v2820 = vsub.f32 %v2811, %v2819
        %v2821 = vmul.f32 %v2820, %v2820
        %v2822 = vsel %vm722, %v2821, 0.0
        %2823 = vadd.xlane.f32.xlu0 %v2822
        %v2824 = vpop.xlane.xlu0 %2823
        %v2825 = vmul.f32 %v2824, %v726
        %v2826 = vadd.f32 %v2825, 1e-05
        %v2827 = vrsqrt.pop %v2826
        %v2828 = vmul.f32 %v2820, %v2827
        %v2830 = vlaneseq
        %v2831 = vshrl.u32 %v2830, 7
        %v2832 = vsub.s32 0, %v2831
        %v2833 = vrot.slane %v2813, %v2832
        %v2835 = vmul.f32 %v2828, %v2833
        %v2837 = vlaneseq
        %v2838 = vshrl.u32 %v2837, 7
        %v2839 = vsub.s32 0, %v2838
        %v2840 = vrot.slane %v2815, %v2839
        %v2842 = vadd.f32 %v2835, %v2840
        %s2843 = scalar_lea.vmem %s5, 128
        %v2844 = vld [vmem:[%s2843] sm:$0xff]
        %v2845 = vld [vmem:[%s2843 + $0x8] sm:$0xff]
        %v2846 = vld [vmem:[%s2843 + $0x10] sm:$0xff]
        %v2847 = vld [vmem:[%s2843 + $0x18] sm:$0xff]
        %v2848 = vld [vmem:[%s2843 + $0x20] sm:$0xff]
        %v2849 = vld [vmem:[%s2843 + $0x28] sm:$0xff]
        %v2850 = vld [vmem:[%s2843 + $0x30] sm:$0xff]
        %v2851 = vld [vmem:[%s2843 + $0x38] sm:$0xff]
        %v2852 = vld [vmem:[%s2843 + $0x40] sm:$0xff]
        %v2853 = vld [vmem:[%s2843 + $0x48] sm:$0xff]
        %v2854 = vld [vmem:[%s2843 + $0x50] sm:$0xff]
        %v2855 = vld [vmem:[%s2843 + $0x58] sm:$0xff]
        %v2856 = vld [vmem:[%s2843 + $0x60] sm:$0xff]
        %v2857 = vld [vmem:[%s2843 + $0x68] sm:$0xff]
        %v2858 = vld [vmem:[%s2843 + $0x70] sm:$0xff]
        %v2859 = vld [vmem:[%s2843 + $0x78] sm:$0xff]
        %v2861 = vsel %vm722, %v2842, 0
        %2863 = vmatprep.subr.mxu0 0.0
        %2864 = vmatpush1.msra.mxu0 %v2844
        %2865 = vmatprep.subr.mxu0 0.0
        %2866 = vmatpush1.msra.mxu0 %v2845
        %2867 = vmatprep.subr.mxu0 0.0
        %2868 = vmatpush1.msra.mxu0 %v2846
        %2869 = vmatprep.subr.mxu0 0.0
        %2870 = vmatpush1.msra.mxu0 %v2847
        %2871 = vmatprep.subr.mxu0 0.0
        %2872 = vmatpush1.msra.mxu0 0.0
        %2873 = vmatprep.subr.mxu0 0.0
        %2874 = vmatpush1.msra.mxu0 0.0
        %2875 = vmatprep.subr.mxu0 0.0
        %2876 = vmatpush1.msra.mxu0 0.0
        %2877 = vmatprep.subr.mxu0 0.0
        %2878 = vmatpush1.msra.mxu0 0.0
        %2879 = vmatprep.subr.mxu0 0.0
        %2880 = vmatpush1.msra.mxu0 0.0
        %2881 = vmatprep.subr.mxu0 0.0
        %2882 = vmatpush1.msra.mxu0 0.0
        %2883 = vmatprep.subr.mxu0 0.0
        %2884 = vmatpush1.msra.mxu0 0.0
        %2885 = vmatprep.subr.mxu0 0.0
        %2886 = vmatpush1.msra.mxu0 0.0
        %2887 = vmatprep.subr.mxu0 0.0
        %2888 = vmatpush1.msra.mxu0 0.0
        %2889 = vmatprep.subr.mxu0 0.0
        %2890 = vmatpush1.msra.mxu0 0.0
        %2891 = vmatprep.subr.mxu0 0.0
        %2892 = vmatpush1.msra.mxu0 0.0
        %2893 = vmatprep.subr.mxu0 0.0
        %2894 = vmatpush1.msra.mxu0 0.0
        %2895 = vmatprep.subr.mxu0 0.0
        %2896 = vmatpush1.msra.mxu0 0.0
        %2897 = vmatprep.subr.mxu0 0.0
        %2898 = vmatpush1.msra.mxu0 0.0
        %2899 = vmatprep.subr.mxu0 0.0
        %2900 = vmatpush1.msra.mxu0 0.0
        %2901 = vmatprep.subr.mxu0 0.0
        %2902 = vmatpush1.msra.mxu0 0.0
        %2903 = vmatprep.subr.mxu0 0.0
        %2904 = vmatpush1.msra.mxu0 0.0
        %2905 = vmatprep.subr.mxu0 0.0
        %2906 = vmatpush1.msra.mxu0 0.0
        %2907 = vmatprep.subr.mxu0 0.0
        %2908 = vmatpush1.msra.mxu0 0.0
        %2909 = vmatprep.subr.mxu0 0.0
        %2910 = vmatpush1.msra.mxu0 0.0
        %2911 = vmatprep.subr.mxu0 0.0
        %2912 = vmatpush1.msra.mxu0 0.0
        %2913 = vmatprep.subr.mxu0 0.0
        %2914 = vmatpush1.msra.mxu0 0.0
        %2915 = vmatprep.subr.mxu0 0.0
        %2916 = vmatpush1.msra.mxu0 0.0
        %2917 = vmatprep.subr.mxu0 0.0
        %2918 = vmatpush1.msra.mxu0 0.0
        %2919 = vmatprep.subr.mxu0 0.0
        %2920 = vmatpush1.msra.mxu0 0.0
        %2921 = vmatprep.subr.mxu0 0.0
        %2922 = vmatpush1.msra.mxu0 0.0
        %2923 = vmatprep.subr.mxu0 0.0
        %2924 = vmatpush1.msra.mxu0 0.0
        %2925 = vmatprep.subr.mxu0 0.0
        %2926 = vmatpush1.msra.mxu0 0.0
        %2927 = vmatprep.mubr.f32.mxu0 0.0
        %2928 = vmatmul.mubr.f32.gmra.mrb[0].mxu0 %v2861
        %v2929 = vpop.f32.mrb[0].mxu0
        %v2930 = vadd.f32 0.0, %v2929
        %v2931 = vpop.f32.mrb[0].mxu0
        %2932 = vdwg.mxu0
        %2933 = vmatprep.subr.mxu0 0.0
        %2934 = vmatpush1.msra.mxu0 %v2848
        %2935 = vmatprep.subr.mxu0 0.0
        %2936 = vmatpush1.msra.mxu0 %v2849
        %2937 = vmatprep.subr.mxu0 0.0
        %2938 = vmatpush1.msra.mxu0 %v2850
        %2939 = vmatprep.subr.mxu0 0.0
        %2940 = vmatpush1.msra.mxu0 %v2851
        %2941 = vmatprep.subr.mxu0 0.0
        %2942 = vmatpush1.msra.mxu0 0.0
        %2943 = vmatprep.subr.mxu0 0.0
        %2944 = vmatpush1.msra.mxu0 0.0
        %2945 = vmatprep.subr.mxu0 0.0
        %2946 = vmatpush1.msra.mxu0 0.0
        %2947 = vmatprep.subr.mxu0 0.0
        %2948 = vmatpush1.msra.mxu0 0.0
        %2949 = vmatprep.subr.mxu0 0.0
        %2950 = vmatpush1.msra.mxu0 0.0
        %2951 = vmatprep.subr.mxu0 0.0
        %2952 = vmatpush1.msra.mxu0 0.0
        %2953 = vmatprep.subr.mxu0 0.0
        %2954 = vmatpush1.msra.mxu0 0.0
        %2955 = vmatprep.subr.mxu0 0.0
        %2956 = vmatpush1.msra.mxu0 0.0
        %2957 = vmatprep.subr.mxu0 0.0
        %2958 = vmatpush1.msra.mxu0 0.0
        %2959 = vmatprep.subr.mxu0 0.0
        %2960 = vmatpush1.msra.mxu0 0.0
        %2961 = vmatprep.subr.mxu0 0.0
        %2962 = vmatpush1.msra.mxu0 0.0
        %2963 = vmatprep.subr.mxu0 0.0
        %2964 = vmatpush1.msra.mxu0 0.0
        %2965 = vmatprep.subr.mxu0 0.0
        %2966 = vmatpush1.msra.mxu0 0.0
        %2967 = vmatprep.subr.mxu0 0.0
        %2968 = vmatpush1.msra.mxu0 0.0
        %2969 = vmatprep.subr.mxu0 0.0
        %2970 = vmatpush1.msra.mxu0 0.0
        %2971 = vmatprep.subr.mxu0 0.0
        %2972 = vmatpush1.msra.mxu0 0.0
        %2973 = vmatprep.subr.mxu0 0.0
        %2974 = vmatpush1.msra.mxu0 0.0
        %2975 = vmatprep.subr.mxu0 0.0
        %2976 = vmatpush1.msra.mxu0 0.0
        %2977 = vmatprep.subr.mxu0 0.0
        %2978 = vmatpush1.msra.mxu0 0.0
        %2979 = vmatprep.subr.mxu0 0.0
        %2980 = vmatpush1.msra.mxu0 0.0
        %2981 = vmatprep.subr.mxu0 0.0
        %2982 = vmatpush1.msra.mxu0 0.0
        %2983 = vmatprep.subr.mxu0 0.0
        %2984 = vmatpush1.msra.mxu0 0.0
        %2985 = vmatprep.subr.mxu0 0.0
        %2986 = vmatpush1.msra.mxu0 0.0
        %2987 = vmatprep.subr.mxu0 0.0
        %2988 = vmatpush1.msra.mxu0 0.0
        %2989 = vmatprep.subr.mxu0 0.0
        %2990 = vmatpush1.msra.mxu0 0.0
        %2991 = vmatprep.subr.mxu0 0.0
        %2992 = vmatpush1.msra.mxu0 0.0
        %2993 = vmatprep.subr.mxu0 0.0
        %2994 = vmatpush1.msra.mxu0 0.0
        %2995 = vmatprep.subr.mxu0 0.0
        %2996 = vmatpush1.msra.mxu0 0.0
        %2997 = vmatprep.mubr.f32.mxu0 0.0
        %2998 = vmatmul.mubr.f32.gmra.mrb[0].mxu0 %v2861
        %v2999 = vpop.f32.mrb[0].mxu0
        %v3000 = vadd.f32 0.0, %v2999
        %v3001 = vpop.f32.mrb[0].mxu0
        %3002 = vdwg.mxu0
        %3003 = vmatprep.subr.mxu0 0.0
        %3004 = vmatpush1.msra.mxu0 %v2852
        %3005 = vmatprep.subr.mxu0 0.0
        %3006 = vmatpush1.msra.mxu0 %v2853
        %3007 = vmatprep.subr.mxu0 0.0
        %3008 = vmatpush1.msra.mxu0 %v2854
        %3009 = vmatprep.subr.mxu0 0.0
        %3010 = vmatpush1.msra.mxu0 %v2855
        %3011 = vmatprep.subr.mxu0 0.0
        %3012 = vmatpush1.msra.mxu0 0.0
        %3013 = vmatprep.subr.mxu0 0.0
        %3014 = vmatpush1.msra.mxu0 0.0
        %3015 = vmatprep.subr.mxu0 0.0
        %3016 = vmatpush1.msra.mxu0 0.0
        %3017 = vmatprep.subr.mxu0 0.0
        %3018 = vmatpush1.msra.mxu0 0.0
        %3019 = vmatprep.subr.mxu0 0.0
        %3020 = vmatpush1.msra.mxu0 0.0
        %3021 = vmatprep.subr.mxu0 0.0
        %3022 = vmatpush1.msra.mxu0 0.0
        %3023 = vmatprep.subr.mxu0 0.0
        %3024 = vmatpush1.msra.mxu0 0.0
        %3025 = vmatprep.subr.mxu0 0.0
        %3026 = vmatpush1.msra.mxu0 0.0
        %3027 = vmatprep.subr.mxu0 0.0
        %3028 = vmatpush1.msra.mxu0 0.0
        %3029 = vmatprep.subr.mxu0 0.0
        %3030 = vmatpush1.msra.mxu0 0.0
        %3031 = vmatprep.subr.mxu0 0.0
        %3032 = vmatpush1.msra.mxu0 0.0
        %3033 = vmatprep.subr.mxu0 0.0
        %3034 = vmatpush1.msra.mxu0 0.0
        %3035 = vmatprep.subr.mxu0 0.0
        %3036 = vmatpush1.msra.mxu0 0.0
        %3037 = vmatprep.subr.mxu0 0.0
        %3038 = vmatpush1.msra.mxu0 0.0
        %3039 = vmatprep.subr.mxu0 0.0
        %3040 = vmatpush1.msra.mxu0 0.0
        %3041 = vmatprep.subr.mxu0 0.0
        %3042 = vmatpush1.msra.mxu0 0.0
        %3043 = vmatprep.subr.mxu0 0.0
        %3044 = vmatpush1.msra.mxu0 0.0
        %3045 = vmatprep.subr.mxu0 0.0
        %3046 = vmatpush1.msra.mxu0 0.0
        %3047 = vmatprep.subr.mxu0 0.0
        %3048 = vmatpush1.msra.mxu0 0.0
        %3049 = vmatprep.subr.mxu0 0.0
        %3050 = vmatpush1.msra.mxu0 0.0
        %3051 = vmatprep.subr.mxu0 0.0
        %3052 = vmatpush1.msra.mxu0 0.0
        %3053 = vmatprep.subr.mxu0 0.0
        %3054 = vmatpush1.msra.mxu0 0.0
        %3055 = vmatprep.subr.mxu0 0.0
        %3056 = vmatpush1.msra.mxu0 0.0
        %3057 = vmatprep.subr.mxu0 0.0
        %3058 = vmatpush1.msra.mxu0 0.0
        %3059 = vmatprep.subr.mxu0 0.0
        %3060 = vmatpush1.msra.mxu0 0.0
        %3061 = vmatprep.subr.mxu0 0.0
        %3062 = vmatpush1.msra.mxu0 0.0
        %3063 = vmatprep.subr.mxu0 0.0
        %3064 = vmatpush1.msra.mxu0 0.0
        %3065 = vmatprep.subr.mxu0 0.0
        %3066 = vmatpush1.msra.mxu0 0.0
        %3067 = vmatprep.mubr.f32.mxu0 0.0
        %3068 = vmatmul.mubr.f32.gmra.mrb[0].mxu0 %v2861
        %v3069 = vpop.f32.mrb[0].mxu0
        %v3070 = vadd.f32 0.0, %v3069
        %v3071 = vpop.f32.mrb[0].mxu0
        %3072 = vdwg.mxu0
        %3073 = vmatprep.subr.mxu0 0.0
        %3074 = vmatpush1.msra.mxu0 %v2856
        %3075 = vmatprep.subr.mxu0 0.0
        %3076 = vmatpush1.msra.mxu0 %v2857
        %3077 = vmatprep.subr.mxu0 0.0
        %3078 = vmatpush1.msra.mxu0 %v2858
        %3079 = vmatprep.subr.mxu0 0.0
        %3080 = vmatpush1.msra.mxu0 %v2859
        %3081 = vmatprep.subr.mxu0 0.0
        %3082 = vmatpush1.msra.mxu0 0.0
        %3083 = vmatprep.subr.mxu0 0.0
        %3084 = vmatpush1.msra.mxu0 0.0
        %3085 = vmatprep.subr.mxu0 0.0
        %3086 = vmatpush1.msra.mxu0 0.0
        %3087 = vmatprep.subr.mxu0 0.0
        %3088 = vmatpush1.msra.mxu0 0.0
        %3089 = vmatprep.subr.mxu0 0.0
        %3090 = vmatpush1.msra.mxu0 0.0
        %3091 = vmatprep.subr.mxu0 0.0
        %3092 = vmatpush1.msra.mxu0 0.0
        %3093 = vmatprep.subr.mxu0 0.0
        %3094 = vmatpush1.msra.mxu0 0.0
        %3095 = vmatprep.subr.mxu0 0.0
        %3096 = vmatpush1.msra.mxu0 0.0
        %3097 = vmatprep.subr.mxu0 0.0
        %3098 = vmatpush1.msra.mxu0 0.0
        %3099 = vmatprep.subr.mxu0 0.0
        %3100 = vmatpush1.msra.mxu0 0.0
        %3101 = vmatprep.subr.mxu0 0.0
        %3102 = vmatpush1.msra.mxu0 0.0
        %3103 = vmatprep.subr.mxu0 0.0
        %3104 = vmatpush1.msra.mxu0 0.0
        %3105 = vmatprep.subr.mxu0 0.0
        %3106 = vmatpush1.msra.mxu0 0.0
        %3107 = vmatprep.subr.mxu0 0.0
        %3108 = vmatpush1.msra.mxu0 0.0
        %3109 = vmatprep.subr.mxu0 0.0
        %3110 = vmatpush1.msra.mxu0 0.0
        %3111 = vmatprep.subr.mxu0 0.0
        %3112 = vmatpush1.msra.mxu0 0.0
        %3113 = vmatprep.subr.mxu0 0.0
        %3114 = vmatpush1.msra.mxu0 0.0
        %3115 = vmatprep.subr.mxu0 0.0
        %3116 = vmatpush1.msra.mxu0 0.0
        %3117 = vmatprep.subr.mxu0 0.0
        %3118 = vmatpush1.msra.mxu0 0.0
        %3119 = vmatprep.subr.mxu0 0.0
        %3120 = vmatpush1.msra.mxu0 0.0
        %3121 = vmatprep.subr.mxu0 0.0
        %3122 = vmatpush1.msra.mxu0 0.0
        %3123 = vmatprep.subr.mxu0 0.0
        %3124 = vmatpush1.msra.mxu0 0.0
        %3125 = vmatprep.subr.mxu0 0.0
        %3126 = vmatpush1.msra.mxu0 0.0
        %3127 = vmatprep.subr.mxu0 0.0
        %3128 = vmatpush1.msra.mxu0 0.0
        %3129 = vmatprep.subr.mxu0 0.0
        %3130 = vmatpush1.msra.mxu0 0.0
        %3131 = vmatprep.subr.mxu0 0.0
        %3132 = vmatpush1.msra.mxu0 0.0
        %3133 = vmatprep.subr.mxu0 0.0
        %3134 = vmatpush1.msra.mxu0 0.0
        %3135 = vmatprep.subr.mxu0 0.0
        %3136 = vmatpush1.msra.mxu0 0.0
        %3137 = vmatprep.mubr.f32.mxu0 0.0
        %3138 = vmatmul.mubr.f32.gmra.mrb[0].mxu0 %v2861
        %v3139 = vpop.f32.mrb[0].mxu0
        %v3140 = vadd.f32 0.0, %v3139
        %v3141 = vpop.f32.mrb[0].mxu0
        %3142 = vdwg.mxu0
        %s3143 = scalar_lea.vmem %s6, 128
        %v3144 = vld [vmem:[%s3143] sm:$0xff]
        %v3145 = vld [vmem:[%s3143 + $0x8] sm:$0xff]
        %v3146 = vld [vmem:[%s3143 + $0x10] sm:$0xff]
        %v3147 = vld [vmem:[%s3143 + $0x18] sm:$0xff]
        %v3148 = vld [vmem:[%s3143 + $0x20] sm:$0xff]
        %v3149 = vld [vmem:[%s3143 + $0x28] sm:$0xff]
        %v3150 = vld [vmem:[%s3143 + $0x30] sm:$0xff]
        %v3151 = vld [vmem:[%s3143 + $0x38] sm:$0xff]
        %v3152 = vld [vmem:[%s3143 + $0x40] sm:$0xff]
        %v3153 = vld [vmem:[%s3143 + $0x48] sm:$0xff]
        %v3154 = vld [vmem:[%s3143 + $0x50] sm:$0xff]
        %v3155 = vld [vmem:[%s3143 + $0x58] sm:$0xff]
        %v3156 = vld [vmem:[%s3143 + $0x60] sm:$0xff]
        %v3157 = vld [vmem:[%s3143 + $0x68] sm:$0xff]
        %v3158 = vld [vmem:[%s3143 + $0x70] sm:$0xff]
        %v3159 = vld [vmem:[%s3143 + $0x78] sm:$0xff]
        %3160 = vmatprep.subr.mxu0 0.0
        %3161 = vmatpush1.msra.mxu0 %v3144
        %3162 = vmatprep.subr.mxu0 0.0
        %3163 = vmatpush1.msra.mxu0 %v3145
        %3164 = vmatprep.subr.mxu0 0.0
        %3165 = vmatpush1.msra.mxu0 %v3146
        %3166 = vmatprep.subr.mxu0 0.0
        %3167 = vmatpush1.msra.mxu0 %v3147
        %3168 = vmatprep.subr.mxu0 0.0
        %3169 = vmatpush1.msra.mxu0 0.0
        %3170 = vmatprep.subr.mxu0 0.0
        %3171 = vmatpush1.msra.mxu0 0.0
        %3172 = vmatprep.subr.mxu0 0.0
        %3173 = vmatpush1.msra.mxu0 0.0
        %3174 = vmatprep.subr.mxu0 0.0
        %3175 = vmatpush1.msra.mxu0 0.0
        %3176 = vmatprep.subr.mxu0 0.0
        %3177 = vmatpush1.msra.mxu0 0.0
        %3178 = vmatprep.subr.mxu0 0.0
        %3179 = vmatpush1.msra.mxu0 0.0
        %3180 = vmatprep.subr.mxu0 0.0
        %3181 = vmatpush1.msra.mxu0 0.0
        %3182 = vmatprep.subr.mxu0 0.0
        %3183 = vmatpush1.msra.mxu0 0.0
        %3184 = vmatprep.subr.mxu0 0.0
        %3185 = vmatpush1.msra.mxu0 0.0
        %3186 = vmatprep.subr.mxu0 0.0
        %3187 = vmatpush1.msra.mxu0 0.0
        %3188 = vmatprep.subr.mxu0 0.0
        %3189 = vmatpush1.msra.mxu0 0.0
        %3190 = vmatprep.subr.mxu0 0.0
        %3191 = vmatpush1.msra.mxu0 0.0
        %3192 = vmatprep.subr.mxu0 0.0
        %3193 = vmatpush1.msra.mxu0 0.0
        %3194 = vmatprep.subr.mxu0 0.0
        %3195 = vmatpush1.msra.mxu0 0.0
        %3196 = vmatprep.subr.mxu0 0.0
        %3197 = vmatpush1.msra.mxu0 0.0
        %3198 = vmatprep.subr.mxu0 0.0
        %3199 = vmatpush1.msra.mxu0 0.0
        %3200 = vmatprep.subr.mxu0 0.0
        %3201 = vmatpush1.msra.mxu0 0.0
        %3202 = vmatprep.subr.mxu0 0.0
        %3203 = vmatpush1.msra.mxu0 0.0
        %3204 = vmatprep.subr.mxu0 0.0
        %3205 = vmatpush1.msra.mxu0 0.0
        %3206 = vmatprep.subr.mxu0 0.0
        %3207 = vmatpush1.msra.mxu0 0.0
        %3208 = vmatprep.subr.mxu0 0.0
        %3209 = vmatpush1.msra.mxu0 0.0
        %3210 = vmatprep.subr.mxu0 0.0
        %3211 = vmatpush1.msra.mxu0 0.0
        %3212 = vmatprep.subr.mxu0 0.0
        %3213 = vmatpush1.msra.mxu0 0.0
        %3214 = vmatprep.subr.mxu0 0.0
        %3215 = vmatpush1.msra.mxu0 0.0
        %3216 = vmatprep.subr.mxu0 0.0
        %3217 = vmatpush1.msra.mxu0 0.0
        %3218 = vmatprep.subr.mxu0 0.0
        %3219 = vmatpush1.msra.mxu0 0.0
        %3220 = vmatprep.subr.mxu0 0.0
        %3221 = vmatpush1.msra.mxu0 0.0
        %3222 = vmatprep.subr.mxu0 0.0
        %3223 = vmatpush1.msra.mxu0 0.0
        %3224 = vmatprep.mubr.f32.mxu0 0.0
        %3225 = vmatmul.mubr.f32.gmra.mrb[0].mxu0 %v2861
        %v3226 = vpop.f32.mrb[0].mxu0
        %v3227 = vadd.f32 0.0, %v3226
        %v3228 = vpop.f32.mrb[0].mxu0
        %3229 = vdwg.mxu0
        %3230 = vmatprep.subr.mxu0 0.0
        %3231 = vmatpush1.msra.mxu0 %v3148
        %3232 = vmatprep.subr.mxu0 0.0
        %3233 = vmatpush1.msra.mxu0 %v3149
        %3234 = vmatprep.subr.mxu0 0.0
        %3235 = vmatpush1.msra.mxu0 %v3150
        %3236 = vmatprep.subr.mxu0 0.0
        %3237 = vmatpush1.msra.mxu0 %v3151
        %3238 = vmatprep.subr.mxu0 0.0
        %3239 = vmatpush1.msra.mxu0 0.0
        %3240 = vmatprep.subr.mxu0 0.0
        %3241 = vmatpush1.msra.mxu0 0.0
        %3242 = vmatprep.subr.mxu0 0.0
        %3243 = vmatpush1.msra.mxu0 0.0
        %3244 = vmatprep.subr.mxu0 0.0
        %3245 = vmatpush1.msra.mxu0 0.0
        %3246 = vmatprep.subr.mxu0 0.0
        %3247 = vmatpush1.msra.mxu0 0.0
        %3248 = vmatprep.subr.mxu0 0.0
        %3249 = vmatpush1.msra.mxu0 0.0
        %3250 = vmatprep.subr.mxu0 0.0
        %3251 = vmatpush1.msra.mxu0 0.0
        %3252 = vmatprep.subr.mxu0 0.0
        %3253 = vmatpush1.msra.mxu0 0.0
        %3254 = vmatprep.subr.mxu0 0.0
        %3255 = vmatpush1.msra.mxu0 0.0
        %3256 = vmatprep.subr.mxu0 0.0
        %3257 = vmatpush1.msra.mxu0 0.0
        %3258 = vmatprep.subr.mxu0 0.0
        %3259 = vmatpush1.msra.mxu0 0.0
        %3260 = vmatprep.subr.mxu0 0.0
        %3261 = vmatpush1.msra.mxu0 0.0
        %3262 = vmatprep.subr.mxu0 0.0
        %3263 = vmatpush1.msra.mxu0 0.0
        %3264 = vmatprep.subr.mxu0 0.0
        %3265 = vmatpush1.msra.mxu0 0.0
        %3266 = vmatprep.subr.mxu0 0.0
        %3267 = vmatpush1.msra.mxu0 0.0
        %3268 = vmatprep.subr.mxu0 0.0
        %3269 = vmatpush1.msra.mxu0 0.0
        %3270 = vmatprep.subr.mxu0 0.0
        %3271 = vmatpush1.msra.mxu0 0.0
        %3272 = vmatprep.subr.mxu0 0.0
        %3273 = vmatpush1.msra.mxu0 0.0
        %3274 = vmatprep.subr.mxu0 0.0
        %3275 = vmatpush1.msra.mxu0 0.0
        %3276 = vmatprep.subr.mxu0 0.0
        %3277 = vmatpush1.msra.mxu0 0.0
        %3278 = vmatprep.subr.mxu0 0.0
        %3279 = vmatpush1.msra.mxu0 0.0
        %3280 = vmatprep.subr.mxu0 0.0
        %3281 = vmatpush1.msra.mxu0 0.0
        %3282 = vmatprep.subr.mxu0 0.0
        %3283 = vmatpush1.msra.mxu0 0.0
        %3284 = vmatprep.subr.mxu0 0.0
        %3285 = vmatpush1.msra.mxu0 0.0
        %3286 = vmatprep.subr.mxu0 0.0
        %3287 = vmatpush1.msra.mxu0 0.0
        %3288 = vmatprep.subr.mxu0 0.0
        %3289 = vmatpush1.msra.mxu0 0.0
        %3290 = vmatprep.subr.mxu0 0.0
        %3291 = vmatpush1.msra.mxu0 0.0
        %3292 = vmatprep.subr.mxu0 0.0
        %3293 = vmatpush1.msra.mxu0 0.0
        %3294 = vmatprep.mubr.f32.mxu0 0.0
        %3295 = vmatmul.mubr.f32.gmra.mrb[0].mxu0 %v2861
        %v3296 = vpop.f32.mrb[0].mxu0
        %v3297 = vadd.f32 0.0, %v3296
        %v3298 = vpop.f32.mrb[0].mxu0
        %3299 = vdwg.mxu0
        %3300 = vmatprep.subr.mxu0 0.0
        %3301 = vmatpush1.msra.mxu0 %v3152
        %3302 = vmatprep.subr.mxu0 0.0
        %3303 = vmatpush1.msra.mxu0 %v3153
        %3304 = vmatprep.subr.mxu0 0.0
        %3305 = vmatpush1.msra.mxu0 %v3154
        %3306 = vmatprep.subr.mxu0 0.0
        %3307 = vmatpush1.msra.mxu0 %v3155
        %3308 = vmatprep.subr.mxu0 0.0
        %3309 = vmatpush1.msra.mxu0 0.0
        %3310 = vmatprep.subr.mxu0 0.0
        %3311 = vmatpush1.msra.mxu0 0.0
        %3312 = vmatprep.subr.mxu0 0.0
        %3313 = vmatpush1.msra.mxu0 0.0
        %3314 = vmatprep.subr.mxu0 0.0
        %3315 = vmatpush1.msra.mxu0 0.0
        %3316 = vmatprep.subr.mxu0 0.0
        %3317 = vmatpush1.msra.mxu0 0.0
        %3318 = vmatprep.subr.mxu0 0.0
        %3319 = vmatpush1.msra.mxu0 0.0
        %3320 = vmatprep.subr.mxu0 0.0
        %3321 = vmatpush1.msra.mxu0 0.0
        %3322 = vmatprep.subr.mxu0 0.0
        %3323 = vmatpush1.msra.mxu0 0.0
        %3324 = vmatprep.subr.mxu0 0.0
        %3325 = vmatpush1.msra.mxu0 0.0
        %3326 = vmatprep.subr.mxu0 0.0
        %3327 = vmatpush1.msra.mxu0 0.0
        %3328 = vmatprep.subr.mxu0 0.0
        %3329 = vmatpush1.msra.mxu0 0.0
        %3330 = vmatprep.subr.mxu0 0.0
        %3331 = vmatpush1.msra.mxu0 0.0
        %3332 = vmatprep.subr.mxu0 0.0
        %3333 = vmatpush1.msra.mxu0 0.0
        %3334 = vmatprep.subr.mxu0 0.0
        %3335 = vmatpush1.msra.mxu0 0.0
        %3336 = vmatprep.subr.mxu0 0.0
        %3337 = vmatpush1.msra.mxu0 0.0
        %3338 = vmatprep.subr.mxu0 0.0
        %3339 = vmatpush1.msra.mxu0 0.0
        %3340 = vmatprep.subr.mxu0 0.0
        %3341 = vmatpush1.msra.mxu0 0.0
        %3342 = vmatprep.subr.mxu0 0.0
        %3343 = vmatpush1.msra.mxu0 0.0
        %3344 = vmatprep.subr.mxu0 0.0
        %3345 = vmatpush1.msra.mxu0 0.0
        %3346 = vmatprep.subr.mxu0 0.0
        %3347 = vmatpush1.msra.mxu0 0.0
        %3348 = vmatprep.subr.mxu0 0.0
        %3349 = vmatpush1.msra.mxu0 0.0
        %3350 = vmatprep.subr.mxu0 0.0
        %3351 = vmatpush1.msra.mxu0 0.0
        %3352 = vmatprep.subr.mxu0 0.0
        %3353 = vmatpush1.msra.mxu0 0.0
        %3354 = vmatprep.subr.mxu0 0.0
        %3355 = vmatpush1.msra.mxu0 0.0
        %3356 = vmatprep.subr.mxu0 0.0
        %3357 = vmatpush1.msra.mxu0 0.0
        %3358 = vmatprep.subr.mxu0 0.0
        %3359 = vmatpush1.msra.mxu0 0.0
        %3360 = vmatprep.subr.mxu0 0.0
        %3361 = vmatpush1.msra.mxu0 0.0
        %3362 = vmatprep.subr.mxu0 0.0
        %3363 = vmatpush1.msra.mxu0 0.0
        %3364 = vmatprep.mubr.f32.mxu0 0.0
        %3365 = vmatmul.mubr.f32.gmra.mrb[0].mxu0 %v2861
        %v3366 = vpop.f32.mrb[0].mxu0
        %v3367 = vadd.f32 0.0, %v3366
        %v3368 = vpop.f32.mrb[0].mxu0
        %3369 = vdwg.mxu0
        %3370 = vmatprep.subr.mxu0 0.0
        %3371 = vmatpush1.msra.mxu0 %v3156
        %3372 = vmatprep.subr.mxu0 0.0
        %3373 = vmatpush1.msra.mxu0 %v3157
        %3374 = vmatprep.subr.mxu0 0.0
        %3375 = vmatpush1.msra.mxu0 %v3158
        %3376 = vmatprep.subr.mxu0 0.0
        %3377 = vmatpush1.msra.mxu0 %v3159
        %3378 = vmatprep.subr.mxu0 0.0
        %3379 = vmatpush1.msra.mxu0 0.0
        %3380 = vmatprep.subr.mxu0 0.0
        %3381 = vmatpush1.msra.mxu0 0.0
        %3382 = vmatprep.subr.mxu0 0.0
        %3383 = vmatpush1.msra.mxu0 0.0
        %3384 = vmatprep.subr.mxu0 0.0
        %3385 = vmatpush1.msra.mxu0 0.0
        %3386 = vmatprep.subr.mxu0 0.0
        %3387 = vmatpush1.msra.mxu0 0.0
        %3388 = vmatprep.subr.mxu0 0.0
        %3389 = vmatpush1.msra.mxu0 0.0
        %3390 = vmatprep.subr.mxu0 0.0
        %3391 = vmatpush1.msra.mxu0 0.0
        %3392 = vmatprep.subr.mxu0 0.0
        %3393 = vmatpush1.msra.mxu0 0.0
        %3394 = vmatprep.subr.mxu0 0.0
        %3395 = vmatpush1.msra.mxu0 0.0
        %3396 = vmatprep.subr.mxu0 0.0
        %3397 = vmatpush1.msra.mxu0 0.0
        %3398 = vmatprep.subr.mxu0 0.0
        %3399 = vmatpush1.msra.mxu0 0.0
        %3400 = vmatprep.subr.mxu0 0.0
        %3401 = vmatpush1.msra.mxu0 0.0
        %3402 = vmatprep.subr.mxu0 0.0
        %3403 = vmatpush1.msra.mxu0 0.0
        %3404 = vmatprep.subr.mxu0 0.0
        %3405 = vmatpush1.msra.mxu0 0.0
        %3406 = vmatprep.subr.mxu0 0.0
        %3407 = vmatpush1.msra.mxu0 0.0
        %3408 = vmatprep.subr.mxu0 0.0
        %3409 = vmatpush1.msra.mxu0 0.0
        %3410 = vmatprep.subr.mxu0 0.0
        %3411 = vmatpush1.msra.mxu0 0.0
        %3412 = vmatprep.subr.mxu0 0.0
        %3413 = vmatpush1.msra.mxu0 0.0
        %3414 = vmatprep.subr.mxu0 0.0
        %3415 = vmatpush1.msra.mxu0 0.0
        %3416 = vmatprep.subr.mxu0 0.0
        %3417 = vmatpush1.msra.mxu0 0.0
        %3418 = vmatprep.subr.mxu0 0.0
        %3419 = vmatpush1.msra.mxu0 0.0
        %3420 = vmatprep.subr.mxu0 0.0
        %3421 = vmatpush1.msra.mxu0 0.0
        %3422 = vmatprep.subr.mxu0 0.0
        %3423 = vmatpush1.msra.mxu0 0.0
        %3424 = vmatprep.subr.mxu0 0.0
        %3425 = vmatpush1.msra.mxu0 0.0
        %3426 = vmatprep.subr.mxu0 0.0
        %3427 = vmatpush1.msra.mxu0 0.0
        %3428 = vmatprep.subr.mxu0 0.0
        %3429 = vmatpush1.msra.mxu0 0.0
        %3430 = vmatprep.subr.mxu0 0.0
        %3431 = vmatpush1.msra.mxu0 0.0
        %3432 = vmatprep.subr.mxu0 0.0
        %3433 = vmatpush1.msra.mxu0 0.0
        %3434 = vmatprep.mubr.f32.mxu0 0.0
        %3435 = vmatmul.mubr.f32.gmra.mrb[0].mxu0 %v2861
        %v3436 = vpop.f32.mrb[0].mxu0
        %v3437 = vadd.f32 0.0, %v3436
        %v3438 = vpop.f32.mrb[0].mxu0
        %3439 = vdwg.mxu0
        %s3440 = scalar_lea.vmem %s7, 128
        %v3441 = vld [vmem:[%s3440] sm:$0xff]
        %v3442 = vld [vmem:[%s3440 + $0x8] sm:$0xff]
        %v3443 = vld [vmem:[%s3440 + $0x10] sm:$0xff]
        %v3444 = vld [vmem:[%s3440 + $0x18] sm:$0xff]
        %v3445 = vld [vmem:[%s3440 + $0x20] sm:$0xff]
        %v3446 = vld [vmem:[%s3440 + $0x28] sm:$0xff]
        %v3447 = vld [vmem:[%s3440 + $0x30] sm:$0xff]
        %v3448 = vld [vmem:[%s3440 + $0x38] sm:$0xff]
        %v3449 = vld [vmem:[%s3440 + $0x40] sm:$0xff]
        %v3450 = vld [vmem:[%s3440 + $0x48] sm:$0xff]
        %v3451 = vld [vmem:[%s3440 + $0x50] sm:$0xff]
        %v3452 = vld [vmem:[%s3440 + $0x58] sm:$0xff]
        %v3453 = vld [vmem:[%s3440 + $0x60] sm:$0xff]
        %v3454 = vld [vmem:[%s3440 + $0x68] sm:$0xff]
        %v3455 = vld [vmem:[%s3440 + $0x70] sm:$0xff]
        %v3456 = vld [vmem:[%s3440 + $0x78] sm:$0xff]
        %3457 = vmatprep.subr.mxu0 0.0
        %3458 = vmatpush1.msra.mxu0 %v3441
        %3459 = vmatprep.subr.mxu0 0.0
        %3460 = vmatpush1.msra.mxu0 %v3442
        %3461 = vmatprep.subr.mxu0 0.0
        %3462 = vmatpush1.msra.mxu0 %v3443
        %3463 = vmatprep.subr.mxu0 0.0
        %3464 = vmatpush1.msra.mxu0 %v3444
        %3465 = vmatprep.subr.mxu0 0.0
        %3466 = vmatpush1.msra.mxu0 0.0
        %3467 = vmatprep.subr.mxu0 0.0
        %3468 = vmatpush1.msra.mxu0 0.0
        %3469 = vmatprep.subr.mxu0 0.0
        %3470 = vmatpush1.msra.mxu0 0.0
        %3471 = vmatprep.subr.mxu0 0.0
        %3472 = vmatpush1.msra.mxu0 0.0
        %3473 = vmatprep.subr.mxu0 0.0
        %3474 = vmatpush1.msra.mxu0 0.0
        %3475 = vmatprep.subr.mxu0 0.0
        %3476 = vmatpush1.msra.mxu0 0.0
        %3477 = vmatprep.subr.mxu0 0.0
        %3478 = vmatpush1.msra.mxu0 0.0
        %3479 = vmatprep.subr.mxu0 0.0
        %3480 = vmatpush1.msra.mxu0 0.0
        %3481 = vmatprep.subr.mxu0 0.0
        %3482 = vmatpush1.msra.mxu0 0.0
        %3483 = vmatprep.subr.mxu0 0.0
        %3484 = vmatpush1.msra.mxu0 0.0
        %3485 = vmatprep.subr.mxu0 0.0
        %3486 = vmatpush1.msra.mxu0 0.0
        %3487 = vmatprep.subr.mxu0 0.0
        %3488 = vmatpush1.msra.mxu0 0.0
        %3489 = vmatprep.subr.mxu0 0.0
        %3490 = vmatpush1.msra.mxu0 0.0
        %3491 = vmatprep.subr.mxu0 0.0
        %3492 = vmatpush1.msra.mxu0 0.0
        %3493 = vmatprep.subr.mxu0 0.0
        %3494 = vmatpush1.msra.mxu0 0.0
        %3495 = vmatprep.subr.mxu0 0.0
        %3496 = vmatpush1.msra.mxu0 0.0
        %3497 = vmatprep.subr.mxu0 0.0
        %3498 = vmatpush1.msra.mxu0 0.0
        %3499 = vmatprep.subr.mxu0 0.0
        %3500 = vmatpush1.msra.mxu0 0.0
        %3501 = vmatprep.subr.mxu0 0.0
        %3502 = vmatpush1.msra.mxu0 0.0
        %3503 = vmatprep.subr.mxu0 0.0
        %3504 = vmatpush1.msra.mxu0 0.0
        %3505 = vmatprep.subr.mxu0 0.0
        %3506 = vmatpush1.msra.mxu0 0.0
        %3507 = vmatprep.subr.mxu0 0.0
        %3508 = vmatpush1.msra.mxu0 0.0
        %3509 = vmatprep.subr.mxu0 0.0
        %3510 = vmatpush1.msra.mxu0 0.0
        %3511 = vmatprep.subr.mxu0 0.0
        %3512 = vmatpush1.msra.mxu0 0.0
        %3513 = vmatprep.subr.mxu0 0.0
        %3514 = vmatpush1.msra.mxu0 0.0
        %3515 = vmatprep.subr.mxu0 0.0
        %3516 = vmatpush1.msra.mxu0 0.0
        %3517 = vmatprep.subr.mxu0 0.0
        %3518 = vmatpush1.msra.mxu0 0.0
        %3519 = vmatprep.subr.mxu0 0.0
        %3520 = vmatpush1.msra.mxu0 0.0
        %3521 = vmatprep.mubr.f32.mxu0 0.0
        %3522 = vmatmul.mubr.f32.gmra.mrb[0].mxu0 %v2861
        %v3523 = vpop.f32.mrb[0].mxu0
        %v3524 = vadd.f32 0.0, %v3523
        %v3525 = vpop.f32.mrb[0].mxu0
        %3526 = vdwg.mxu0
        %3527 = vmatprep.subr.mxu0 0.0
        %3528 = vmatpush1.msra.mxu0 %v3445
        %3529 = vmatprep.subr.mxu0 0.0
        %3530 = vmatpush1.msra.mxu0 %v3446
        %3531 = vmatprep.subr.mxu0 0.0
        %3532 = vmatpush1.msra.mxu0 %v3447
        %3533 = vmatprep.subr.mxu0 0.0
        %3534 = vmatpush1.msra.mxu0 %v3448
        %3535 = vmatprep.subr.mxu0 0.0
        %3536 = vmatpush1.msra.mxu0 0.0
        %3537 = vmatprep.subr.mxu0 0.0
        %3538 = vmatpush1.msra.mxu0 0.0
        %3539 = vmatprep.subr.mxu0 0.0
        %3540 = vmatpush1.msra.mxu0 0.0
        %3541 = vmatprep.subr.mxu0 0.0
        %3542 = vmatpush1.msra.mxu0 0.0
        %3543 = vmatprep.subr.mxu0 0.0
        %3544 = vmatpush1.msra.mxu0 0.0
        %3545 = vmatprep.subr.mxu0 0.0
        %3546 = vmatpush1.msra.mxu0 0.0
        %3547 = vmatprep.subr.mxu0 0.0
        %3548 = vmatpush1.msra.mxu0 0.0
        %3549 = vmatprep.subr.mxu0 0.0
        %3550 = vmatpush1.msra.mxu0 0.0
        %3551 = vmatprep.subr.mxu0 0.0
        %3552 = vmatpush1.msra.mxu0 0.0
        %3553 = vmatprep.subr.mxu0 0.0
        %3554 = vmatpush1.msra.mxu0 0.0
        %3555 = vmatprep.subr.mxu0 0.0
        %3556 = vmatpush1.msra.mxu0 0.0
        %3557 = vmatprep.subr.mxu0 0.0
        %3558 = vmatpush1.msra.mxu0 0.0
        %3559 = vmatprep.subr.mxu0 0.0
        %3560 = vmatpush1.msra.mxu0 0.0
        %3561 = vmatprep.subr.mxu0 0.0
        %3562 = vmatpush1.msra.mxu0 0.0
        %3563 = vmatprep.subr.mxu0 0.0
        %3564 = vmatpush1.msra.mxu0 0.0
        %3565 = vmatprep.subr.mxu0 0.0
        %3566 = vmatpush1.msra.mxu0 0.0
        %3567 = vmatprep.subr.mxu0 0.0
        %3568 = vmatpush1.msra.mxu0 0.0
        %3569 = vmatprep.subr.mxu0 0.0
        %3570 = vmatpush1.msra.mxu0 0.0
        %3571 = vmatprep.subr.mxu0 0.0
        %3572 = vmatpush1.msra.mxu0 0.0
        %3573 = vmatprep.subr.mxu0 0.0
        %3574 = vmatpush1.msra.mxu0 0.0
        %3575 = vmatprep.subr.mxu0 0.0
        %3576 = vmatpush1.msra.mxu0 0.0
        %3577 = vmatprep.subr.mxu0 0.0
        %3578 = vmatpush1.msra.mxu0 0.0
        %3579 = vmatprep.subr.mxu0 0.0
        %3580 = vmatpush1.msra.mxu0 0.0
        %3581 = vmatprep.subr.mxu0 0.0
        %3582 = vmatpush1.msra.mxu0 0.0
        %3583 = vmatprep.subr.mxu0 0.0
        %3584 = vmatpush1.msra.mxu0 0.0
        %3585 = vmatprep.subr.mxu0 0.0
        %3586 = vmatpush1.msra.mxu0 0.0
        %3587 = vmatprep.subr.mxu0 0.0
        %3588 = vmatpush1.msra.mxu0 0.0
        %3589 = vmatprep.subr.mxu0 0.0
        %3590 = vmatpush1.msra.mxu0 0.0
        %3591 = vmatprep.mubr.f32.mxu0 0.0
        %3592 = vmatmul.mubr.f32.gmra.mrb[0].mxu0 %v2861
        %v3593 = vpop.f32.mrb[0].mxu0
        %v3594 = vadd.f32 0.0, %v3593
        %v3595 = vpop.f32.mrb[0].mxu0
        %3596 = vdwg.mxu0
        %3597 = vmatprep.subr.mxu0 0.0
        %3598 = vmatpush1.msra.mxu0 %v3449
        %3599 = vmatprep.subr.mxu0 0.0
        %3600 = vmatpush1.msra.mxu0 %v3450
        %3601 = vmatprep.subr.mxu0 0.0
        %3602 = vmatpush1.msra.mxu0 %v3451
        %3603 = vmatprep.subr.mxu0 0.0
        %3604 = vmatpush1.msra.mxu0 %v3452
        %3605 = vmatprep.subr.mxu0 0.0
        %3606 = vmatpush1.msra.mxu0 0.0
        %3607 = vmatprep.subr.mxu0 0.0
        %3608 = vmatpush1.msra.mxu0 0.0
        %3609 = vmatprep.subr.mxu0 0.0
        %3610 = vmatpush1.msra.mxu0 0.0
        %3611 = vmatprep.subr.mxu0 0.0
        %3612 = vmatpush1.msra.mxu0 0.0
        %3613 = vmatprep.subr.mxu0 0.0
        %3614 = vmatpush1.msra.mxu0 0.0
        %3615 = vmatprep.subr.mxu0 0.0
        %3616 = vmatpush1.msra.mxu0 0.0
        %3617 = vmatprep.subr.mxu0 0.0
        %3618 = vmatpush1.msra.mxu0 0.0
        %3619 = vmatprep.subr.mxu0 0.0
        %3620 = vmatpush1.msra.mxu0 0.0
        %3621 = vmatprep.subr.mxu0 0.0
        %3622 = vmatpush1.msra.mxu0 0.0
        %3623 = vmatprep.subr.mxu0 0.0
        %3624 = vmatpush1.msra.mxu0 0.0
        %3625 = vmatprep.subr.mxu0 0.0
        %3626 = vmatpush1.msra.mxu0 0.0
        %3627 = vmatprep.subr.mxu0 0.0
        %3628 = vmatpush1.msra.mxu0 0.0
        %3629 = vmatprep.subr.mxu0 0.0
        %3630 = vmatpush1.msra.mxu0 0.0
        %3631 = vmatprep.subr.mxu0 0.0
        %3632 = vmatpush1.msra.mxu0 0.0
        %3633 = vmatprep.subr.mxu0 0.0
        %3634 = vmatpush1.msra.mxu0 0.0
        %3635 = vmatprep.subr.mxu0 0.0
        %3636 = vmatpush1.msra.mxu0 0.0
        %3637 = vmatprep.subr.mxu0 0.0
        %3638 = vmatpush1.msra.mxu0 0.0
        %3639 = vmatprep.subr.mxu0 0.0
        %3640 = vmatpush1.msra.mxu0 0.0
        %3641 = vmatprep.subr.mxu0 0.0
        %3642 = vmatpush1.msra.mxu0 0.0
        %3643 = vmatprep.subr.mxu0 0.0
        %3644 = vmatpush1.msra.mxu0 0.0
        %3645 = vmatprep.subr.mxu0 0.0
        %3646 = vmatpush1.msra.mxu0 0.0
        %3647 = vmatprep.subr.mxu0 0.0
        %3648 = vmatpush1.msra.mxu0 0.0
        %3649 = vmatprep.subr.mxu0 0.0
        %3650 = vmatpush1.msra.mxu0 0.0
        %3651 = vmatprep.subr.mxu0 0.0
        %3652 = vmatpush1.msra.mxu0 0.0
        %3653 = vmatprep.subr.mxu0 0.0
        %3654 = vmatpush1.msra.mxu0 0.0
        %3655 = vmatprep.subr.mxu0 0.0
        %3656 = vmatpush1.msra.mxu0 0.0
        %3657 = vmatprep.subr.mxu0 0.0
        %3658 = vmatpush1.msra.mxu0 0.0
        %3659 = vmatprep.subr.mxu0 0.0
        %3660 = vmatpush1.msra.mxu0 0.0
        %3661 = vmatprep.mubr.f32.mxu0 0.0
        %3662 = vmatmul.mubr.f32.gmra.mrb[0].mxu0 %v2861
        %v3663 = vpop.f32.mrb[0].mxu0
        %v3664 = vadd.f32 0.0, %v3663
        %v3665 = vpop.f32.mrb[0].mxu0
        %3666 = vdwg.mxu0
        %3667 = vmatprep.subr.mxu0 0.0
        %3668 = vmatpush1.msra.mxu0 %v3453
        %3669 = vmatprep.subr.mxu0 0.0
        %3670 = vmatpush1.msra.mxu0 %v3454
        %3671 = vmatprep.subr.mxu0 0.0
        %3672 = vmatpush1.msra.mxu0 %v3455
        %3673 = vmatprep.subr.mxu0 0.0
        %3674 = vmatpush1.msra.mxu0 %v3456
        %3675 = vmatprep.subr.mxu0 0.0
        %3676 = vmatpush1.msra.mxu0 0.0
        %3677 = vmatprep.subr.mxu0 0.0
        %3678 = vmatpush1.msra.mxu0 0.0
        %3679 = vmatprep.subr.mxu0 0.0
        %3680 = vmatpush1.msra.mxu0 0.0
        %3681 = vmatprep.subr.mxu0 0.0
        %3682 = vmatpush1.msra.mxu0 0.0
        %3683 = vmatprep.subr.mxu0 0.0
        %3684 = vmatpush1.msra.mxu0 0.0
        %3685 = vmatprep.subr.mxu0 0.0
        %3686 = vmatpush1.msra.mxu0 0.0
        %3687 = vmatprep.subr.mxu0 0.0
        %3688 = vmatpush1.msra.mxu0 0.0
        %3689 = vmatprep.subr.mxu0 0.0
        %3690 = vmatpush1.msra.mxu0 0.0
        %3691 = vmatprep.subr.mxu0 0.0
        %3692 = vmatpush1.msra.mxu0 0.0
        %3693 = vmatprep.subr.mxu0 0.0
        %3694 = vmatpush1.msra.mxu0 0.0
        %3695 = vmatprep.subr.mxu0 0.0
        %3696 = vmatpush1.msra.mxu0 0.0
        %3697 = vmatprep.subr.mxu0 0.0
        %3698 = vmatpush1.msra.mxu0 0.0
        %3699 = vmatprep.subr.mxu0 0.0
        %3700 = vmatpush1.msra.mxu0 0.0
        %3701 = vmatprep.subr.mxu0 0.0
        %3702 = vmatpush1.msra.mxu0 0.0
        %3703 = vmatprep.subr.mxu0 0.0
        %3704 = vmatpush1.msra.mxu0 0.0
        %3705 = vmatprep.subr.mxu0 0.0
        %3706 = vmatpush1.msra.mxu0 0.0
        %3707 = vmatprep.subr.mxu0 0.0
        %3708 = vmatpush1.msra.mxu0 0.0
        %3709 = vmatprep.subr.mxu0 0.0
        %3710 = vmatpush1.msra.mxu0 0.0
        %3711 = vmatprep.subr.mxu0 0.0
        %3712 = vmatpush1.msra.mxu0 0.0
        %3713 = vmatprep.subr.mxu0 0.0
        %3714 = vmatpush1.msra.mxu0 0.0
        %3715 = vmatprep.subr.mxu0 0.0
        %3716 = vmatpush1.msra.mxu0 0.0
        %3717 = vmatprep.subr.mxu0 0.0
        %3718 = vmatpush1.msra.mxu0 0.0
        %3719 = vmatprep.subr.mxu0 0.0
        %3720 = vmatpush1.msra.mxu0 0.0
        %3721 = vmatprep.subr.mxu0 0.0
        %3722 = vmatpush1.msra.mxu0 0.0
        %3723 = vmatprep.subr.mxu0 0.0
        %3724 = vmatpush1.msra.mxu0 0.0
        %3725 = vmatprep.subr.mxu0 0.0
        %3726 = vmatpush1.msra.mxu0 0.0
        %3727 = vmatprep.subr.mxu0 0.0
        %3728 = vmatpush1.msra.mxu0 0.0
        %3729 = vmatprep.subr.mxu0 0.0
        %3730 = vmatpush1.msra.mxu0 0.0
        %3731 = vmatprep.mubr.f32.mxu0 0.0
        %3732 = vmatmul.mubr.f32.gmra.mrb[0].mxu0 %v2861
        %v3733 = vpop.f32.mrb[0].mxu0
        %v3734 = vadd.f32 0.0, %v3733
        %v3735 = vpop.f32.mrb[0].mxu0
        %3736 = vdwg.mxu0
        %v3738 = vsel %vm1642, %v2930, 0
        %v3741 = vsel %vm1642, %v3227, 0
        %3743 = vmatprep.subr.mxu0 0.0
        %3744 = vmatpush1.xpose.msra.mxu0 %v3741
        %3745 = vmatprep.subr.mxu0 0.0
        %3746 = vmatpush1.xpose.msra.mxu0 0.0
        %3747 = vmatprep.subr.mxu0 0.0
        %3748 = vmatpush1.xpose.msra.mxu0 0.0
        %3749 = vmatprep.subr.mxu0 0.0
        %3750 = vmatpush1.xpose.msra.mxu0 0.0
        %3751 = vmatprep.subr.mxu0 0.0
        %3752 = vmatpush1.xpose.msra.mxu0 0.0
        %3753 = vmatprep.subr.mxu0 0.0
        %3754 = vmatpush1.xpose.msra.mxu0 0.0
        %3755 = vmatprep.subr.mxu0 0.0
        %3756 = vmatpush1.xpose.msra.mxu0 0.0
        %3757 = vmatprep.subr.mxu0 0.0
        %3758 = vmatpush1.xpose.msra.mxu0 0.0
        %3759 = vmatprep.subr.mxu0 0.0
        %3760 = vmatpush1.xpose.msra.mxu0 0.0
        %3761 = vmatprep.subr.mxu0 0.0
        %3762 = vmatpush1.xpose.msra.mxu0 0.0
        %3763 = vmatprep.subr.mxu0 0.0
        %3764 = vmatpush1.xpose.msra.mxu0 0.0
        %3765 = vmatprep.subr.mxu0 0.0
        %3766 = vmatpush1.xpose.msra.mxu0 0.0
        %3767 = vmatprep.subr.mxu0 0.0
        %3768 = vmatpush1.xpose.msra.mxu0 0.0
        %3769 = vmatprep.subr.mxu0 0.0
        %3770 = vmatpush1.xpose.msra.mxu0 0.0
        %3771 = vmatprep.subr.mxu0 0.0
        %3772 = vmatpush1.xpose.msra.mxu0 0.0
        %3773 = vmatprep.subr.mxu0 0.0
        %3774 = vmatpush1.xpose.msra.mxu0 0.0
        %3775 = vmatprep.subr.mxu0 0.0
        %3776 = vmatpush1.xpose.msra.mxu0 0.0
        %3777 = vmatprep.subr.mxu0 0.0
        %3778 = vmatpush1.xpose.msra.mxu0 0.0
        %3779 = vmatprep.subr.mxu0 0.0
        %3780 = vmatpush1.xpose.msra.mxu0 0.0
        %3781 = vmatprep.subr.mxu0 0.0
        %3782 = vmatpush1.xpose.msra.mxu0 0.0
        %3783 = vmatprep.subr.mxu0 0.0
        %3784 = vmatpush1.xpose.msra.mxu0 0.0
        %3785 = vmatprep.subr.mxu0 0.0
        %3786 = vmatpush1.xpose.msra.mxu0 0.0
        %3787 = vmatprep.subr.mxu0 0.0
        %3788 = vmatpush1.xpose.msra.mxu0 0.0
        %3789 = vmatprep.subr.mxu0 0.0
        %3790 = vmatpush1.xpose.msra.mxu0 0.0
        %3791 = vmatprep.subr.mxu0 0.0
        %3792 = vmatpush1.xpose.msra.mxu0 0.0
        %3793 = vmatprep.subr.mxu0 0.0
        %3794 = vmatpush1.xpose.msra.mxu0 0.0
        %3795 = vmatprep.subr.mxu0 0.0
        %3796 = vmatpush1.xpose.msra.mxu0 0.0
        %3797 = vmatprep.subr.mxu0 0.0
        %3798 = vmatpush1.xpose.msra.mxu0 0.0
        %3799 = vmatprep.subr.mxu0 0.0
        %3800 = vmatpush1.xpose.msra.mxu0 0.0
        %3801 = vmatprep.subr.mxu0 0.0
        %3802 = vmatpush1.xpose.msra.mxu0 0.0
        %3803 = vmatprep.subr.mxu0 0.0
        %3804 = vmatpush1.xpose.msra.mxu0 0.0
        %3805 = vmatprep.subr.mxu0 0.0
        %3806 = vmatpush1.xpose.msra.mxu0 0.0
        %3807 = vmatprep.mubr.f32.mxu0 0.0
        %3808 = vmatmul.mubr.f32.gmra.mrb[0].mxu0 %v3738
        %v3809 = vpop.f32.mrb[0].mxu0
        %v3810 = vadd.f32 0.0, %v3809
        %v3811 = vpop.f32.mrb[0].mxu0
        %3812 = vdwg.mxu0
        %v3814 = vsel %vm1642, %v3000, 0
        %v3817 = vsel %vm1642, %v3297, 0
        %3819 = vmatprep.subr.mxu0 0.0
        %3820 = vmatpush1.xpose.msra.mxu0 %v3817
        %3821 = vmatprep.subr.mxu0 0.0
        %3822 = vmatpush1.xpose.msra.mxu0 0.0
        %3823 = vmatprep.subr.mxu0 0.0
        %3824 = vmatpush1.xpose.msra.mxu0 0.0
        %3825 = vmatprep.subr.mxu0 0.0
        %3826 = vmatpush1.xpose.msra.mxu0 0.0
        %3827 = vmatprep.subr.mxu0 0.0
        %3828 = vmatpush1.xpose.msra.mxu0 0.0
        %3829 = vmatprep.subr.mxu0 0.0
        %3830 = vmatpush1.xpose.msra.mxu0 0.0
        %3831 = vmatprep.subr.mxu0 0.0
        %3832 = vmatpush1.xpose.msra.mxu0 0.0
        %3833 = vmatprep.subr.mxu0 0.0
        %3834 = vmatpush1.xpose.msra.mxu0 0.0
        %3835 = vmatprep.subr.mxu0 0.0
        %3836 = vmatpush1.xpose.msra.mxu0 0.0
        %3837 = vmatprep.subr.mxu0 0.0
        %3838 = vmatpush1.xpose.msra.mxu0 0.0
        %3839 = vmatprep.subr.mxu0 0.0
        %3840 = vmatpush1.xpose.msra.mxu0 0.0
        %3841 = vmatprep.subr.mxu0 0.0
        %3842 = vmatpush1.xpose.msra.mxu0 0.0
        %3843 = vmatprep.subr.mxu0 0.0
        %3844 = vmatpush1.xpose.msra.mxu0 0.0
        %3845 = vmatprep.subr.mxu0 0.0
        %3846 = vmatpush1.xpose.msra.mxu0 0.0
        %3847 = vmatprep.subr.mxu0 0.0
        %3848 = vmatpush1.xpose.msra.mxu0 0.0
        %3849 = vmatprep.subr.mxu0 0.0
        %3850 = vmatpush1.xpose.msra.mxu0 0.0
        %3851 = vmatprep.subr.mxu0 0.0
        %3852 = vmatpush1.xpose.msra.mxu0 0.0
        %3853 = vmatprep.subr.mxu0 0.0
        %3854 = vmatpush1.xpose.msra.mxu0 0.0
        %3855 = vmatprep.subr.mxu0 0.0
        %3856 = vmatpush1.xpose.msra.mxu0 0.0
        %3857 = vmatprep.subr.mxu0 0.0
        %3858 = vmatpush1.xpose.msra.mxu0 0.0
        %3859 = vmatprep.subr.mxu0 0.0
        %3860 = vmatpush1.xpose.msra.mxu0 0.0
        %3861 = vmatprep.subr.mxu0 0.0
        %3862 = vmatpush1.xpose.msra.mxu0 0.0
        %3863 = vmatprep.subr.mxu0 0.0
        %3864 = vmatpush1.xpose.msra.mxu0 0.0
        %3865 = vmatprep.subr.mxu0 0.0
        %3866 = vmatpush1.xpose.msra.mxu0 0.0
        %3867 = vmatprep.subr.mxu0 0.0
        %3868 = vmatpush1.xpose.msra.mxu0 0.0
        %3869 = vmatprep.subr.mxu0 0.0
        %3870 = vmatpush1.xpose.msra.mxu0 0.0
        %3871 = vmatprep.subr.mxu0 0.0
        %3872 = vmatpush1.xpose.msra.mxu0 0.0
        %3873 = vmatprep.subr.mxu0 0.0
        %3874 = vmatpush1.xpose.msra.mxu0 0.0
        %3875 = vmatprep.subr.mxu0 0.0
        %3876 = vmatpush1.xpose.msra.mxu0 0.0
        %3877 = vmatprep.subr.mxu0 0.0
        %3878 = vmatpush1.xpose.msra.mxu0 0.0
        %3879 = vmatprep.subr.mxu0 0.0
        %3880 = vmatpush1.xpose.msra.mxu0 0.0
        %3881 = vmatprep.subr.mxu0 0.0
        %3882 = vmatpush1.xpose.msra.mxu0 0.0
        %3883 = vmatprep.mubr.f32.mxu0 0.0
        %3884 = vmatmul.mubr.f32.gmra.mrb[0].mxu0 %v3814
        %v3885 = vpop.f32.mrb[0].mxu0
        %v3886 = vadd.f32 0.0, %v3885
        %v3887 = vpop.f32.mrb[0].mxu0
        %3888 = vdwg.mxu0
        %v3890 = vsel %vm1642, %v3070, 0
        %v3893 = vsel %vm1642, %v3367, 0
        %3895 = vmatprep.subr.mxu0 0.0
        %3896 = vmatpush1.xpose.msra.mxu0 %v3893
        %3897 = vmatprep.subr.mxu0 0.0
        %3898 = vmatpush1.xpose.msra.mxu0 0.0
        %3899 = vmatprep.subr.mxu0 0.0
        %3900 = vmatpush1.xpose.msra.mxu0 0.0
        %3901 = vmatprep.subr.mxu0 0.0
        %3902 = vmatpush1.xpose.msra.mxu0 0.0
        %3903 = vmatprep.subr.mxu0 0.0
        %3904 = vmatpush1.xpose.msra.mxu0 0.0
        %3905 = vmatprep.subr.mxu0 0.0
        %3906 = vmatpush1.xpose.msra.mxu0 0.0
        %3907 = vmatprep.subr.mxu0 0.0
        %3908 = vmatpush1.xpose.msra.mxu0 0.0
        %3909 = vmatprep.subr.mxu0 0.0
        %3910 = vmatpush1.xpose.msra.mxu0 0.0
        %3911 = vmatprep.subr.mxu0 0.0
        %3912 = vmatpush1.xpose.msra.mxu0 0.0
        %3913 = vmatprep.subr.mxu0 0.0
        %3914 = vmatpush1.xpose.msra.mxu0 0.0
        %3915 = vmatprep.subr.mxu0 0.0
        %3916 = vmatpush1.xpose.msra.mxu0 0.0
        %3917 = vmatprep.subr.mxu0 0.0
        %3918 = vmatpush1.xpose.msra.mxu0 0.0
        %3919 = vmatprep.subr.mxu0 0.0
        %3920 = vmatpush1.xpose.msra.mxu0 0.0
        %3921 = vmatprep.subr.mxu0 0.0
        %3922 = vmatpush1.xpose.msra.mxu0 0.0
        %3923 = vmatprep.subr.mxu0 0.0
        %3924 = vmatpush1.xpose.msra.mxu0 0.0
        %3925 = vmatprep.subr.mxu0 0.0
        %3926 = vmatpush1.xpose.msra.mxu0 0.0
        %3927 = vmatprep.subr.mxu0 0.0
        %3928 = vmatpush1.xpose.msra.mxu0 0.0
        %3929 = vmatprep.subr.mxu0 0.0
        %3930 = vmatpush1.xpose.msra.mxu0 0.0
        %3931 = vmatprep.subr.mxu0 0.0
        %3932 = vmatpush1.xpose.msra.mxu0 0.0
        %3933 = vmatprep.subr.mxu0 0.0
        %3934 = vmatpush1.xpose.msra.mxu0 0.0
        %3935 = vmatprep.subr.mxu0 0.0
        %3936 = vmatpush1.xpose.msra.mxu0 0.0
        %3937 = vmatprep.subr.mxu0 0.0
        %3938 = vmatpush1.xpose.msra.mxu0 0.0
        %3939 = vmatprep.subr.mxu0 0.0
        %3940 = vmatpush1.xpose.msra.mxu0 0.0
        %3941 = vmatprep.subr.mxu0 0.0
        %3942 = vmatpush1.xpose.msra.mxu0 0.0
        %3943 = vmatprep.subr.mxu0 0.0
        %3944 = vmatpush1.xpose.msra.mxu0 0.0
        %3945 = vmatprep.subr.mxu0 0.0
        %3946 = vmatpush1.xpose.msra.mxu0 0.0
        %3947 = vmatprep.subr.mxu0 0.0
        %3948 = vmatpush1.xpose.msra.mxu0 0.0
        %3949 = vmatprep.subr.mxu0 0.0
        %3950 = vmatpush1.xpose.msra.mxu0 0.0
        %3951 = vmatprep.subr.mxu0 0.0
        %3952 = vmatpush1.xpose.msra.mxu0 0.0
        %3953 = vmatprep.subr.mxu0 0.0
        %3954 = vmatpush1.xpose.msra.mxu0 0.0
        %3955 = vmatprep.subr.mxu0 0.0
        %3956 = vmatpush1.xpose.msra.mxu0 0.0
        %3957 = vmatprep.subr.mxu0 0.0
        %3958 = vmatpush1.xpose.msra.mxu0 0.0
        %3959 = vmatprep.mubr.f32.mxu0 0.0
        %3960 = vmatmul.mubr.f32.gmra.mrb[0].mxu0 %v3890
        %v3961 = vpop.f32.mrb[0].mxu0
        %v3962 = vadd.f32 0.0, %v3961
        %v3963 = vpop.f32.mrb[0].mxu0
        %3964 = vdwg.mxu0
        %v3966 = vsel %vm1642, %v3140, 0
        %v3969 = vsel %vm1642, %v3437, 0
        %3971 = vmatprep.subr.mxu0 0.0
        %3972 = vmatpush1.xpose.msra.mxu0 %v3969
        %3973 = vmatprep.subr.mxu0 0.0
        %3974 = vmatpush1.xpose.msra.mxu0 0.0
        %3975 = vmatprep.subr.mxu0 0.0
        %3976 = vmatpush1.xpose.msra.mxu0 0.0
        %3977 = vmatprep.subr.mxu0 0.0
        %3978 = vmatpush1.xpose.msra.mxu0 0.0
        %3979 = vmatprep.subr.mxu0 0.0
        %3980 = vmatpush1.xpose.msra.mxu0 0.0
        %3981 = vmatprep.subr.mxu0 0.0
        %3982 = vmatpush1.xpose.msra.mxu0 0.0
        %3983 = vmatprep.subr.mxu0 0.0
        %3984 = vmatpush1.xpose.msra.mxu0 0.0
        %3985 = vmatprep.subr.mxu0 0.0
        %3986 = vmatpush1.xpose.msra.mxu0 0.0
        %3987 = vmatprep.subr.mxu0 0.0
        %3988 = vmatpush1.xpose.msra.mxu0 0.0
        %3989 = vmatprep.subr.mxu0 0.0
        %3990 = vmatpush1.xpose.msra.mxu0 0.0
        %3991 = vmatprep.subr.mxu0 0.0
        %3992 = vmatpush1.xpose.msra.mxu0 0.0
        %3993 = vmatprep.subr.mxu0 0.0
        %3994 = vmatpush1.xpose.msra.mxu0 0.0
        %3995 = vmatprep.subr.mxu0 0.0
        %3996 = vmatpush1.xpose.msra.mxu0 0.0
        %3997 = vmatprep.subr.mxu0 0.0
        %3998 = vmatpush1.xpose.msra.mxu0 0.0
        %3999 = vmatprep.subr.mxu0 0.0
        %4000 = vmatpush1.xpose.msra.mxu0 0.0
        %4001 = vmatprep.subr.mxu0 0.0
        %4002 = vmatpush1.xpose.msra.mxu0 0.0
        %4003 = vmatprep.subr.mxu0 0.0
        %4004 = vmatpush1.xpose.msra.mxu0 0.0
        %4005 = vmatprep.subr.mxu0 0.0
        %4006 = vmatpush1.xpose.msra.mxu0 0.0
        %4007 = vmatprep.subr.mxu0 0.0
        %4008 = vmatpush1.xpose.msra.mxu0 0.0
        %4009 = vmatprep.subr.mxu0 0.0
        %4010 = vmatpush1.xpose.msra.mxu0 0.0
        %4011 = vmatprep.subr.mxu0 0.0
        %4012 = vmatpush1.xpose.msra.mxu0 0.0
        %4013 = vmatprep.subr.mxu0 0.0
        %4014 = vmatpush1.xpose.msra.mxu0 0.0
        %4015 = vmatprep.subr.mxu0 0.0
        %4016 = vmatpush1.xpose.msra.mxu0 0.0
        %4017 = vmatprep.subr.mxu0 0.0
        %4018 = vmatpush1.xpose.msra.mxu0 0.0
        %4019 = vmatprep.subr.mxu0 0.0
        %4020 = vmatpush1.xpose.msra.mxu0 0.0
        %4021 = vmatprep.subr.mxu0 0.0
        %4022 = vmatpush1.xpose.msra.mxu0 0.0
        %4023 = vmatprep.subr.mxu0 0.0
        %4024 = vmatpush1.xpose.msra.mxu0 0.0
        %4025 = vmatprep.subr.mxu0 0.0
        %4026 = vmatpush1.xpose.msra.mxu0 0.0
        %4027 = vmatprep.subr.mxu0 0.0
        %4028 = vmatpush1.xpose.msra.mxu0 0.0
        %4029 = vmatprep.subr.mxu0 0.0
        %4030 = vmatpush1.xpose.msra.mxu0 0.0
        %4031 = vmatprep.subr.mxu0 0.0
        %4032 = vmatpush1.xpose.msra.mxu0 0.0
        %4033 = vmatprep.subr.mxu0 0.0
        %4034 = vmatpush1.xpose.msra.mxu0 0.0
        %4035 = vmatprep.mubr.f32.mxu0 0.0
        %4036 = vmatmul.mubr.f32.gmra.mrb[0].mxu0 %v3966
        %v4037 = vpop.f32.mrb[0].mxu0
        %v4038 = vadd.f32 0.0, %v4037
        %v4039 = vpop.f32.mrb[0].mxu0
        %4040 = vdwg.mxu0
        %v4041 = vmul.f32 %v3810, 0.35355338
        %v4042 = vmul.f32 %v3886, 0.35355338
        %v4043 = vmul.f32 %v3962, 0.35355338
        %v4044 = vmul.f32 %v4038, 0.35355338
        %v4045 = vsel %vm719, %v4041, -inf
        %v4046 = vsel %vm719, %v4042, -inf
        %v4047 = vsel %vm719, %v4043, -inf
        %v4048 = vsel %vm719, %v4044, -inf
        %v4049 = vsel %vm1642, %v4045, -inf
        %4050 = vmax.xlane.f32.xlu0 %v4049
        %v4051 = vpop.xlane.xlu0 %4050
        %v4052 = vsel %vm1642, %v4046, -inf
        %4053 = vmax.xlane.f32.xlu0 %v4052
        %v4054 = vpop.xlane.xlu0 %4053
        %v4055 = vsel %vm1642, %v4047, -inf
        %4056 = vmax.xlane.f32.xlu0 %v4055
        %v4057 = vpop.xlane.xlu0 %4056
        %v4058 = vsel %vm1642, %v4048, -inf
        %4059 = vmax.xlane.f32.xlu0 %v4058
        %v4060 = vpop.xlane.xlu0 %4059
        %v4061 = vsub.f32 %v4045, %v4051
        %v4062 = vsub.f32 %v4046, %v4054
        %v4063 = vsub.f32 %v4047, %v4057
        %v4064 = vsub.f32 %v4048, %v4060
        %v4065 = vmul.f32 %v4061, 1.442695
        %v4066 = vpow.pop %v4065
        %v4067 = vmul.f32 %v4062, 1.442695
        %v4068 = vpow.pop %v4067
        %v4069 = vmul.f32 %v4063, 1.442695
        %v4070 = vpow.pop %v4069
        %v4071 = vmul.f32 %v4064, 1.442695
        %v4072 = vpow.pop %v4071
        %v4073 = vsel %vm1642, %v4066, 0.0
        %4074 = vadd.xlane.f32.xlu0 %v4073
        %v4075 = vpop.xlane.xlu0 %4074
        %v4076 = vsel %vm1642, %v4068, 0.0
        %4077 = vadd.xlane.f32.xlu0 %v4076
        %v4078 = vpop.xlane.xlu0 %4077
        %v4079 = vsel %vm1642, %v4070, 0.0
        %4080 = vadd.xlane.f32.xlu0 %v4079
        %v4081 = vpop.xlane.xlu0 %4080
        %v4082 = vsel %vm1642, %v4072, 0.0
        %4083 = vadd.xlane.f32.xlu0 %v4082
        %v4084 = vpop.xlane.xlu0 %4083
        %v4085 = vrcp.pop %v4075
        %v4086 = vrcp.pop %v4078
        %v4087 = vrcp.pop %v4081
        %v4088 = vrcp.pop %v4084
        %v4089 = vmul.f32 %v4066, %v4085
        %v4090 = vmul.f32 %v4068, %v4086
        %v4091 = vmul.f32 %v4070, %v4087
        %v4092 = vmul.f32 %v4072, %v4088
        %v4094 = vsel %vm1642, %v4089, 0
        %4096 = vmatprep.subr.mxu0 0.0
        %4097 = vmatpush1.msra.mxu0 %v3524
        %4098 = vmatprep.subr.mxu0 0.0
        %4099 = vmatpush1.msra.mxu0 0.0
        %4100 = vmatprep.subr.mxu0 0.0
        %4101 = vmatpush1.msra.mxu0 0.0
        %4102 = vmatprep.subr.mxu0 0.0
        %4103 = vmatpush1.msra.mxu0 0.0
        %4104 = vmatprep.subr.mxu0 0.0
        %4105 = vmatpush1.msra.mxu0 0.0
        %4106 = vmatprep.subr.mxu0 0.0
        %4107 = vmatpush1.msra.mxu0 0.0
        %4108 = vmatprep.subr.mxu0 0.0
        %4109 = vmatpush1.msra.mxu0 0.0
        %4110 = vmatprep.subr.mxu0 0.0
        %4111 = vmatpush1.msra.mxu0 0.0
        %4112 = vmatprep.subr.mxu0 0.0
        %4113 = vmatpush1.msra.mxu0 0.0
        %4114 = vmatprep.subr.mxu0 0.0
        %4115 = vmatpush1.msra.mxu0 0.0
        %4116 = vmatprep.subr.mxu0 0.0
        %4117 = vmatpush1.msra.mxu0 0.0
        %4118 = vmatprep.subr.mxu0 0.0
        %4119 = vmatpush1.msra.mxu0 0.0
        %4120 = vmatprep.subr.mxu0 0.0
        %4121 = vmatpush1.msra.mxu0 0.0
        %4122 = vmatprep.subr.mxu0 0.0
        %4123 = vmatpush1.msra.mxu0 0.0
        %4124 = vmatprep.subr.mxu0 0.0
        %4125 = vmatpush1.msra.mxu0 0.0
        %4126 = vmatprep.subr.mxu0 0.0
        %4127 = vmatpush1.msra.mxu0 0.0
        %4128 = vmatprep.subr.mxu0 0.0
        %4129 = vmatpush1.msra.mxu0 0.0
        %4130 = vmatprep.subr.mxu0 0.0
        %4131 = vmatpush1.msra.mxu0 0.0
        %4132 = vmatprep.subr.mxu0 0.0
        %4133 = vmatpush1.msra.mxu0 0.0
        %4134 = vmatprep.subr.mxu0 0.0
        %4135 = vmatpush1.msra.mxu0 0.0
        %4136 = vmatprep.subr.mxu0 0.0
        %4137 = vmatpush1.msra.mxu0 0.0
        %4138 = vmatprep.subr.mxu0 0.0
        %4139 = vmatpush1.msra.mxu0 0.0
        %4140 = vmatprep.subr.mxu0 0.0
        %4141 = vmatpush1.msra.mxu0 0.0
        %4142 = vmatprep.subr.mxu0 0.0
        %4143 = vmatpush1.msra.mxu0 0.0
        %4144 = vmatprep.subr.mxu0 0.0
        %4145 = vmatpush1.msra.mxu0 0.0
        %4146 = vmatprep.subr.mxu0 0.0
        %4147 = vmatpush1.msra.mxu0 0.0
        %4148 = vmatprep.subr.mxu0 0.0
        %4149 = vmatpush1.msra.mxu0 0.0
        %4150 = vmatprep.subr.mxu0 0.0
        %4151 = vmatpush1.msra.mxu0 0.0
        %4152 = vmatprep.subr.mxu0 0.0
        %4153 = vmatpush1.msra.mxu0 0.0
        %4154 = vmatprep.subr.mxu0 0.0
        %4155 = vmatpush1.msra.mxu0 0.0
        %4156 = vmatprep.subr.mxu0 0.0
        %4157 = vmatpush1.msra.mxu0 0.0
        %4158 = vmatprep.subr.mxu0 0.0
        %4159 = vmatpush1.msra.mxu0 0.0
        %4160 = vmatprep.mubr.f32.mxu0 0.0
        %4161 = vmatmul.mubr.f32.gmra.mrb[0].mxu0 %v4094
        %v4162 = vpop.f32.mrb[0].mxu0
        %v4163 = vadd.f32 0.0, %v4162
        %v4164 = vpop.f32.mrb[0].mxu0
        %4165 = vdwg.mxu0
        %v4167 = vsel %vm1642, %v4090, 0
        %4169 = vmatprep.subr.mxu0 0.0
        %4170 = vmatpush1.msra.mxu0 %v3594
        %4171 = vmatprep.subr.mxu0 0.0
        %4172 = vmatpush1.msra.mxu0 0.0
        %4173 = vmatprep.subr.mxu0 0.0
        %4174 = vmatpush1.msra.mxu0 0.0
        %4175 = vmatprep.subr.mxu0 0.0
        %4176 = vmatpush1.msra.mxu0 0.0
        %4177 = vmatprep.subr.mxu0 0.0
        %4178 = vmatpush1.msra.mxu0 0.0
        %4179 = vmatprep.subr.mxu0 0.0
        %4180 = vmatpush1.msra.mxu0 0.0
        %4181 = vmatprep.subr.mxu0 0.0
        %4182 = vmatpush1.msra.mxu0 0.0
        %4183 = vmatprep.subr.mxu0 0.0
        %4184 = vmatpush1.msra.mxu0 0.0
        %4185 = vmatprep.subr.mxu0 0.0
        %4186 = vmatpush1.msra.mxu0 0.0
        %4187 = vmatprep.subr.mxu0 0.0
        %4188 = vmatpush1.msra.mxu0 0.0
        %4189 = vmatprep.subr.mxu0 0.0
        %4190 = vmatpush1.msra.mxu0 0.0
        %4191 = vmatprep.subr.mxu0 0.0
        %4192 = vmatpush1.msra.mxu0 0.0
        %4193 = vmatprep.subr.mxu0 0.0
        %4194 = vmatpush1.msra.mxu0 0.0
        %4195 = vmatprep.subr.mxu0 0.0
        %4196 = vmatpush1.msra.mxu0 0.0
        %4197 = vmatprep.subr.mxu0 0.0
        %4198 = vmatpush1.msra.mxu0 0.0
        %4199 = vmatprep.subr.mxu0 0.0
        %4200 = vmatpush1.msra.mxu0 0.0
        %4201 = vmatprep.subr.mxu0 0.0
        %4202 = vmatpush1.msra.mxu0 0.0
        %4203 = vmatprep.subr.mxu0 0.0
        %4204 = vmatpush1.msra.mxu0 0.0
        %4205 = vmatprep.subr.mxu0 0.0
        %4206 = vmatpush1.msra.mxu0 0.0
        %4207 = vmatprep.subr.mxu0 0.0
        %4208 = vmatpush1.msra.mxu0 0.0
        %4209 = vmatprep.subr.mxu0 0.0
        %4210 = vmatpush1.msra.mxu0 0.0
        %4211 = vmatprep.subr.mxu0 0.0
        %4212 = vmatpush1.msra.mxu0 0.0
        %4213 = vmatprep.subr.mxu0 0.0
        %4214 = vmatpush1.msra.mxu0 0.0
        %4215 = vmatprep.subr.mxu0 0.0
        %4216 = vmatpush1.msra.mxu0 0.0
        %4217 = vmatprep.subr.mxu0 0.0
        %4218 = vmatpush1.msra.mxu0 0.0
        %4219 = vmatprep.subr.mxu0 0.0
        %4220 = vmatpush1.msra.mxu0 0.0
        %4221 = vmatprep.subr.mxu0 0.0
        %4222 = vmatpush1.msra.mxu0 0.0
        %4223 = vmatprep.subr.mxu0 0.0
        %4224 = vmatpush1.msra.mxu0 0.0
        %4225 = vmatprep.subr.mxu0 0.0
        %4226 = vmatpush1.msra.mxu0 0.0
        %4227 = vmatprep.subr.mxu0 0.0
        %4228 = vmatpush1.msra.mxu0 0.0
        %4229 = vmatprep.subr.mxu0 0.0
        %4230 = vmatpush1.msra.mxu0 0.0
        %4231 = vmatprep.subr.mxu0 0.0
        %4232 = vmatpush1.msra.mxu0 0.0
        %4233 = vmatprep.mubr.f32.mxu0 0.0
        %4234 = vmatmul.mubr.f32.gmra.mrb[0].mxu0 %v4167
        %v4235 = vpop.f32.mrb[0].mxu0
        %v4236 = vadd.f32 0.0, %v4235
        %v4237 = vpop.f32.mrb[0].mxu0
        %4238 = vdwg.mxu0
        %v4240 = vsel %vm1642, %v4091, 0
        %4242 = vmatprep.subr.mxu0 0.0
        %4243 = vmatpush1.msra.mxu0 %v3664
        %4244 = vmatprep.subr.mxu0 0.0
        %4245 = vmatpush1.msra.mxu0 0.0
        %4246 = vmatprep.subr.mxu0 0.0
        %4247 = vmatpush1.msra.mxu0 0.0
        %4248 = vmatprep.subr.mxu0 0.0
        %4249 = vmatpush1.msra.mxu0 0.0
        %4250 = vmatprep.subr.mxu0 0.0
        %4251 = vmatpush1.msra.mxu0 0.0
        %4252 = vmatprep.subr.mxu0 0.0
        %4253 = vmatpush1.msra.mxu0 0.0
        %4254 = vmatprep.subr.mxu0 0.0
        %4255 = vmatpush1.msra.mxu0 0.0
        %4256 = vmatprep.subr.mxu0 0.0
        %4257 = vmatpush1.msra.mxu0 0.0
        %4258 = vmatprep.subr.mxu0 0.0
        %4259 = vmatpush1.msra.mxu0 0.0
        %4260 = vmatprep.subr.mxu0 0.0
        %4261 = vmatpush1.msra.mxu0 0.0
        %4262 = vmatprep.subr.mxu0 0.0
        %4263 = vmatpush1.msra.mxu0 0.0
        %4264 = vmatprep.subr.mxu0 0.0
        %4265 = vmatpush1.msra.mxu0 0.0
        %4266 = vmatprep.subr.mxu0 0.0
        %4267 = vmatpush1.msra.mxu0 0.0
        %4268 = vmatprep.subr.mxu0 0.0
        %4269 = vmatpush1.msra.mxu0 0.0
        %4270 = vmatprep.subr.mxu0 0.0
        %4271 = vmatpush1.msra.mxu0 0.0
        %4272 = vmatprep.subr.mxu0 0.0
        %4273 = vmatpush1.msra.mxu0 0.0
        %4274 = vmatprep.subr.mxu0 0.0
        %4275 = vmatpush1.msra.mxu0 0.0
        %4276 = vmatprep.subr.mxu0 0.0
        %4277 = vmatpush1.msra.mxu0 0.0
        %4278 = vmatprep.subr.mxu0 0.0
        %4279 = vmatpush1.msra.mxu0 0.0
        %4280 = vmatprep.subr.mxu0 0.0
        %4281 = vmatpush1.msra.mxu0 0.0
        %4282 = vmatprep.subr.mxu0 0.0
        %4283 = vmatpush1.msra.mxu0 0.0
        %4284 = vmatprep.subr.mxu0 0.0
        %4285 = vmatpush1.msra.mxu0 0.0
        %4286 = vmatprep.subr.mxu0 0.0
        %4287 = vmatpush1.msra.mxu0 0.0
        %4288 = vmatprep.subr.mxu0 0.0
        %4289 = vmatpush1.msra.mxu0 0.0
        %4290 = vmatprep.subr.mxu0 0.0
        %4291 = vmatpush1.msra.mxu0 0.0
        %4292 = vmatprep.subr.mxu0 0.0
        %4293 = vmatpush1.msra.mxu0 0.0
        %4294 = vmatprep.subr.mxu0 0.0
        %4295 = vmatpush1.msra.mxu0 0.0
        %4296 = vmatprep.subr.mxu0 0.0
        %4297 = vmatpush1.msra.mxu0 0.0
        %4298 = vmatprep.subr.mxu0 0.0
        %4299 = vmatpush1.msra.mxu0 0.0
        %4300 = vmatprep.subr.mxu0 0.0
        %4301 = vmatpush1.msra.mxu0 0.0
        %4302 = vmatprep.subr.mxu0 0.0
        %4303 = vmatpush1.msra.mxu0 0.0
        %4304 = vmatprep.subr.mxu0 0.0
        %4305 = vmatpush1.msra.mxu0 0.0
        %4306 = vmatprep.mubr.f32.mxu0 0.0
        %4307 = vmatmul.mubr.f32.gmra.mrb[0].mxu0 %v4240
        %v4308 = vpop.f32.mrb[0].mxu0
        %v4309 = vadd.f32 0.0, %v4308
        %v4310 = vpop.f32.mrb[0].mxu0
        %4311 = vdwg.mxu0
        %v4313 = vsel %vm1642, %v4092, 0
        %4315 = vmatprep.subr.mxu0 0.0
        %4316 = vmatpush1.msra.mxu0 %v3734
        %4317 = vmatprep.subr.mxu0 0.0
        %4318 = vmatpush1.msra.mxu0 0.0
        %4319 = vmatprep.subr.mxu0 0.0
        %4320 = vmatpush1.msra.mxu0 0.0
        %4321 = vmatprep.subr.mxu0 0.0
        %4322 = vmatpush1.msra.mxu0 0.0
        %4323 = vmatprep.subr.mxu0 0.0
        %4324 = vmatpush1.msra.mxu0 0.0
        %4325 = vmatprep.subr.mxu0 0.0
        %4326 = vmatpush1.msra.mxu0 0.0
        %4327 = vmatprep.subr.mxu0 0.0
        %4328 = vmatpush1.msra.mxu0 0.0
        %4329 = vmatprep.subr.mxu0 0.0
        %4330 = vmatpush1.msra.mxu0 0.0
        %4331 = vmatprep.subr.mxu0 0.0
        %4332 = vmatpush1.msra.mxu0 0.0
        %4333 = vmatprep.subr.mxu0 0.0
        %4334 = vmatpush1.msra.mxu0 0.0
        %4335 = vmatprep.subr.mxu0 0.0
        %4336 = vmatpush1.msra.mxu0 0.0
        %4337 = vmatprep.subr.mxu0 0.0
        %4338 = vmatpush1.msra.mxu0 0.0
        %4339 = vmatprep.subr.mxu0 0.0
        %4340 = vmatpush1.msra.mxu0 0.0
        %4341 = vmatprep.subr.mxu0 0.0
        %4342 = vmatpush1.msra.mxu0 0.0
        %4343 = vmatprep.subr.mxu0 0.0
        %4344 = vmatpush1.msra.mxu0 0.0
        %4345 = vmatprep.subr.mxu0 0.0
        %4346 = vmatpush1.msra.mxu0 0.0
        %4347 = vmatprep.subr.mxu0 0.0
        %4348 = vmatpush1.msra.mxu0 0.0
        %4349 = vmatprep.subr.mxu0 0.0
        %4350 = vmatpush1.msra.mxu0 0.0
        %4351 = vmatprep.subr.mxu0 0.0
        %4352 = vmatpush1.msra.mxu0 0.0
        %4353 = vmatprep.subr.mxu0 0.0
        %4354 = vmatpush1.msra.mxu0 0.0
        %4355 = vmatprep.subr.mxu0 0.0
        %4356 = vmatpush1.msra.mxu0 0.0
        %4357 = vmatprep.subr.mxu0 0.0
        %4358 = vmatpush1.msra.mxu0 0.0
        %4359 = vmatprep.subr.mxu0 0.0
        %4360 = vmatpush1.msra.mxu0 0.0
        %4361 = vmatprep.subr.mxu0 0.0
        %4362 = vmatpush1.msra.mxu0 0.0
        %4363 = vmatprep.subr.mxu0 0.0
        %4364 = vmatpush1.msra.mxu0 0.0
        %4365 = vmatprep.subr.mxu0 0.0
        %4366 = vmatpush1.msra.mxu0 0.0
        %4367 = vmatprep.subr.mxu0 0.0
        %4368 = vmatpush1.msra.mxu0 0.0
        %4369 = vmatprep.subr.mxu0 0.0
        %4370 = vmatpush1.msra.mxu0 0.0
        %4371 = vmatprep.subr.mxu0 0.0
        %4372 = vmatpush1.msra.mxu0 0.0
        %4373 = vmatprep.subr.mxu0 0.0
        %4374 = vmatpush1.msra.mxu0 0.0
        %4375 = vmatprep.subr.mxu0 0.0
        %4376 = vmatpush1.msra.mxu0 0.0
        %4377 = vmatprep.subr.mxu0 0.0
        %4378 = vmatpush1.msra.mxu0 0.0
        %4379 = vmatprep.mubr.f32.mxu0 0.0
        %4380 = vmatmul.mubr.f32.gmra.mrb[0].mxu0 %v4313
        %v4381 = vpop.f32.mrb[0].mxu0
        %v4382 = vadd.f32 0.0, %v4381
        %v4383 = vpop.f32.mrb[0].mxu0
        %4384 = vdwg.mxu0
        %s4385 = scalar_lea.vmem %s8, 32
        %v4386 = vld [vmem:[%s4385] sm:$0xff]
        %v4387 = vld [vmem:[%s4385 + $0x8] sm:$0xff]
        %v4388 = vld [vmem:[%s4385 + $0x10] sm:$0xff]
        %v4389 = vld [vmem:[%s4385 + $0x18] sm:$0xff]
        %v4391 = vsel %vm1642, %v4163, 0
        %4393 = vmatprep.subr.mxu0 0.0
        %4394 = vmatpush1.msra.mxu0 %v4386
        %4395 = vmatprep.subr.mxu0 0.0
        %4396 = vmatpush1.msra.mxu0 0.0
        %4397 = vmatprep.subr.mxu0 0.0
        %4398 = vmatpush1.msra.mxu0 0.0
        %4399 = vmatprep.subr.mxu0 0.0
        %4400 = vmatpush1.msra.mxu0 0.0
        %4401 = vmatprep.subr.mxu0 0.0
        %4402 = vmatpush1.msra.mxu0 0.0
        %4403 = vmatprep.subr.mxu0 0.0
        %4404 = vmatpush1.msra.mxu0 0.0
        %4405 = vmatprep.subr.mxu0 0.0
        %4406 = vmatpush1.msra.mxu0 0.0
        %4407 = vmatprep.subr.mxu0 0.0
        %4408 = vmatpush1.msra.mxu0 0.0
        %4409 = vmatprep.subr.mxu0 0.0
        %4410 = vmatpush1.msra.mxu0 0.0
        %4411 = vmatprep.subr.mxu0 0.0
        %4412 = vmatpush1.msra.mxu0 0.0
        %4413 = vmatprep.subr.mxu0 0.0
        %4414 = vmatpush1.msra.mxu0 0.0
        %4415 = vmatprep.subr.mxu0 0.0
        %4416 = vmatpush1.msra.mxu0 0.0
        %4417 = vmatprep.subr.mxu0 0.0
        %4418 = vmatpush1.msra.mxu0 0.0
        %4419 = vmatprep.subr.mxu0 0.0
        %4420 = vmatpush1.msra.mxu0 0.0
        %4421 = vmatprep.subr.mxu0 0.0
        %4422 = vmatpush1.msra.mxu0 0.0
        %4423 = vmatprep.subr.mxu0 0.0
        %4424 = vmatpush1.msra.mxu0 0.0
        %4425 = vmatprep.subr.mxu0 0.0
        %4426 = vmatpush1.msra.mxu0 0.0
        %4427 = vmatprep.subr.mxu0 0.0
        %4428 = vmatpush1.msra.mxu0 0.0
        %4429 = vmatprep.subr.mxu0 0.0
        %4430 = vmatpush1.msra.mxu0 0.0
        %4431 = vmatprep.subr.mxu0 0.0
        %4432 = vmatpush1.msra.mxu0 0.0
        %4433 = vmatprep.subr.mxu0 0.0
        %4434 = vmatpush1.msra.mxu0 0.0
        %4435 = vmatprep.subr.mxu0 0.0
        %4436 = vmatpush1.msra.mxu0 0.0
        %4437 = vmatprep.subr.mxu0 0.0
        %4438 = vmatpush1.msra.mxu0 0.0
        %4439 = vmatprep.subr.mxu0 0.0
        %4440 = vmatpush1.msra.mxu0 0.0
        %4441 = vmatprep.subr.mxu0 0.0
        %4442 = vmatpush1.msra.mxu0 0.0
        %4443 = vmatprep.subr.mxu0 0.0
        %4444 = vmatpush1.msra.mxu0 0.0
        %4445 = vmatprep.subr.mxu0 0.0
        %4446 = vmatpush1.msra.mxu0 0.0
        %4447 = vmatprep.subr.mxu0 0.0
        %4448 = vmatpush1.msra.mxu0 0.0
        %4449 = vmatprep.subr.mxu0 0.0
        %4450 = vmatpush1.msra.mxu0 0.0
        %4451 = vmatprep.subr.mxu0 0.0
        %4452 = vmatpush1.msra.mxu0 0.0
        %4453 = vmatprep.subr.mxu0 0.0
        %4454 = vmatpush1.msra.mxu0 0.0
        %4455 = vmatprep.subr.mxu0 0.0
        %4456 = vmatpush1.msra.mxu0 0.0
        %4457 = vmatprep.mubr.f32.mxu0 0.0
        %4458 = vmatmul.mubr.f32.gmra.mrb[0].mxu0 %v4391
        %v4459 = vpop.f32.mrb[0].mxu0
        %v4460 = vadd.f32 0.0, %v4459
        %v4461 = vpop.f32.mrb[0].mxu0
        %4462 = vdwg.mxu0
        %v4464 = vsel %vm1642, %v4236, 0
        %4466 = vmatprep.subr.mxu0 0.0
        %4467 = vmatpush1.msra.mxu0 %v4387
        %4468 = vmatprep.subr.mxu0 0.0
        %4469 = vmatpush1.msra.mxu0 0.0
        %4470 = vmatprep.subr.mxu0 0.0
        %4471 = vmatpush1.msra.mxu0 0.0
        %4472 = vmatprep.subr.mxu0 0.0
        %4473 = vmatpush1.msra.mxu0 0.0
        %4474 = vmatprep.subr.mxu0 0.0
        %4475 = vmatpush1.msra.mxu0 0.0
        %4476 = vmatprep.subr.mxu0 0.0
        %4477 = vmatpush1.msra.mxu0 0.0
        %4478 = vmatprep.subr.mxu0 0.0
        %4479 = vmatpush1.msra.mxu0 0.0
        %4480 = vmatprep.subr.mxu0 0.0
        %4481 = vmatpush1.msra.mxu0 0.0
        %4482 = vmatprep.subr.mxu0 0.0
        %4483 = vmatpush1.msra.mxu0 0.0
        %4484 = vmatprep.subr.mxu0 0.0
        %4485 = vmatpush1.msra.mxu0 0.0
        %4486 = vmatprep.subr.mxu0 0.0
        %4487 = vmatpush1.msra.mxu0 0.0
        %4488 = vmatprep.subr.mxu0 0.0
        %4489 = vmatpush1.msra.mxu0 0.0
        %4490 = vmatprep.subr.mxu0 0.0
        %4491 = vmatpush1.msra.mxu0 0.0
        %4492 = vmatprep.subr.mxu0 0.0
        %4493 = vmatpush1.msra.mxu0 0.0
        %4494 = vmatprep.subr.mxu0 0.0
        %4495 = vmatpush1.msra.mxu0 0.0
        %4496 = vmatprep.subr.mxu0 0.0
        %4497 = vmatpush1.msra.mxu0 0.0
        %4498 = vmatprep.subr.mxu0 0.0
        %4499 = vmatpush1.msra.mxu0 0.0
        %4500 = vmatprep.subr.mxu0 0.0
        %4501 = vmatpush1.msra.mxu0 0.0
        %4502 = vmatprep.subr.mxu0 0.0
        %4503 = vmatpush1.msra.mxu0 0.0
        %4504 = vmatprep.subr.mxu0 0.0
        %4505 = vmatpush1.msra.mxu0 0.0
        %4506 = vmatprep.subr.mxu0 0.0
        %4507 = vmatpush1.msra.mxu0 0.0
        %4508 = vmatprep.subr.mxu0 0.0
        %4509 = vmatpush1.msra.mxu0 0.0
        %4510 = vmatprep.subr.mxu0 0.0
        %4511 = vmatpush1.msra.mxu0 0.0
        %4512 = vmatprep.subr.mxu0 0.0
        %4513 = vmatpush1.msra.mxu0 0.0
        %4514 = vmatprep.subr.mxu0 0.0
        %4515 = vmatpush1.msra.mxu0 0.0
        %4516 = vmatprep.subr.mxu0 0.0
        %4517 = vmatpush1.msra.mxu0 0.0
        %4518 = vmatprep.subr.mxu0 0.0
        %4519 = vmatpush1.msra.mxu0 0.0
        %4520 = vmatprep.subr.mxu0 0.0
        %4521 = vmatpush1.msra.mxu0 0.0
        %4522 = vmatprep.subr.mxu0 0.0
        %4523 = vmatpush1.msra.mxu0 0.0
        %4524 = vmatprep.subr.mxu0 0.0
        %4525 = vmatpush1.msra.mxu0 0.0
        %4526 = vmatprep.subr.mxu0 0.0
        %4527 = vmatpush1.msra.mxu0 0.0
        %4528 = vmatprep.subr.mxu0 0.0
        %4529 = vmatpush1.msra.mxu0 0.0
        %4530 = vmatprep.mubr.f32.mxu0 0.0
        %4531 = vmatmul.mubr.f32.gmra.mrb[0].mxu0 %v4464
        %v4532 = vpop.f32.mrb[0].mxu0
        %v4533 = vadd.f32 0.0, %v4532
        %v4534 = vpop.f32.mrb[0].mxu0
        %4535 = vdwg.mxu0
        %v4537 = vsel %vm1642, %v4309, 0
        %4539 = vmatprep.subr.mxu0 0.0
        %4540 = vmatpush1.msra.mxu0 %v4388
        %4541 = vmatprep.subr.mxu0 0.0
        %4542 = vmatpush1.msra.mxu0 0.0
        %4543 = vmatprep.subr.mxu0 0.0
        %4544 = vmatpush1.msra.mxu0 0.0
        %4545 = vmatprep.subr.mxu0 0.0
        %4546 = vmatpush1.msra.mxu0 0.0
        %4547 = vmatprep.subr.mxu0 0.0
        %4548 = vmatpush1.msra.mxu0 0.0
        %4549 = vmatprep.subr.mxu0 0.0
        %4550 = vmatpush1.msra.mxu0 0.0
        %4551 = vmatprep.subr.mxu0 0.0
        %4552 = vmatpush1.msra.mxu0 0.0
        %4553 = vmatprep.subr.mxu0 0.0
        %4554 = vmatpush1.msra.mxu0 0.0
        %4555 = vmatprep.subr.mxu0 0.0
        %4556 = vmatpush1.msra.mxu0 0.0
        %4557 = vmatprep.subr.mxu0 0.0
        %4558 = vmatpush1.msra.mxu0 0.0
        %4559 = vmatprep.subr.mxu0 0.0
        %4560 = vmatpush1.msra.mxu0 0.0
        %4561 = vmatprep.subr.mxu0 0.0
        %4562 = vmatpush1.msra.mxu0 0.0
        %4563 = vmatprep.subr.mxu0 0.0
        %4564 = vmatpush1.msra.mxu0 0.0
        %4565 = vmatprep.subr.mxu0 0.0
        %4566 = vmatpush1.msra.mxu0 0.0
        %4567 = vmatprep.subr.mxu0 0.0
        %4568 = vmatpush1.msra.mxu0 0.0
        %4569 = vmatprep.subr.mxu0 0.0
        %4570 = vmatpush1.msra.mxu0 0.0
        %4571 = vmatprep.subr.mxu0 0.0
        %4572 = vmatpush1.msra.mxu0 0.0
        %4573 = vmatprep.subr.mxu0 0.0
        %4574 = vmatpush1.msra.mxu0 0.0
        %4575 = vmatprep.subr.mxu0 0.0
        %4576 = vmatpush1.msra.mxu0 0.0
        %4577 = vmatprep.subr.mxu0 0.0
        %4578 = vmatpush1.msra.mxu0 0.0
        %4579 = vmatprep.subr.mxu0 0.0
        %4580 = vmatpush1.msra.mxu0 0.0
        %4581 = vmatprep.subr.mxu0 0.0
        %4582 = vmatpush1.msra.mxu0 0.0
        %4583 = vmatprep.subr.mxu0 0.0
        %4584 = vmatpush1.msra.mxu0 0.0
        %4585 = vmatprep.subr.mxu0 0.0
        %4586 = vmatpush1.msra.mxu0 0.0
        %4587 = vmatprep.subr.mxu0 0.0
        %4588 = vmatpush1.msra.mxu0 0.0
        %4589 = vmatprep.subr.mxu0 0.0
        %4590 = vmatpush1.msra.mxu0 0.0
        %4591 = vmatprep.subr.mxu0 0.0
        %4592 = vmatpush1.msra.mxu0 0.0
        %4593 = vmatprep.subr.mxu0 0.0
        %4594 = vmatpush1.msra.mxu0 0.0
        %4595 = vmatprep.subr.mxu0 0.0
        %4596 = vmatpush1.msra.mxu0 0.0
        %4597 = vmatprep.subr.mxu0 0.0
        %4598 = vmatpush1.msra.mxu0 0.0
        %4599 = vmatprep.subr.mxu0 0.0
        %4600 = vmatpush1.msra.mxu0 0.0
        %4601 = vmatprep.subr.mxu0 0.0
        %4602 = vmatpush1.msra.mxu0 0.0
        %4603 = vmatprep.mubr.f32.mxu0 0.0
        %4604 = vmatmul.mubr.f32.gmra.mrb[0].mxu0 %v4537
        %v4605 = vpop.f32.mrb[0].mxu0
        %v4606 = vadd.f32 0.0, %v4605
        %v4607 = vpop.f32.mrb[0].mxu0
        %4608 = vdwg.mxu0
        %v4610 = vsel %vm1642, %v4382, 0
        %4612 = vmatprep.subr.mxu0 0.0
        %4613 = vmatpush1.msra.mxu0 %v4389
        %4614 = vmatprep.subr.mxu0 0.0
        %4615 = vmatpush1.msra.mxu0 0.0
        %4616 = vmatprep.subr.mxu0 0.0
        %4617 = vmatpush1.msra.mxu0 0.0
        %4618 = vmatprep.subr.mxu0 0.0
        %4619 = vmatpush1.msra.mxu0 0.0
        %4620 = vmatprep.subr.mxu0 0.0
        %4621 = vmatpush1.msra.mxu0 0.0
        %4622 = vmatprep.subr.mxu0 0.0
        %4623 = vmatpush1.msra.mxu0 0.0
        %4624 = vmatprep.subr.mxu0 0.0
        %4625 = vmatpush1.msra.mxu0 0.0
        %4626 = vmatprep.subr.mxu0 0.0
        %4627 = vmatpush1.msra.mxu0 0.0
        %4628 = vmatprep.subr.mxu0 0.0
        %4629 = vmatpush1.msra.mxu0 0.0
        %4630 = vmatprep.subr.mxu0 0.0
        %4631 = vmatpush1.msra.mxu0 0.0
        %4632 = vmatprep.subr.mxu0 0.0
        %4633 = vmatpush1.msra.mxu0 0.0
        %4634 = vmatprep.subr.mxu0 0.0
        %4635 = vmatpush1.msra.mxu0 0.0
        %4636 = vmatprep.subr.mxu0 0.0
        %4637 = vmatpush1.msra.mxu0 0.0
        %4638 = vmatprep.subr.mxu0 0.0
        %4639 = vmatpush1.msra.mxu0 0.0
        %4640 = vmatprep.subr.mxu0 0.0
        %4641 = vmatpush1.msra.mxu0 0.0
        %4642 = vmatprep.subr.mxu0 0.0
        %4643 = vmatpush1.msra.mxu0 0.0
        %4644 = vmatprep.subr.mxu0 0.0
        %4645 = vmatpush1.msra.mxu0 0.0
        %4646 = vmatprep.subr.mxu0 0.0
        %4647 = vmatpush1.msra.mxu0 0.0
        %4648 = vmatprep.subr.mxu0 0.0
        %4649 = vmatpush1.msra.mxu0 0.0
        %4650 = vmatprep.subr.mxu0 0.0
        %4651 = vmatpush1.msra.mxu0 0.0
        %4652 = vmatprep.subr.mxu0 0.0
        %4653 = vmatpush1.msra.mxu0 0.0
        %4654 = vmatprep.subr.mxu0 0.0
        %4655 = vmatpush1.msra.mxu0 0.0
        %4656 = vmatprep.subr.mxu0 0.0
        %4657 = vmatpush1.msra.mxu0 0.0
        %4658 = vmatprep.subr.mxu0 0.0
        %4659 = vmatpush1.msra.mxu0 0.0
        %4660 = vmatprep.subr.mxu0 0.0
        %4661 = vmatpush1.msra.mxu0 0.0
        %4662 = vmatprep.subr.mxu0 0.0
        %4663 = vmatpush1.msra.mxu0 0.0
        %4664 = vmatprep.subr.mxu0 0.0
        %4665 = vmatpush1.msra.mxu0 0.0
        %4666 = vmatprep.subr.mxu0 0.0
        %4667 = vmatpush1.msra.mxu0 0.0
        %4668 = vmatprep.subr.mxu0 0.0
        %4669 = vmatpush1.msra.mxu0 0.0
        %4670 = vmatprep.subr.mxu0 0.0
        %4671 = vmatpush1.msra.mxu0 0.0
        %4672 = vmatprep.subr.mxu0 0.0
        %4673 = vmatpush1.msra.mxu0 0.0
        %4674 = vmatprep.subr.mxu0 0.0
        %4675 = vmatpush1.msra.mxu0 0.0
        %4676 = vmatprep.mubr.f32.mxu0 0.0
        %4677 = vmatmul.mubr.f32.gmra.mrb[0].mxu0 %v4610
        %v4678 = vpop.f32.mrb[0].mxu0
        %v4679 = vadd.f32 0.0, %v4678
        %v4680 = vpop.f32.mrb[0].mxu0
        %4681 = vdwg.mxu0
        %v4682 = vsel %vm722, %v4460, 0.0
        %v4683 = vsel %vm722, %v4533, 0.0
        %v4684 = vadd.f32 %v4682, %v4683
        %v4685 = vsel %vm722, %v4606, 0.0
        %v4686 = vadd.f32 %v4684, %v4685
        %v4687 = vsel %vm722, %v4679, 0.0
        %v4688 = vadd.f32 %v4686, %v4687
        %v4689 = vadd.f32 %v2811, %v4688
        %s4690 = scalar_lea.vmem %s9, 1
        %v4691 = vld [vmem:[%s4690] sm:$0x1]
        %v4693 = vlaneseq
        %v4694 = vshrl.u32 %v4693, 7
        %v4695 = vsub.s32 0, %v4694
        %v4696 = vrot.slane %v4691, %v4695
        %v4698 = vadd.f32 %v4689, %v4696
        %s4699 = scalar_lea.vmem %s10, 1
        %v4700 = vld [vmem:[%s4699] sm:$0x1]
        %s4701 = scalar_lea.vmem %s11, 1
        %v4702 = vld [vmem:[%s4701] sm:$0x1]
        %v4703 = vsel %vm722, %v4698, 0.0
        %4704 = vadd.xlane.f32.xlu0 %v4703
        %v4705 = vpop.xlane.xlu0 %4704
        %v4706 = vmul.f32 %v4705, %v726
        %v4707 = vsub.f32 %v4698, %v4706
        %v4708 = vmul.f32 %v4707, %v4707
        %v4709 = vsel %vm722, %v4708, 0.0
        %4710 = vadd.xlane.f32.xlu0 %v4709
        %v4711 = vpop.xlane.xlu0 %4710
        %v4712 = vmul.f32 %v4711, %v726
        %v4713 = vadd.f32 %v4712, 1e-05
        %v4714 = vrsqrt.pop %v4713
        %v4715 = vmul.f32 %v4707, %v4714
        %v4717 = vlaneseq
        %v4718 = vshrl.u32 %v4717, 7
        %v4719 = vsub.s32 0, %v4718
        %v4720 = vrot.slane %v4700, %v4719
        %v4722 = vmul.f32 %v4715, %v4720
        %v4724 = vlaneseq
        %v4725 = vshrl.u32 %v4724, 7
        %v4726 = vsub.s32 0, %v4725
        %v4727 = vrot.slane %v4702, %v4726
        %v4729 = vadd.f32 %v4722, %v4727
        %s4730 = scalar_lea.vmem %s12, 32
        %v4731 = vld [vmem:[%s4730] sm:$0xff]
        %v4732 = vld [vmem:[%s4730 + $0x8] sm:$0xff]
        %v4733 = vld [vmem:[%s4730 + $0x10] sm:$0xff]
        %v4734 = vld [vmem:[%s4730 + $0x18] sm:$0xff]
        %s4735 = scalar_lea.vmem %s13, 1
        %v4736 = vld [vmem:[%s4735] sm:$0x1]
        %v4738 = vlaneseq
        %v4739 = vshrl.u32 %v4738, 7
        %v4740 = vsub.s32 0, %v4739
        %v4741 = vrot.slane %v4736, %v4740
        %v4744 = vsel %vm722, %v4729, 0
        %4746 = vmatprep.subr.mxu0 0.0
        %4747 = vmatpush1.msra.mxu0 %v4731
        %4748 = vmatprep.subr.mxu0 0.0
        %4749 = vmatpush1.msra.mxu0 %v4732
        %4750 = vmatprep.subr.mxu0 0.0
        %4751 = vmatpush1.msra.mxu0 %v4733
        %4752 = vmatprep.subr.mxu0 0.0
        %4753 = vmatpush1.msra.mxu0 %v4734
        %4754 = vmatprep.subr.mxu0 0.0
        %4755 = vmatpush1.msra.mxu0 0.0
        %4756 = vmatprep.subr.mxu0 0.0
        %4757 = vmatpush1.msra.mxu0 0.0
        %4758 = vmatprep.subr.mxu0 0.0
        %4759 = vmatpush1.msra.mxu0 0.0
        %4760 = vmatprep.subr.mxu0 0.0
        %4761 = vmatpush1.msra.mxu0 0.0
        %4762 = vmatprep.subr.mxu0 0.0
        %4763 = vmatpush1.msra.mxu0 0.0
        %4764 = vmatprep.subr.mxu0 0.0
        %4765 = vmatpush1.msra.mxu0 0.0
        %4766 = vmatprep.subr.mxu0 0.0
        %4767 = vmatpush1.msra.mxu0 0.0
        %4768 = vmatprep.subr.mxu0 0.0
        %4769 = vmatpush1.msra.mxu0 0.0
        %4770 = vmatprep.subr.mxu0 0.0
        %4771 = vmatpush1.msra.mxu0 0.0
        %4772 = vmatprep.subr.mxu0 0.0
        %4773 = vmatpush1.msra.mxu0 0.0
        %4774 = vmatprep.subr.mxu0 0.0
        %4775 = vmatpush1.msra.mxu0 0.0
        %4776 = vmatprep.subr.mxu0 0.0
        %4777 = vmatpush1.msra.mxu0 0.0
        %4778 = vmatprep.subr.mxu0 0.0
        %4779 = vmatpush1.msra.mxu0 0.0
        %4780 = vmatprep.subr.mxu0 0.0
        %4781 = vmatpush1.msra.mxu0 0.0
        %4782 = vmatprep.subr.mxu0 0.0
        %4783 = vmatpush1.msra.mxu0 0.0
        %4784 = vmatprep.subr.mxu0 0.0
        %4785 = vmatpush1.msra.mxu0 0.0
        %4786 = vmatprep.subr.mxu0 0.0
        %4787 = vmatpush1.msra.mxu0 0.0
        %4788 = vmatprep.subr.mxu0 0.0
        %4789 = vmatpush1.msra.mxu0 0.0
        %4790 = vmatprep.subr.mxu0 0.0
        %4791 = vmatpush1.msra.mxu0 0.0
        %4792 = vmatprep.subr.mxu0 0.0
        %4793 = vmatpush1.msra.mxu0 0.0
        %4794 = vmatprep.subr.mxu0 0.0
        %4795 = vmatpush1.msra.mxu0 0.0
        %4796 = vmatprep.subr.mxu0 0.0
        %4797 = vmatpush1.msra.mxu0 0.0
        %4798 = vmatprep.subr.mxu0 0.0
        %4799 = vmatpush1.msra.mxu0 0.0
        %4800 = vmatprep.subr.mxu0 0.0
        %4801 = vmatpush1.msra.mxu0 0.0
        %4802 = vmatprep.subr.mxu0 0.0
        %4803 = vmatpush1.msra.mxu0 0.0
        %4804 = vmatprep.subr.mxu0 0.0
        %4805 = vmatpush1.msra.mxu0 0.0
        %4806 = vmatprep.subr.mxu0 0.0
        %4807 = vmatpush1.msra.mxu0 0.0
        %4808 = vmatprep.subr.mxu0 0.0
        %4809 = vmatpush1.msra.mxu0 0.0
        %4810 = vmatprep.mubr.f32.mxu0 0.0
        %4811 = vmatmul.mubr.f32.gmra.mrb[0].mxu0 %v4744
        %v4812 = vpop.f32.mrb[0].mxu0
        %v4813 = vadd.f32 %v4741, %v4812
        %v4814 = vpop.f32.mrb[0].mxu0
        %4815 = vdwg.mxu0
        %v4816 = vmax.f32 %v4813, 0.0
        %s4817 = scalar_lea.vmem %s14, 128
        %v4818 = vld [vmem:[%s4817] sm:$0xff]
        %v4819 = vld [vmem:[%s4817 + $0x8] sm:$0xff]
        %v4820 = vld [vmem:[%s4817 + $0x10] sm:$0xff]
        %v4821 = vld [vmem:[%s4817 + $0x18] sm:$0xff]
        %v4822 = vld [vmem:[%s4817 + $0x20] sm:$0xff]
        %v4823 = vld [vmem:[%s4817 + $0x28] sm:$0xff]
        %v4824 = vld [vmem:[%s4817 + $0x30] sm:$0xff]
        %v4825 = vld [vmem:[%s4817 + $0x38] sm:$0xff]
        %v4826 = vld [vmem:[%s4817 + $0x40] sm:$0xff]
        %v4827 = vld [vmem:[%s4817 + $0x48] sm:$0xff]
        %v4828 = vld [vmem:[%s4817 + $0x50] sm:$0xff]
        %v4829 = vld [vmem:[%s4817 + $0x58] sm:$0xff]
        %v4830 = vld [vmem:[%s4817 + $0x60] sm:$0xff]
        %v4831 = vld [vmem:[%s4817 + $0x68] sm:$0xff]
        %v4832 = vld [vmem:[%s4817 + $0x70] sm:$0xff]
        %v4833 = vld [vmem:[%s4817 + $0x78] sm:$0xff]
        %4834 = vmatprep.subr.mxu0 0.0
        %4835 = vmatpush1.msra.mxu0 %v4818
        %4836 = vmatprep.subr.mxu0 0.0
        %4837 = vmatpush1.msra.mxu0 %v4819
        %4838 = vmatprep.subr.mxu0 0.0
        %4839 = vmatpush1.msra.mxu0 %v4820
        %4840 = vmatprep.subr.mxu0 0.0
        %4841 = vmatpush1.msra.mxu0 %v4821
        %4842 = vmatprep.subr.mxu0 0.0
        %4843 = vmatpush1.msra.mxu0 %v4822
        %4844 = vmatprep.subr.mxu0 0.0
        %4845 = vmatpush1.msra.mxu0 %v4823
        %4846 = vmatprep.subr.mxu0 0.0
        %4847 = vmatpush1.msra.mxu0 %v4824
        %4848 = vmatprep.subr.mxu0 0.0
        %4849 = vmatpush1.msra.mxu0 %v4825
        %4850 = vmatprep.subr.mxu0 0.0
        %4851 = vmatpush1.msra.mxu0 %v4826
        %4852 = vmatprep.subr.mxu0 0.0
        %4853 = vmatpush1.msra.mxu0 %v4827
        %4854 = vmatprep.subr.mxu0 0.0
        %4855 = vmatpush1.msra.mxu0 %v4828
        %4856 = vmatprep.subr.mxu0 0.0
        %4857 = vmatpush1.msra.mxu0 %v4829
        %4858 = vmatprep.subr.mxu0 0.0
        %4859 = vmatpush1.msra.mxu0 %v4830
        %4860 = vmatprep.subr.mxu0 0.0
        %4861 = vmatpush1.msra.mxu0 %v4831
        %4862 = vmatprep.subr.mxu0 0.0
        %4863 = vmatpush1.msra.mxu0 %v4832
        %4864 = vmatprep.subr.mxu0 0.0
        %4865 = vmatpush1.msra.mxu0 %v4833
        %4866 = vmatprep.subr.mxu0 0.0
        %4867 = vmatpush1.msra.mxu0 0.0
        %4868 = vmatprep.subr.mxu0 0.0
        %4869 = vmatpush1.msra.mxu0 0.0
        %4870 = vmatprep.subr.mxu0 0.0
        %4871 = vmatpush1.msra.mxu0 0.0
        %4872 = vmatprep.subr.mxu0 0.0
        %4873 = vmatpush1.msra.mxu0 0.0
        %4874 = vmatprep.subr.mxu0 0.0
        %4875 = vmatpush1.msra.mxu0 0.0
        %4876 = vmatprep.subr.mxu0 0.0
        %4877 = vmatpush1.msra.mxu0 0.0
        %4878 = vmatprep.subr.mxu0 0.0
        %4879 = vmatpush1.msra.mxu0 0.0
        %4880 = vmatprep.subr.mxu0 0.0
        %4881 = vmatpush1.msra.mxu0 0.0
        %4882 = vmatprep.subr.mxu0 0.0
        %4883 = vmatpush1.msra.mxu0 0.0
        %4884 = vmatprep.subr.mxu0 0.0
        %4885 = vmatpush1.msra.mxu0 0.0
        %4886 = vmatprep.subr.mxu0 0.0
        %4887 = vmatpush1.msra.mxu0 0.0
        %4888 = vmatprep.subr.mxu0 0.0
        %4889 = vmatpush1.msra.mxu0 0.0
        %4890 = vmatprep.subr.mxu0 0.0
        %4891 = vmatpush1.msra.mxu0 0.0
        %4892 = vmatprep.subr.mxu0 0.0
        %4893 = vmatpush1.msra.mxu0 0.0
        %4894 = vmatprep.subr.mxu0 0.0
        %4895 = vmatpush1.msra.mxu0 0.0
        %4896 = vmatprep.subr.mxu0 0.0
        %4897 = vmatpush1.msra.mxu0 0.0
        %4898 = vmatprep.mubr.f32.mxu0 0.0
        %4899 = vmatmul.mubr.f32.gmra.mrb[0].mxu0 %v4816
        %v4900 = vpop.f32.mrb[0].mxu0
        %v4901 = vadd.f32 0.0, %v4900
        %v4902 = vpop.f32.mrb[0].mxu0
        %4903 = vdwg.mxu0
        %v4904 = vadd.f32 %v4698, %v4901
        %s4905 = scalar_lea.vmem %s15, 1
        %v4906 = vld [vmem:[%s4905] sm:$0x1]
        %v4908 = vlaneseq
        %v4909 = vshrl.u32 %v4908, 7
        %v4910 = vsub.s32 0, %v4909
        %v4911 = vrot.slane %v4906, %v4910
        %v4913 = vadd.f32 %v4904, %v4911
        %v4914 = vld [vmem:[%s16] sm:$0x1]
        %v4915 = vld [vmem:[%s17] sm:$0x1]
        %v4916 = vsel %vm722, %v4913, 0.0
        %4917 = vadd.xlane.f32.xlu0 %v4916
        %v4918 = vpop.xlane.xlu0 %4917
        %v4919 = vmul.f32 %v4918, %v726
        %v4920 = vsub.f32 %v4913, %v4919
        %v4921 = vmul.f32 %v4920, %v4920
        %v4922 = vsel %vm722, %v4921, 0.0
        %4923 = vadd.xlane.f32.xlu0 %v4922
        %v4924 = vpop.xlane.xlu0 %4923
        %v4925 = vmul.f32 %v4924, %v726
        %v4926 = vadd.f32 %v4925, 1e-05
        %v4927 = vrsqrt.pop %v4926
        %v4928 = vmul.f32 %v4920, %v4927
        %v4930 = vlaneseq
        %v4931 = vshrl.u32 %v4930, 7
        %v4932 = vsub.s32 0, %v4931
        %v4933 = vrot.slane %v4914, %v4932
        %v4935 = vmul.f32 %v4928, %v4933
        %v4937 = vlaneseq
        %v4938 = vshrl.u32 %v4937, 7
        %v4939 = vsub.s32 0, %v4938
        %v4940 = vrot.slane %v4915, %v4939
        %v4942 = vadd.f32 %v4935, %v4940
        %v4943 = vld [vmem:[%s18] sm:$0xff]
        %v4944 = vld [vmem:[%s18 + $0x8] sm:$0xff]
        %v4945 = vld [vmem:[%s18 + $0x10] sm:$0xff]
        %v4946 = vld [vmem:[%s18 + $0x18] sm:$0xff]
        %v4947 = vld [vmem:[%s19] sm:$0x1]
        %v4949 = vlaneseq
        %v4950 = vshrl.u32 %v4949, 7
        %v4951 = vsub.s32 0, %v4950
        %v4952 = vrot.slane %v4947, %v4951
        %v4955 = vsel %vm722, %v4942, 0
        %4957 = vmatprep.subr.mxu0 0.0
        %4958 = vmatpush1.msra.mxu0 %v4943
        %4959 = vmatprep.subr.mxu0 0.0
        %4960 = vmatpush1.msra.mxu0 %v4944
        %4961 = vmatprep.subr.mxu0 0.0
        %4962 = vmatpush1.msra.mxu0 %v4945
        %4963 = vmatprep.subr.mxu0 0.0
        %4964 = vmatpush1.msra.mxu0 %v4946
        %4965 = vmatprep.subr.mxu0 0.0
        %4966 = vmatpush1.msra.mxu0 0.0
        %4967 = vmatprep.subr.mxu0 0.0
        %4968 = vmatpush1.msra.mxu0 0.0
        %4969 = vmatprep.subr.mxu0 0.0
        %4970 = vmatpush1.msra.mxu0 0.0
        %4971 = vmatprep.subr.mxu0 0.0
        %4972 = vmatpush1.msra.mxu0 0.0
        %4973 = vmatprep.subr.mxu0 0.0
        %4974 = vmatpush1.msra.mxu0 0.0
        %4975 = vmatprep.subr.mxu0 0.0
        %4976 = vmatpush1.msra.mxu0 0.0
        %4977 = vmatprep.subr.mxu0 0.0
        %4978 = vmatpush1.msra.mxu0 0.0
        %4979 = vmatprep.subr.mxu0 0.0
        %4980 = vmatpush1.msra.mxu0 0.0
        %4981 = vmatprep.subr.mxu0 0.0
        %4982 = vmatpush1.msra.mxu0 0.0
        %4983 = vmatprep.subr.mxu0 0.0
        %4984 = vmatpush1.msra.mxu0 0.0
        %4985 = vmatprep.subr.mxu0 0.0
        %4986 = vmatpush1.msra.mxu0 0.0
        %4987 = vmatprep.subr.mxu0 0.0
        %4988 = vmatpush1.msra.mxu0 0.0
        %4989 = vmatprep.subr.mxu0 0.0
        %4990 = vmatpush1.msra.mxu0 0.0
        %4991 = vmatprep.subr.mxu0 0.0
        %4992 = vmatpush1.msra.mxu0 0.0
        %4993 = vmatprep.subr.mxu0 0.0
        %4994 = vmatpush1.msra.mxu0 0.0
        %4995 = vmatprep.subr.mxu0 0.0
        %4996 = vmatpush1.msra.mxu0 0.0
        %4997 = vmatprep.subr.mxu0 0.0
        %4998 = vmatpush1.msra.mxu0 0.0
        %4999 = vmatprep.subr.mxu0 0.0
        %5000 = vmatpush1.msra.mxu0 0.0
        %5001 = vmatprep.subr.mxu0 0.0
        %5002 = vmatpush1.msra.mxu0 0.0
        %5003 = vmatprep.subr.mxu0 0.0
        %5004 = vmatpush1.msra.mxu0 0.0
        %5005 = vmatprep.subr.mxu0 0.0
        %5006 = vmatpush1.msra.mxu0 0.0
        %5007 = vmatprep.subr.mxu0 0.0
        %5008 = vmatpush1.msra.mxu0 0.0
        %5009 = vmatprep.subr.mxu0 0.0
        %5010 = vmatpush1.msra.mxu0 0.0
        %5011 = vmatprep.subr.mxu0 0.0
        %5012 = vmatpush1.msra.mxu0 0.0
        %5013 = vmatprep.subr.mxu0 0.0
        %5014 = vmatpush1.msra.mxu0 0.0
        %5015 = vmatprep.subr.mxu0 0.0
        %5016 = vmatpush1.msra.mxu0 0.0
        %5017 = vmatprep.subr.mxu0 0.0
        %5018 = vmatpush1.msra.mxu0 0.0
        %5019 = vmatprep.subr.mxu0 0.0
        %5020 = vmatpush1.msra.mxu0 0.0
        %5021 = vmatprep.mubr.f32.mxu0 0.0
        %5022 = vmatmul.mubr.f32.gmra.mrb[0].mxu0 %v4955
        %v5023 = vpop.f32.mrb[0].mxu0
        %v5024 = vadd.f32 %v4952, %v5023
        %v5025 = vpop.f32.mrb[0].mxu0
        %5026 = vdwg.mxu0
        %5027 = vst.msk [vmem:[%s620] sm:$0xff] %vm643, %v5024
        %s5028 = sand.u32 %s467, 1
        %s5029 = scalar_lea.sflag [#allocation3], %s5028
        %s5030 = sand.u32 %s467, 1
        %s5031 = smul.addr %s5030, 8
        %s5032 = scalar_lea.vmem [#allocation2], %s5031
        // Predicated region
        $region101: #{nanoshakes_forward.1} parent=99 // pred_check
          %p5033 = pneg %p477
        $region102: #{nanoshakes_forward.1} parent=99 // pred_check_branch
          %5035 = sbr.rel (%p5033) target = $region104
        $region103: #{nanoshakes_forward.1} parent=99 // pred_region
          %s5037 = ssub.s32 128, 128
          %5038 = vsyncadd %s5029, %s5037
          %s5039 = smul.addr %s34, 128
          %s5040 = scalar_lea.hbm %s20, %s5039
          %s5042 = sshll.u32 %s5032, 4
          %s5043 = int_to_ptr.vmem [resolvable:$true] %s5042
          %5045 = dma.vmem_to_hbm [thread:$0]  %s5043, 128, %s5040, %s5029
        $region104: #{nanoshakes_forward.1} parent=99 // pred_fallthru
          _
      $region100: #{nanoshakes_forward.1} parent=5 // pred_fallthru
        _
      %p5046 = scmp.le.s32.totalorder 2, %s29
      // Predicated region
      $region105: #{nanoshakes_forward.1} parent=5 // pred_check
        %p5047 = pneg %p5046
      $region106: #{nanoshakes_forward.1} parent=5 // pred_check_branch
        %5049 = sbr.rel (%p5047) target = $region108
      $region107: #{nanoshakes_forward.1} parent=5 // pred_region
        %s5050 = ssub.s32 %s29, 2
        // Predicated region
        $region109: #{nanoshakes_forward.1} parent=107 // pred_check
          %p5051 = pneg %p483
        $region110: #{nanoshakes_forward.1} parent=107 // pred_check_branch
          %5053 = sbr.rel (%p5051) target = $region112
        $region111: #{nanoshakes_forward.1} parent=107 // pred_region
          %s5054 = sand.u32 %s468, 1
          %s5055 = scalar_lea.sflag [#allocation3], %s5054
          %s5056 = sand.u32 %s468, 1
          %s5057 = smul.addr %s5056, 8
          %s5058 = scalar_lea.vmem [#allocation2], %s5057
          %5059 = dma.done %s5055, 128
        $region112: #{nanoshakes_forward.1} parent=107 // pred_fallthru
          _
      $region108: #{nanoshakes_forward.1} parent=5 // pred_fallthru
        _
    $region6: #{nanoshakes_forward.1} parent=1 // loop_footer
      %s33 = sadd.s32 1, %s29
    $region7: #{nanoshakes_forward.1} parent=1 // loop_footer_branch
      %28 = sbr.rel target = $region3
    $region8: #{nanoshakes_forward.1} parent=1 // loop_exit
      _
    %5060 = vsyncpa [#allocation3], 1
    %s5061 = scalar_lea.sflag [#allocation3], 1
    %5062 = vsyncpa %s5061, 1

</llo_original>
